<compile_context>
chip_gen: v5e
topology: v5e:2x2
jax: 0.10.0
libtpu: 0.0.40
codegen_flags: <defaults>
</compile_context>

<pallas_src>
import functools

import jax
import jax.numpy as jnp
from jax.experimental import pallas as pl
from jax.experimental.pallas import tpu as pltpu

EPS_IN = 1e-3   # InstanceNorm2d eps from the module
EPS_BN = 1e-5   # BatchNorm2d default eps


def _round_up(v, m):
    return (v + m - 1) // m * m


def oafilter_kernel(x_ref,
                    s1_ref, t1_ref, w1_ref, b1_ref,
                    s2_ref, t2_ref, w2t_ref, b2_ref,
                    s3_ref, t3_ref, w3_ref, b3_ref,
                    o_ref, *, n_valid):
    f32, bf16 = jnp.float32, jnp.bfloat16
    x = x_ref[...].astype(f32)                       # (BS, Cp, Np) bf16 -> f32
    bs, cp, npad = x.shape
    inv_n = 1.0 / float(n_valid)

    # ---- conv1: InstanceNorm -> BN -> ReLU -> 1x1 conv (channel mix) -------
    # One-pass stats in f32 (E[x], E[x^2]); padded lanes of x are zero, so the
    # plain sums divided by n_valid are already the masked statistics.
    # (One-pass variance can drift for |mean| >> std inputs; acceptable here.)
    mu = jnp.sum(x, axis=-1, keepdims=True) * inv_n                 # (BS,Cp,1)
    ex2 = jnp.sum(x * x, axis=-1, keepdims=True) * inv_n
    var = jnp.maximum(ex2 - mu * mu, 0.0)
    scale1 = jax.lax.rsqrt(var + EPS_IN) * s1_ref[...]   # BN affine folded in
    shift1 = t1_ref[...] - mu * scale1
    a1 = jnp.maximum(x * scale1 + shift1, 0.0).astype(bf16)

    # Channel-mixing matmul: single (Cp, Cp) bf16 weight broadcast in-VMEM
    # (no BS-tiled copies in HBM), f32 accumulation on the MXU.
    w1 = jnp.broadcast_to(w1_ref[...], (bs, cp, cp))
    y = jnp.einsum("boc,bcn->bon", w1, a1,
                   preferred_element_type=f32) + b1_ref[...]        # f32

    # Mask padded lanes of y once: a2 / z2 / out2 padded lanes then stay
    # exactly zero, so conv3's statistics need no extra masked copy.
    if n_valid != npad:
        lane = jax.lax.broadcasted_iota(jnp.int32, (1, 1, npad), 2)
        y = jnp.where(lane < n_valid, y, 0.0)

    # ---- conv2: point mix, expressed as a right-multiply by W2^T -----------
    # Flatten the batch stack onto the sublane axis -> M = BS*Cp rows for the
    # dominant (Np x Np) matmul.  Padded lanes have s2 = t2 = 0 -> a2 = 0
    # there, and W2^T's padded rows/cols are zero, so padding is inert.
    y2 = y.reshape(bs * cp, npad)
    a2 = jnp.maximum(y2 * s2_ref[...] + t2_ref[...], 0.0).astype(bf16)
    z2 = jnp.dot(a2, w2t_ref[...], preferred_element_type=f32)
    out2 = (y2 + z2 + b2_ref[...]).reshape(bs, cp, npad)

    # ---- conv3: InstanceNorm -> BN -> ReLU -> 1x1 conv (channel mix) -------
    mu3 = jnp.sum(out2, axis=-1, keepdims=True) * inv_n
    ex23 = jnp.sum(out2 * out2, axis=-1, keepdims=True) * inv_n
    var3 = jnp.maximum(ex23 - mu3 * mu3, 0.0)
    scale3 = jax.lax.rsqrt(var3 + EPS_IN) * s3_ref[...]
    shift3 = t3_ref[...] - mu3 * scale3
    a3 = jnp.maximum(out2 * scale3 + shift3, 0.0).astype(bf16)
    w3 = jnp.broadcast_to(w3_ref[...], (bs, cp, cp))
    y3 = jnp.einsum("boc,bcn->bon", w3, a3,
                    preferred_element_type=f32) + b3_ref[...]

    # Residual (out_channels == channels -> no shot_cut conv).  Re-read x_ref
    # so the f32 upcast of x does not stay live across the whole kernel.
    o_ref[...] = (y3 + x_ref[...].astype(f32)).astype(o_ref.dtype)


def fold_bn(gamma, beta, rmean, rvar):
    scale = gamma * jax.lax.rsqrt(rvar + EPS_BN)
    shift = beta - rmean * scale
    return scale, shift


def init_params(key, channels, points):
    """Deterministic synthetic parameters (eval-mode BN stats folded)."""
    ks = jax.random.split(key, 9)
    C, N = channels, points
    f32 = jnp.float32

    def bn_params(k, n):
        k0, k1, k2, k3 = jax.random.split(k, 4)
        gamma = 1.0 + 0.1 * jax.random.normal(k0, (n,), f32)
        beta = 0.1 * jax.random.normal(k1, (n,), f32)
        rmean = 0.1 * jax.random.normal(k2, (n,), f32)
        rvar = 0.5 + jnp.abs(jax.random.normal(k3, (n,), f32))
        return fold_bn(gamma, beta, rmean, rvar)

    s1, t1 = bn_params(ks[0], C)          # BN inside conv1 (over channels)
    s2, t2 = bn_params(ks[1], N)          # BN inside conv2 (over points)
    s3, t3 = bn_params(ks[2], C)          # BN inside conv3 (over out_channels)

    w1 = 0.2 * jax.random.normal(ks[3], (C, C), f32)
    b1 = 0.1 * jax.random.normal(ks[4], (C,), f32)
    w2 = 0.2 * jax.random.normal(ks[5], (N, N), f32)
    b2 = 0.1 * jax.random.normal(ks[6], (N,), f32)
    w3 = 0.2 * jax.random.normal(ks[7], (C, C), f32)
    b3 = 0.1 * jax.random.normal(ks[8], (C,), f32)

    return dict(s1=s1, t1=t1, w1=w1, b1=b1,
                s2=s2, t2=t2, w2t=w2.T, b2=b2,
                s3=s3, t3=t3, w3=w3, b3=b3)


def prepare_kernel_params(p, C, N, Cp, Np):
    """Zero-pad to (Cp, Np), reshape for broadcasting, cast weights to bf16.

    Zero padding of the per-channel / per-point affines and of the conv
    weights makes padded rows/lanes inert (see kernel comments).  W1/W3 are
    kept as a single (Cp, Cp) copy (broadcast in-kernel)."""
    f32, bf16 = jnp.float32, jnp.bfloat16

    def pad_c(v):                          # (C,) -> (1, Cp, 1) f32
        return jnp.pad(v, (0, Cp - C)).reshape(1, Cp, 1).astype(f32)

    def pad_n(v):                          # (N,) -> (1, Np) f32
        return jnp.pad(v, (0, Np - N)).reshape(1, Np).astype(f32)

    def pad_cc(w):                         # (C,C) -> (Cp, Cp) bf16
        return jnp.pad(w, ((0, Cp - C), (0, Cp - C))).astype(bf16)

    w2t = jnp.pad(p["w2t"], ((0, Np - N), (0, Np - N))).astype(bf16)

    return [pad_c(p["s1"]), pad_c(p["t1"]), pad_cc(p["w1"]), pad_c(p["b1"]),
            pad_n(p["s2"]), pad_n(p["t2"]), w2t, pad_n(p["b2"]),
            pad_c(p["s3"]), pad_c(p["t3"]), pad_cc(p["w3"]), pad_c(p["b3"])]


def _vmem_ceiling():
    """0.85 x physical VMEM; conservative 64 MiB (v7x per-TC) if unknown."""
    cap = None
    try:
        cap = getattr(pltpu.get_tpu_info(), "vmem_capacity_bytes", None)
    except Exception:
        cap = None
    if not cap:
        cap = 64 * (1 << 20)
    return int(0.85 * cap)


def _is_multicore_chip():
    """True for 2-TensorCore chips (v7x); best-effort string match."""
    try:
        kind = jax.devices()[0].device_kind.lower()
    except Exception:
        return False
    return ("v7" in kind) or ("7x" in kind)


def _pick_bs(B, Cp, working_bytes, budget, multicore):
    """Largest batch slab that divides B, keeps >=2 grid steps (even / >=4 on
    2-TC chips), fits VMEM, and stops growing once BS*Cp >= 256 MXU rows."""
    divs = [d for d in range(1, B + 1) if B % d == 0]

    def ok(bs, strict):
        steps = B // bs
        if working_bytes(bs) > budget:
            return False
        if B > 1 and steps < 2:
            return False
        if strict and multicore:
            if steps % 2 or steps < min(4, B):
                return False
        return True

    for strict in (True, False):
        cands = [d for d in divs if ok(d, strict)]
        if cands:
            for bs in cands:                 # ascending
                if bs * Cp >= 256:
                    return bs                # smallest slab that fills the MXU
            return cands[-1]                 # else largest that fits
    return 1


def oafilter_forward(x, p):
    """x: (B, channels, points, 1) NCHW float32 -> (B, channels, points, 1)."""
    B, C, N, W = x.shape
    assert W == 1

    Cp = _round_up(C, 16)            # bf16 packs 16 sublanes per vreg
    Np = _round_up(N, 128)           # lane-dense points

    params = prepare_kernel_params(p, C, N, Cp, Np)
    param_bytes = sum(a.size * a.dtype.itemsize for a in params)

    ceiling = _vmem_ceiling()
    multicore = _is_multicore_chip()

    def working_bytes(bs):
        blk = bs * Cp * Np
        io = 2 * blk * 2 + 2 * blk * 4        # dbl-buffered bf16 in + f32 out
        live = 8 * blk * 4                    # live f32/bf16 intermediates
        return io + live + 2 * param_bytes    # 2x params covers fallback path

    BS = _pick_bs(B, Cp, working_bytes, ceiling, multicore)
    steps = B // BS

    # bf16 input slab: halves input HBM traffic; stats are computed in f32
    # inside the kernel.
    x3 = jnp.pad(x[..., 0], ((0, 0), (0, Cp - C), (0, Np - N))).astype(jnp.bfloat16)

    vmem_limit = int(min(ceiling, max(32 * (1 << 20), working_bytes(BS))))

    flops = int(B * (4 * Cp * Cp * Np + 2 * Cp * Np * Np + 30 * Cp * Np))
    cost = pl.CostEstimate(
        flops=flops,
        transcendentals=int(2 * B * Cp),                  # rsqrt per (b, c)
        bytes_accessed=int(B * Cp * Np * (2 + 4) + param_bytes),
    )

    kernel = functools.partial(oafilter_kernel, n_valid=N)

    def run(const_mode, semantics, with_cost):
        def const_spec(a):
            nd = a.ndim
            idx = lambda b, _nd=nd: (0,) * _nd            # resident block
            if const_mode is None:
                return pl.BlockSpec(a.shape, idx)
            return pl.BlockSpec(a.shape, idx, pipeline_mode=const_mode)

        in_specs = ([pl.BlockSpec((BS, Cp, Np), lambda b: (b, 0, 0))]
                    + [const_spec(a) for a in params])
        out_specs = pl.BlockSpec((BS, Cp, Np), lambda b: (b, 0, 0))

        call_kwargs = dict(
            out_shape=jax.ShapeDtypeStruct((B, Cp, Np), jnp.float32),
            grid_spec=pltpu.PrefetchScalarGridSpec(
                num_scalar_prefetch=0,
                grid=(steps,),
                in_specs=in_specs,
                out_specs=out_specs),
            compiler_params=pltpu.CompilerParams(
                dimension_semantics=semantics,
                vmem_limit_bytes=vmem_limit),
        )
        if with_cost:
            call_kwargs["cost_estimate"] = cost
        return pl.pallas_call(kernel, **call_kwargs)(x3, *params)

    try:
        # Optimized configuration: constants single-buffered; batch axis
        # core-parallel on 2-TC chips (even number of steps required).
        sem = ((pltpu.CORE_PARALLEL,) if (multicore and steps % 2 == 0)
               else ("parallel",))
        out = jax.block_until_ready(run(pl.Buffered(1), sem, True))
    except Exception:
        # Conservative fallback (previously validated configuration).
        out = jax.block_until_ready(run(None, ("parallel",), False))

    return out[:, :C, :N, None]                      # (B, C, N, 1)


def ref_forward(x, p):
    """Plain-JAX mirror of the kernel math (bf16-rounded input, bf16 matmul
    operands with f32 accumulation, folded affines, one-pass f32 stats)."""
    f32, bf16 = jnp.float32, jnp.bfloat16
    xb = x[..., 0].astype(bf16).astype(f32)                      # (B, C, N)
    s1 = p["s1"].reshape(1, -1, 1); t1 = p["t1"].reshape(1, -1, 1)
    b1 = p["b1"].reshape(1, -1, 1)
    s2 = p["s2"].reshape(1, 1, -1); t2 = p["t2"].reshape(1, 1, -1)
    b2 = p["b2"].reshape(1, 1, -1)
    s3 = p["s3"].reshape(1, -1, 1); t3 = p["t3"].reshape(1, -1, 1)
    b3 = p["b3"].reshape(1, -1, 1)
    w1 = p["w1"].astype(bf16); w2t = p["w2t"].astype(bf16); w3 = p["w3"].astype(bf16)

    def in_affine_relu(v, s, t):
        mu = jnp.mean(v, -1, keepdims=True)
        var = jnp.maximum(jnp.mean(v * v, -1, keepdims=True) - mu * mu, 0.0)
        scale = jax.lax.rsqrt(var + EPS_IN) * s
        return jnp.maximum(v * scale + (t - mu * scale), 0.0)

    a1 = in_affine_relu(xb, s1, t1).astype(bf16)
    y = jnp.einsum("oc,bcn->bon", w1, a1, preferred_element_type=f32) + b1
    a2 = jnp.maximum(y * s2 + t2, 0.0).astype(bf16)
    z = jnp.einsum("bcn,nm->bcm", a2, w2t, preferred_element_type=f32)
    out2 = y + z + b2
    a3 = in_affine_relu(out2, s3, t3).astype(bf16)
    y3 = jnp.einsum("oc,bcn->bon", w3, a3, preferred_element_type=f32) + b3
    return (y3 + xb)[..., None]


if __name__ == "__main__":
    # Small shapes; points not a multiple of 128 and channels not a multiple
    # of 16 to exercise the lane/sublane padding + masking paths.
    B, channels, points = 8, 24, 96
    key = jax.random.PRNGKey(0)
    k_x, k_p = jax.random.split(key)

    x = jax.random.normal(k_x, (B, channels, points, 1), dtype=jnp.float32)
    params = init_params(k_p, channels, points)

    out = jax.block_until_ready(oafilter_forward(x, params))
    ref = jax.block_until_ready(ref_forward(x, params))

    assert out.shape == (B, channels, points, 1)
    # Tolerance covers bf16 rounding-boundary flips between the kernel and the
    # XLA reference; both evaluate the same bf16/f32 math.
    assert jnp.allclose(out, ref, rtol=5e-3, atol=5e-3), (
        f"mismatch vs reference: max abs diff {jnp.max(jnp.abs(out - ref))}")
    print("KERNEL_OK")
</pallas_src>

<mosaic_0001>
module attributes {stable_mosaic.version = 11 : i64} {
  func.func @oafilter_kernel(%arg0: i32, %arg1: memref<4x32x128xbf16, #tpu.memory_space<vmem>>, %arg2: memref<1x32x1xf32, #tpu.memory_space<vmem>>, %arg3: memref<1x32x1xf32, #tpu.memory_space<vmem>>, %arg4: memref<32x32xbf16, #tpu.memory_space<vmem>>, %arg5: memref<1x32x1xf32, #tpu.memory_space<vmem>>, %arg6: memref<1x128xf32, #tpu.memory_space<vmem>>, %arg7: memref<1x128xf32, #tpu.memory_space<vmem>>, %arg8: memref<128x128xbf16, #tpu.memory_space<vmem>>, %arg9: memref<1x128xf32, #tpu.memory_space<vmem>>, %arg10: memref<1x32x1xf32, #tpu.memory_space<vmem>>, %arg11: memref<1x32x1xf32, #tpu.memory_space<vmem>>, %arg12: memref<32x32xbf16, #tpu.memory_space<vmem>>, %arg13: memref<1x32x1xf32, #tpu.memory_space<vmem>>, %arg14: memref<4x32x128xf32, #tpu.memory_space<vmem>>) attributes {dimension_semantics = [#tpu.dimension_semantics<parallel>], iteration_bounds = array<i64: 2>, scalar_prefetch = 0 : i64, scratch_operands = 0 : i64, tpu.core_type = #tpu.core_type<tc>, window_params = [{transform_indices = @transform_0, window_bounds = array<i64: 4, 32, 128>}, {pipeline_mode = #tpu.pipeline_mode<synchronous>, transform_indices = @transform_1, window_bounds = array<i64: 1, 32, 1>}, {pipeline_mode = #tpu.pipeline_mode<synchronous>, transform_indices = @transform_2, window_bounds = array<i64: 1, 32, 1>}, {pipeline_mode = #tpu.pipeline_mode<synchronous>, transform_indices = @transform_3, window_bounds = array<i64: 32, 32>}, {pipeline_mode = #tpu.pipeline_mode<synchronous>, transform_indices = @transform_4, window_bounds = array<i64: 1, 32, 1>}, {pipeline_mode = #tpu.pipeline_mode<synchronous>, transform_indices = @transform_5, window_bounds = array<i64: 1, 128>}, {pipeline_mode = #tpu.pipeline_mode<synchronous>, transform_indices = @transform_6, window_bounds = array<i64: 1, 128>}, {pipeline_mode = #tpu.pipeline_mode<synchronous>, transform_indices = @transform_7, window_bounds = array<i64: 128, 128>}, {pipeline_mode = #tpu.pipeline_mode<synchronous>, transform_indices = @transform_8, window_bounds = array<i64: 1, 128>}, {pipeline_mode = #tpu.pipeline_mode<synchronous>, transform_indices = @transform_9, window_bounds = array<i64: 1, 32, 1>}, {pipeline_mode = #tpu.pipeline_mode<synchronous>, transform_indices = @transform_10, window_bounds = array<i64: 1, 32, 1>}, {pipeline_mode = #tpu.pipeline_mode<synchronous>, transform_indices = @transform_11, window_bounds = array<i64: 32, 32>}, {pipeline_mode = #tpu.pipeline_mode<synchronous>, transform_indices = @transform_12, window_bounds = array<i64: 1, 32, 1>}, {transform_indices = @transform_13, window_bounds = array<i64: 4, 32, 128>}]} {
    %c0 = arith.constant 0 : index
    %c0_0 = arith.constant 0 : index
    %c0_1 = arith.constant 0 : index
    %0 = vector.load %arg1[%c0, %c0_0, %c0_1] : memref<4x32x128xbf16, #tpu.memory_space<vmem>>, vector<4x32x128xbf16>
    %1 = arith.extf %0 : vector<4x32x128xbf16> to vector<4x32x128xf32>
    %cst = arith.constant dense<0.000000e+00> : vector<4x32xf32>
    %2 = vector.multi_reduction <add>, %1, %cst [2] : vector<4x32x128xf32> to vector<4x32xf32>
    %3 = vector.shape_cast %2 : vector<4x32xf32> to vector<4x32x1xf32>
    %cst_2 = arith.constant 0.010416667 : f32
    %4 = vector.broadcast %cst_2 : f32 to vector<4x32x1xf32>
    %5 = arith.mulf %3, %4 : vector<4x32x1xf32>
    %6 = arith.mulf %1, %1 : vector<4x32x128xf32>
    %cst_3 = arith.constant dense<0.000000e+00> : vector<4x32xf32>
    %7 = vector.multi_reduction <add>, %6, %cst_3 [2] : vector<4x32x128xf32> to vector<4x32xf32>
    %8 = vector.shape_cast %7 : vector<4x32xf32> to vector<4x32x1xf32>
    %cst_4 = arith.constant 0.010416667 : f32
    %9 = vector.broadcast %cst_4 : f32 to vector<4x32x1xf32>
    %10 = arith.mulf %8, %9 : vector<4x32x1xf32>
    %11 = arith.mulf %5, %5 : vector<4x32x1xf32>
    %12 = arith.subf %10, %11 : vector<4x32x1xf32>
    %cst_5 = arith.constant 0.000000e+00 : f32
    %13 = vector.broadcast %cst_5 : f32 to vector<4x32x1xf32>
    %14 = arith.maximumf %12, %13 : vector<4x32x1xf32>
    %cst_6 = arith.constant 1.000000e-03 : f32
    %15 = vector.broadcast %cst_6 : f32 to vector<4x32x1xf32>
    %16 = arith.addf %14, %15 : vector<4x32x1xf32>
    %17 = math.rsqrt %16 : vector<4x32x1xf32>
    %c0_7 = arith.constant 0 : index
    %c0_8 = arith.constant 0 : index
    %c0_9 = arith.constant 0 : index
    %18 = vector.load %arg2[%c0_7, %c0_8, %c0_9] : memref<1x32x1xf32, #tpu.memory_space<vmem>>, vector<1x32x1xf32>
    %19 = vector.broadcast %18 : vector<1x32x1xf32> to vector<4x32x1xf32>
    %20 = arith.mulf %17, %19 : vector<4x32x1xf32>
    %c0_10 = arith.constant 0 : index
    %c0_11 = arith.constant 0 : index
    %c0_12 = arith.constant 0 : index
    %21 = vector.load %arg3[%c0_10, %c0_11, %c0_12] : memref<1x32x1xf32, #tpu.memory_space<vmem>>, vector<1x32x1xf32>
    %22 = arith.mulf %5, %20 : vector<4x32x1xf32>
    %23 = vector.broadcast %21 : vector<1x32x1xf32> to vector<4x32x1xf32>
    %24 = arith.subf %23, %22 : vector<4x32x1xf32>
    %25 = vector.broadcast %20 : vector<4x32x1xf32> to vector<4x32x128xf32>
    %26 = arith.mulf %1, %25 : vector<4x32x128xf32>
    %27 = vector.broadcast %24 : vector<4x32x1xf32> to vector<4x32x128xf32>
    %28 = arith.addf %26, %27 : vector<4x32x128xf32>
    %cst_13 = arith.constant 0.000000e+00 : f32
    %29 = vector.broadcast %cst_13 : f32 to vector<4x32x128xf32>
    %30 = arith.maximumf %28, %29 : vector<4x32x128xf32>
    %31 = arith.truncf %30 : vector<4x32x128xf32> to vector<4x32x128xbf16>
    %c0_14 = arith.constant 0 : index
    %c0_15 = arith.constant 0 : index
    %32 = vector.load %arg4[%c0_14, %c0_15] : memref<32x32xbf16, #tpu.memory_space<vmem>>, vector<32x32xbf16>
    %33 = vector.shape_cast %32 : vector<32x32xbf16> to vector<1x32x32xbf16>
    %34 = vector.broadcast %33 : vector<1x32x32xbf16> to vector<4x32x32xbf16>
    "tpu.trace_start"() <{level = 10 : i32, message = "boc,bcn->bon"}> : () -> ()
    %cst_16 = arith.constant dense<0.000000e+00> : vector<4x32x128xf32>
    %35 = tpu.matmul %34, %31, %cst_16 {dimension_numbers = #tpu.dot_dimension_numbers<[2], [1], [1], [2], [0, 0, 0, 1, 1, 2], [0], [0]>} : vector<4x32x32xbf16>, vector<4x32x128xbf16>, vector<4x32x128xf32> -> vector<4x32x128xf32>
    "tpu.trace_stop"() : () -> ()
    %c0_17 = arith.constant 0 : index
    %c0_18 = arith.constant 0 : index
    %c0_19 = arith.constant 0 : index
    %36 = vector.load %arg5[%c0_17, %c0_18, %c0_19] : memref<1x32x1xf32, #tpu.memory_space<vmem>>, vector<1x32x1xf32>
    %37 = vector.broadcast %36 : vector<1x32x1xf32> to vector<4x32x128xf32>
    %38 = arith.addf %35, %37 : vector<4x32x128xf32>
    %39 = tpu.iota {dimensions = array<i32: 2>} : vector<1x1x128xi32>
    %c96_i32 = arith.constant 96 : i32
    %40 = vector.broadcast %c96_i32 : i32 to vector<1x1x128xi32>
    %41 = arith.cmpi slt, %39, %40 : vector<1x1x128xi32>
    %cst_20 = arith.constant 0.000000e+00 : f32
    %42 = vector.shape_cast %41 : vector<1x1x128xi1> to vector<1x1x128xi1>
    %43 = vector.broadcast %42 : vector<1x1x128xi1> to vector<4x32x128xi1>
    %44 = vector.broadcast %cst_20 : f32 to vector<4x32x128xf32>
    %45 = arith.select %43, %38, %44 : vector<4x32x128xi1>, vector<4x32x128xf32>
    %46 = vector.shape_cast %45 : vector<4x32x128xf32> to vector<128x128xf32>
    %c0_21 = arith.constant 0 : index
    %c0_22 = arith.constant 0 : index
    %47 = vector.load %arg6[%c0_21, %c0_22] : memref<1x128xf32, #tpu.memory_space<vmem>>, vector<1x128xf32>
    %48 = vector.broadcast %47 : vector<1x128xf32> to vector<128x128xf32>
    %49 = arith.mulf %46, %48 : vector<128x128xf32>
    %c0_23 = arith.constant 0 : index
    %c0_24 = arith.constant 0 : index
    %50 = vector.load %arg7[%c0_23, %c0_24] : memref<1x128xf32, #tpu.memory_space<vmem>>, vector<1x128xf32>
    %51 = vector.broadcast %50 : vector<1x128xf32> to vector<128x128xf32>
    %52 = arith.addf %49, %51 : vector<128x128xf32>
    %cst_25 = arith.constant 0.000000e+00 : f32
    %53 = vector.broadcast %cst_25 : f32 to vector<128x128xf32>
    %54 = arith.maximumf %52, %53 : vector<128x128xf32>
    %55 = arith.truncf %54 : vector<128x128xf32> to vector<128x128xbf16>
    %c0_26 = arith.constant 0 : index
    %c0_27 = arith.constant 0 : index
    %56 = vector.load %arg8[%c0_26, %c0_27] : memref<128x128xbf16, #tpu.memory_space<vmem>>, vector<128x128xbf16>
    %cst_28 = arith.constant dense<0.000000e+00> : vector<128x128xf32>
    %57 = tpu.matmul %55, %56, %cst_28 {dimension_numbers = #tpu.dot_dimension_numbers<[1], [0], [0], [1], [0, 0, 1, 1], [], []>} : vector<128x128xbf16>, vector<128x128xbf16>, vector<128x128xf32> -> vector<128x128xf32>
    %58 = arith.addf %46, %57 : vector<128x128xf32>
    %c0_29 = arith.constant 0 : index
    %c0_30 = arith.constant 0 : index
    %59 = vector.load %arg9[%c0_29, %c0_30] : memref<1x128xf32, #tpu.memory_space<vmem>>, vector<1x128xf32>
    %60 = vector.broadcast %59 : vector<1x128xf32> to vector<128x128xf32>
    %61 = arith.addf %58, %60 : vector<128x128xf32>
    %62 = vector.shape_cast %61 : vector<128x128xf32> to vector<4x32x128xf32>
    %cst_31 = arith.constant dense<0.000000e+00> : vector<4x32xf32>
    %63 = vector.multi_reduction <add>, %62, %cst_31 [2] : vector<4x32x128xf32> to vector<4x32xf32>
    %64 = vector.shape_cast %63 : vector<4x32xf32> to vector<4x32x1xf32>
    %cst_32 = arith.constant 0.010416667 : f32
    %65 = vector.broadcast %cst_32 : f32 to vector<4x32x1xf32>
    %66 = arith.mulf %64, %65 : vector<4x32x1xf32>
    %67 = arith.mulf %62, %62 : vector<4x32x128xf32>
    %cst_33 = arith.constant dense<0.000000e+00> : vector<4x32xf32>
    %68 = vector.multi_reduction <add>, %67, %cst_33 [2] : vector<4x32x128xf32> to vector<4x32xf32>
    %69 = vector.shape_cast %68 : vector<4x32xf32> to vector<4x32x1xf32>
    %cst_34 = arith.constant 0.010416667 : f32
    %70 = vector.broadcast %cst_34 : f32 to vector<4x32x1xf32>
    %71 = arith.mulf %69, %70 : vector<4x32x1xf32>
    %72 = arith.mulf %66, %66 : vector<4x32x1xf32>
    %73 = arith.subf %71, %72 : vector<4x32x1xf32>
    %cst_35 = arith.constant 0.000000e+00 : f32
    %74 = vector.broadcast %cst_35 : f32 to vector<4x32x1xf32>
    %75 = arith.maximumf %73, %74 : vector<4x32x1xf32>
    %cst_36 = arith.constant 1.000000e-03 : f32
    %76 = vector.broadcast %cst_36 : f32 to vector<4x32x1xf32>
    %77 = arith.addf %75, %76 : vector<4x32x1xf32>
    %78 = math.rsqrt %77 : vector<4x32x1xf32>
    %c0_37 = arith.constant 0 : index
    %c0_38 = arith.constant 0 : index
    %c0_39 = arith.constant 0 : index
    %79 = vector.load %arg10[%c0_37, %c0_38, %c0_39] : memref<1x32x1xf32, #tpu.memory_space<vmem>>, vector<1x32x1xf32>
    %80 = vector.broadcast %79 : vector<1x32x1xf32> to vector<4x32x1xf32>
    %81 = arith.mulf %78, %80 : vector<4x32x1xf32>
    %c0_40 = arith.constant 0 : index
    %c0_41 = arith.constant 0 : index
    %c0_42 = arith.constant 0 : index
    %82 = vector.load %arg11[%c0_40, %c0_41, %c0_42] : memref<1x32x1xf32, #tpu.memory_space<vmem>>, vector<1x32x1xf32>
    %83 = arith.mulf %66, %81 : vector<4x32x1xf32>
    %84 = vector.broadcast %82 : vector<1x32x1xf32> to vector<4x32x1xf32>
    %85 = arith.subf %84, %83 : vector<4x32x1xf32>
    %86 = vector.broadcast %81 : vector<4x32x1xf32> to vector<4x32x128xf32>
    %87 = arith.mulf %62, %86 : vector<4x32x128xf32>
    %88 = vector.broadcast %85 : vector<4x32x1xf32> to vector<4x32x128xf32>
    %89 = arith.addf %87, %88 : vector<4x32x128xf32>
    %cst_43 = arith.constant 0.000000e+00 : f32
    %90 = vector.broadcast %cst_43 : f32 to vector<4x32x128xf32>
    %91 = arith.maximumf %89, %90 : vector<4x32x128xf32>
    %92 = arith.truncf %91 : vector<4x32x128xf32> to vector<4x32x128xbf16>
    %c0_44 = arith.constant 0 : index
    %c0_45 = arith.constant 0 : index
    %93 = vector.load %arg12[%c0_44, %c0_45] : memref<32x32xbf16, #tpu.memory_space<vmem>>, vector<32x32xbf16>
    %94 = vector.shape_cast %93 : vector<32x32xbf16> to vector<1x32x32xbf16>
    %95 = vector.broadcast %94 : vector<1x32x32xbf16> to vector<4x32x32xbf16>
    "tpu.trace_start"() <{level = 10 : i32, message = "boc,bcn->bon"}> : () -> ()
    %cst_46 = arith.constant dense<0.000000e+00> : vector<4x32x128xf32>
    %96 = tpu.matmul %95, %92, %cst_46 {dimension_numbers = #tpu.dot_dimension_numbers<[2], [1], [1], [2], [0, 0, 0, 1, 1, 2], [0], [0]>} : vector<4x32x32xbf16>, vector<4x32x128xbf16>, vector<4x32x128xf32> -> vector<4x32x128xf32>
    "tpu.trace_stop"() : () -> ()
    %c0_47 = arith.constant 0 : index
    %c0_48 = arith.constant 0 : index
    %c0_49 = arith.constant 0 : index
    %97 = vector.load %arg13[%c0_47, %c0_48, %c0_49] : memref<1x32x1xf32, #tpu.memory_space<vmem>>, vector<1x32x1xf32>
    %98 = vector.broadcast %97 : vector<1x32x1xf32> to vector<4x32x128xf32>
    %99 = arith.addf %96, %98 : vector<4x32x128xf32>
    %c0_50 = arith.constant 0 : index
    %c0_51 = arith.constant 0 : index
    %c0_52 = arith.constant 0 : index
    %100 = vector.load %arg1[%c0_50, %c0_51, %c0_52] : memref<4x32x128xbf16, #tpu.memory_space<vmem>>, vector<4x32x128xbf16>
    %101 = arith.extf %100 : vector<4x32x128xbf16> to vector<4x32x128xf32>
    %102 = arith.addf %99, %101 : vector<4x32x128xf32>
    %c0_53 = arith.constant 0 : index
    %c0_54 = arith.constant 0 : index
    %c0_55 = arith.constant 0 : index
    %103 = vector.load %arg14[%c0_53, %c0_54, %c0_55] : memref<4x32x128xf32, #tpu.memory_space<vmem>>, vector<4x32x128xf32>
    tpu.vector_store %arg14[%c0_53, %c0_54, %c0_55], %102 {strides = array<i32>} : memref<4x32x128xf32, #tpu.memory_space<vmem>>, vector<4x32x128xf32>,
    return
  }
  func.func @transform_0(%arg0: i32) -> (i32, i32, i32) {
    %c0_i32 = arith.constant 0 : i32
    %c0_i32_0 = arith.constant 0 : i32
    %c0_i32_1 = arith.constant 0 : i32
    return %arg0, %c0_i32, %c0_i32_0 : i32, i32, i32
  }
  func.func @transform_1(%arg0: i32) -> (i32, i32, i32) {
    %c0_i32 = arith.constant 0 : i32
    %c0_i32_0 = arith.constant 0 : i32
    %c0_i32_1 = arith.constant 0 : i32
    %c0_i32_2 = arith.constant 0 : i32
    return %c0_i32, %c0_i32_0, %c0_i32_1 : i32, i32, i32
  }
  func.func @transform_2(%arg0: i32) -> (i32, i32, i32) {
    %c0_i32 = arith.constant 0 : i32
    %c0_i32_0 = arith.constant 0 : i32
    %c0_i32_1 = arith.constant 0 : i32
    %c0_i32_2 = arith.constant 0 : i32
    return %c0_i32, %c0_i32_0, %c0_i32_1 : i32, i32, i32
  }
  func.func @transform_3(%arg0: i32) -> (i32, i32) {
    %c0_i32 = arith.constant 0 : i32
    %c0_i32_0 = arith.constant 0 : i32
    %c0_i32_1 = arith.constant 0 : i32
    return %c0_i32, %c0_i32_0 : i32, i32
  }
  func.func @transform_4(%arg0: i32) -> (i32, i32, i32) {
    %c0_i32 = arith.constant 0 : i32
    %c0_i32_0 = arith.constant 0 : i32
    %c0_i32_1 = arith.constant 0 : i32
    %c0_i32_2 = arith.constant 0 : i32
    return %c0_i32, %c0_i32_0, %c0_i32_1 : i32, i32, i32
  }
  func.func @transform_5(%arg0: i32) -> (i32, i32) {
    %c0_i32 = arith.constant 0 : i32
    %c0_i32_0 = arith.constant 0 : i32
    %c0_i32_1 = arith.constant 0 : i32
    return %c0_i32, %c0_i32_0 : i32, i32
  }
  func.func @transform_6(%arg0: i32) -> (i32, i32) {
    %c0_i32 = arith.constant 0 : i32
    %c0_i32_0 = arith.constant 0 : i32
    %c0_i32_1 = arith.constant 0 : i32
    return %c0_i32, %c0_i32_0 : i32, i32
  }
  func.func @transform_7(%arg0: i32) -> (i32, i32) {
    %c0_i32 = arith.constant 0 : i32
    %c0_i32_0 = arith.constant 0 : i32
    %c0_i32_1 = arith.constant 0 : i32
    return %c0_i32, %c0_i32_0 : i32, i32
  }
  func.func @transform_8(%arg0: i32) -> (i32, i32) {
    %c0_i32 = arith.constant 0 : i32
    %c0_i32_0 = arith.constant 0 : i32
    %c0_i32_1 = arith.constant 0 : i32
    return %c0_i32, %c0_i32_0 : i32, i32
  }
  func.func @transform_9(%arg0: i32) -> (i32, i32, i32) {
    %c0_i32 = arith.constant 0 : i32
    %c0_i32_0 = arith.constant 0 : i32
    %c0_i32_1 = arith.constant 0 : i32
    %c0_i32_2 = arith.constant 0 : i32
    return %c0_i32, %c0_i32_0, %c0_i32_1 : i32, i32, i32
  }
  func.func @transform_10(%arg0: i32) -> (i32, i32, i32) {
    %c0_i32 = arith.constant 0 : i32
    %c0_i32_0 = arith.constant 0 : i32
    %c0_i32_1 = arith.constant 0 : i32
    %c0_i32_2 = arith.constant 0 : i32
    return %c0_i32, %c0_i32_0, %c0_i32_1 : i32, i32, i32
  }
  func.func @transform_11(%arg0: i32) -> (i32, i32) {
    %c0_i32 = arith.constant 0 : i32
    %c0_i32_0 = arith.constant 0 : i32
    %c0_i32_1 = arith.constant 0 : i32
    return %c0_i32, %c0_i32_0 : i32, i32
  }
  func.func @transform_12(%arg0: i32) -> (i32, i32, i32) {
    %c0_i32 = arith.constant 0 : i32
    %c0_i32_0 = arith.constant 0 : i32
    %c0_i32_1 = arith.constant 0 : i32
    %c0_i32_2 = arith.constant 0 : i32
    return %c0_i32, %c0_i32_0, %c0_i32_1 : i32, i32, i32
  }
  func.func @transform_13(%arg0: i32) -> (i32, i32, i32) {
    %c0_i32 = arith.constant 0 : i32
    %c0_i32_0 = arith.constant 0 : i32
    %c0_i32_1 = arith.constant 0 : i32
    return %arg0, %c0_i32, %c0_i32_0 : i32, i32, i32
  }
}

module attributes {stable_mosaic.version = 11 : i64} {
  func.func @oafilter_kernel(%arg0: i32, %arg1: memref<4x32x128xbf16, #tpu.memory_space<vmem>>, %arg2: memref<1x32x1xf32, #tpu.memory_space<vmem>>, %arg3: memref<1x32x1xf32, #tpu.memory_space<vmem>>, %arg4: memref<32x32xbf16, #tpu.memory_space<vmem>>, %arg5: memref<1x32x1xf32, #tpu.memory_space<vmem>>, %arg6: memref<1x128xf32, #tpu.memory_space<vmem>>, %arg7: memref<1x128xf32, #tpu.memory_space<vmem>>, %arg8: memref<128x128xbf16, #tpu.memory_space<vmem>>, %arg9: memref<1x128xf32, #tpu.memory_space<vmem>>, %arg10: memref<1x32x1xf32, #tpu.memory_space<vmem>>, %arg11: memref<1x32x1xf32, #tpu.memory_space<vmem>>, %arg12: memref<32x32xbf16, #tpu.memory_space<vmem>>, %arg13: memref<1x32x1xf32, #tpu.memory_space<vmem>>, %arg14: memref<4x32x128xf32, #tpu.memory_space<vmem>>) attributes {dimension_semantics = [#tpu.dimension_semantics<parallel>], iteration_bounds = array<i64: 2>, scalar_prefetch = 0 : i64, scratch_operands = 0 : i64, tpu.core_type = #tpu.core_type<tc>, window_params = [{transform_indices = @transform_0, window_bounds = array<i64: 4, 32, 128>}, {pipeline_mode = #tpu.pipeline_mode<synchronous>, transform_indices = @transform_1, window_bounds = array<i64: 1, 32, 1>}, {pipeline_mode = #tpu.pipeline_mode<synchronous>, transform_indices = @transform_2, window_bounds = array<i64: 1, 32, 1>}, {pipeline_mode = #tpu.pipeline_mode<synchronous>, transform_indices = @transform_3, window_bounds = array<i64: 32, 32>}, {pipeline_mode = #tpu.pipeline_mode<synchronous>, transform_indices = @transform_4, window_bounds = array<i64: 1, 32, 1>}, {pipeline_mode = #tpu.pipeline_mode<synchronous>, transform_indices = @transform_5, window_bounds = array<i64: 1, 128>}, {pipeline_mode = #tpu.pipeline_mode<synchronous>, transform_indices = @transform_6, window_bounds = array<i64: 1, 128>}, {pipeline_mode = #tpu.pipeline_mode<synchronous>, transform_indices = @transform_7, window_bounds = array<i64: 128, 128>}, {pipeline_mode = #tpu.pipeline_mode<synchronous>, transform_indices = @transform_8, window_bounds = array<i64: 1, 128>}, {pipeline_mode = #tpu.pipeline_mode<synchronous>, transform_indices = @transform_9, window_bounds = array<i64: 1, 32, 1>}, {pipeline_mode = #tpu.pipeline_mode<synchronous>, transform_indices = @transform_10, window_bounds = array<i64: 1, 32, 1>}, {pipeline_mode = #tpu.pipeline_mode<synchronous>, transform_indices = @transform_11, window_bounds = array<i64: 32, 32>}, {pipeline_mode = #tpu.pipeline_mode<synchronous>, transform_indices = @transform_12, window_bounds = array<i64: 1, 32, 1>}, {transform_indices = @transform_13, window_bounds = array<i64: 4, 32, 128>}]} {
    %c0 = arith.constant 0 : index
    %c0_0 = arith.constant 0 : index
    %c0_1 = arith.constant 0 : index
    %0 = vector.load %arg1[%c0, %c0_0, %c0_1] : memref<4x32x128xbf16, #tpu.memory_space<vmem>>, vector<4x32x128xbf16>
    %1 = arith.extf %0 : vector<4x32x128xbf16> to vector<4x32x128xf32>
    %cst = arith.constant dense<0.000000e+00> : vector<4x32xf32>
    %2 = vector.multi_reduction <add>, %1, %cst [2] : vector<4x32x128xf32> to vector<4x32xf32>
    %3 = vector.shape_cast %2 : vector<4x32xf32> to vector<4x32x1xf32>
    %cst_2 = arith.constant 0.010416667 : f32
    %4 = vector.broadcast %cst_2 : f32 to vector<4x32x1xf32>
    %5 = arith.mulf %3, %4 : vector<4x32x1xf32>
    %6 = arith.mulf %1, %1 : vector<4x32x128xf32>
    %cst_3 = arith.constant dense<0.000000e+00> : vector<4x32xf32>
    %7 = vector.multi_reduction <add>, %6, %cst_3 [2] : vector<4x32x128xf32> to vector<4x32xf32>
    %8 = vector.shape_cast %7 : vector<4x32xf32> to vector<4x32x1xf32>
    %cst_4 = arith.constant 0.010416667 : f32
    %9 = vector.broadcast %cst_4 : f32 to vector<4x32x1xf32>
    %10 = arith.mulf %8, %9 : vector<4x32x1xf32>
    %11 = arith.mulf %5, %5 : vector<4x32x1xf32>
    %12 = arith.subf %10, %11 : vector<4x32x1xf32>
    %cst_5 = arith.constant 0.000000e+00 : f32
    %13 = vector.broadcast %cst_5 : f32 to vector<4x32x1xf32>
    %14 = arith.maximumf %12, %13 : vector<4x32x1xf32>
    %cst_6 = arith.constant 1.000000e-03 : f32
    %15 = vector.broadcast %cst_6 : f32 to vector<4x32x1xf32>
    %16 = arith.addf %14, %15 : vector<4x32x1xf32>
    %17 = math.rsqrt %16 : vector<4x32x1xf32>
    %c0_7 = arith.constant 0 : index
    %c0_8 = arith.constant 0 : index
    %c0_9 = arith.constant 0 : index
    %18 = vector.load %arg2[%c0_7, %c0_8, %c0_9] : memref<1x32x1xf32, #tpu.memory_space<vmem>>, vector<1x32x1xf32>
    %19 = vector.broadcast %18 : vector<1x32x1xf32> to vector<4x32x1xf32>
    %20 = arith.mulf %17, %19 : vector<4x32x1xf32>
    %c0_10 = arith.constant 0 : index
    %c0_11 = arith.constant 0 : index
    %c0_12 = arith.constant 0 : index
    %21 = vector.load %arg3[%c0_10, %c0_11, %c0_12] : memref<1x32x1xf32, #tpu.memory_space<vmem>>, vector<1x32x1xf32>
    %22 = arith.mulf %5, %20 : vector<4x32x1xf32>
    %23 = vector.broadcast %21 : vector<1x32x1xf32> to vector<4x32x1xf32>
    %24 = arith.subf %23, %22 : vector<4x32x1xf32>
    %25 = vector.broadcast %20 : vector<4x32x1xf32> to vector<4x32x128xf32>
    %26 = arith.mulf %1, %25 : vector<4x32x128xf32>
    %27 = vector.broadcast %24 : vector<4x32x1xf32> to vector<4x32x128xf32>
    %28 = arith.addf %26, %27 : vector<4x32x128xf32>
    %cst_13 = arith.constant 0.000000e+00 : f32
    %29 = vector.broadcast %cst_13 : f32 to vector<4x32x128xf32>
    %30 = arith.maximumf %28, %29 : vector<4x32x128xf32>
    %31 = arith.truncf %30 : vector<4x32x128xf32> to vector<4x32x128xbf16>
    %c0_14 = arith.constant 0 : index
    %c0_15 = arith.constant 0 : index
    %32 = vector.load %arg4[%c0_14, %c0_15] : memref<32x32xbf16, #tpu.memory_space<vmem>>, vector<32x32xbf16>
    %33 = vector.shape_cast %32 : vector<32x32xbf16> to vector<1x32x32xbf16>
    %34 = vector.broadcast %33 : vector<1x32x32xbf16> to vector<4x32x32xbf16>
    "tpu.trace_start"() <{level = 10 : i32, message = "boc,bcn->bon"}> : () -> ()
    %cst_16 = arith.constant dense<0.000000e+00> : vector<4x32x128xf32>
    %35 = tpu.matmul %34, %31, %cst_16 {dimension_numbers = #tpu.dot_dimension_numbers<[2], [1], [1], [2], [0, 0, 0, 1, 1, 2], [0], [0]>} : vector<4x32x32xbf16>, vector<4x32x128xbf16>, vector<4x32x128xf32> -> vector<4x32x128xf32>
    "tpu.trace_stop"() : () -> ()
    %c0_17 = arith.constant 0 : index
    %c0_18 = arith.constant 0 : index
    %c0_19 = arith.constant 0 : index
    %36 = vector.load %arg5[%c0_17, %c0_18, %c0_19] : memref<1x32x1xf32, #tpu.memory_space<vmem>>, vector<1x32x1xf32>
    %37 = vector.broadcast %36 : vector<1x32x1xf32> to vector<4x32x128xf32>
    %38 = arith.addf %35, %37 : vector<4x32x128xf32>
    %39 = tpu.iota {dimensions = array<i32: 2>} : vector<1x1x128xi32>
    %c96_i32 = arith.constant 96 : i32
    %40 = vector.broadcast %c96_i32 : i32 to vector<1x1x128xi32>
    %41 = arith.cmpi slt, %39, %40 : vector<1x1x128xi32>
    %cst_20 = arith.constant 0.000000e+00 : f32
    %42 = vector.shape_cast %41 : vector<1x1x128xi1> to vector<1x1x128xi1>
    %43 = vector.broadcast %42 : vector<1x1x128xi1> to vector<4x32x128xi1>
    %44 = vector.broadcast %cst_20 : f32 to vector<4x32x128xf32>
    %45 = arith.select %43, %38, %44 : vector<4x32x128xi1>, vector<4x32x128xf32>
    %46 = vector.shape_cast %45 : vector<4x32x128xf32> to vector<128x128xf32>
    %c0_21 = arith.constant 0 : index
    %c0_22 = arith.constant 0 : index
    %47 = vector.load %arg6[%c0_21, %c0_22] : memref<1x128xf32, #tpu.memory_space<vmem>>, vector<1x128xf32>
    %48 = vector.broadcast %47 : vector<1x128xf32> to vector<128x128xf32>
    %49 = arith.mulf %46, %48 : vector<128x128xf32>
    %c0_23 = arith.constant 0 : index
    %c0_24 = arith.constant 0 : index
    %50 = vector.load %arg7[%c0_23, %c0_24] : memref<1x128xf32, #tpu.memory_space<vmem>>, vector<1x128xf32>
    %51 = vector.broadcast %50 : vector<1x128xf32> to vector<128x128xf32>
    %52 = arith.addf %49, %51 : vector<128x128xf32>
    %cst_25 = arith.constant 0.000000e+00 : f32
    %53 = vector.broadcast %cst_25 : f32 to vector<128x128xf32>
    %54 = arith.maximumf %52, %53 : vector<128x128xf32>
    %55 = arith.truncf %54 : vector<128x128xf32> to vector<128x128xbf16>
    %c0_26 = arith.constant 0 : index
    %c0_27 = arith.constant 0 : index
    %56 = vector.load %arg8[%c0_26, %c0_27] : memref<128x128xbf16, #tpu.memory_space<vmem>>, vector<128x128xbf16>
    %cst_28 = arith.constant dense<0.000000e+00> : vector<128x128xf32>
    %57 = tpu.matmul %55, %56, %cst_28 {dimension_numbers = #tpu.dot_dimension_numbers<[1], [0], [0], [1], [0, 0, 1, 1], [], []>} : vector<128x128xbf16>, vector<128x128xbf16>, vector<128x128xf32> -> vector<128x128xf32>
    %58 = arith.addf %46, %57 : vector<128x128xf32>
    %c0_29 = arith.constant 0 : index
    %c0_30 = arith.constant 0 : index
    %59 = vector.load %arg9[%c0_29, %c0_30] : memref<1x128xf32, #tpu.memory_space<vmem>>, vector<1x128xf32>
    %60 = vector.broadcast %59 : vector<1x128xf32> to vector<128x128xf32>
    %61 = arith.addf %58, %60 : vector<128x128xf32>
    %62 = vector.shape_cast %61 : vector<128x128xf32> to vector<4x32x128xf32>
    %cst_31 = arith.constant dense<0.000000e+00> : vector<4x32xf32>
    %63 = vector.multi_reduction <add>, %62, %cst_31 [2] : vector<4x32x128xf32> to vector<4x32xf32>
    %64 = vector.shape_cast %63 : vector<4x32xf32> to vector<4x32x1xf32>
    %cst_32 = arith.constant 0.010416667 : f32
    %65 = vector.broadcast %cst_32 : f32 to vector<4x32x1xf32>
    %66 = arith.mulf %64, %65 : vector<4x32x1xf32>
    %67 = arith.mulf %62, %62 : vector<4x32x128xf32>
    %cst_33 = arith.constant dense<0.000000e+00> : vector<4x32xf32>
    %68 = vector.multi_reduction <add>, %67, %cst_33 [2] : vector<4x32x128xf32> to vector<4x32xf32>
    %69 = vector.shape_cast %68 : vector<4x32xf32> to vector<4x32x1xf32>
    %cst_34 = arith.constant 0.010416667 : f32
    %70 = vector.broadcast %cst_34 : f32 to vector<4x32x1xf32>
    %71 = arith.mulf %69, %70 : vector<4x32x1xf32>
    %72 = arith.mulf %66, %66 : vector<4x32x1xf32>
    %73 = arith.subf %71, %72 : vector<4x32x1xf32>
    %cst_35 = arith.constant 0.000000e+00 : f32
    %74 = vector.broadcast %cst_35 : f32 to vector<4x32x1xf32>
    %75 = arith.maximumf %73, %74 : vector<4x32x1xf32>
    %cst_36 = arith.constant 1.000000e-03 : f32
    %76 = vector.broadcast %cst_36 : f32 to vector<4x32x1xf32>
    %77 = arith.addf %75, %76 : vector<4x32x1xf32>
    %78 = math.rsqrt %77 : vector<4x32x1xf32>
    %c0_37 = arith.constant 0 : index
    %c0_38 = arith.constant 0 : index
    %c0_39 = arith.constant 0 : index
    %79 = vector.load %arg10[%c0_37, %c0_38, %c0_39] : memref<1x32x1xf32, #tpu.memory_space<vmem>>, vector<1x32x1xf32>
    %80 = vector.broadcast %79 : vector<1x32x1xf32> to vector<4x32x1xf32>
    %81 = arith.mulf %78, %80 : vector<4x32x1xf32>
    %c0_40 = arith.constant 0 : index
    %c0_41 = arith.constant 0 : index
    %c0_42 = arith.constant 0 : index
    %82 = vector.load %arg11[%c0_40, %c0_41, %c0_42] : memref<1x32x1xf32, #tpu.memory_space<vmem>>, vector<1x32x1xf32>
    %83 = arith.mulf %66, %81 : vector<4x32x1xf32>
    %84 = vector.broadcast %82 : vector<1x32x1xf32> to vector<4x32x1xf32>
    %85 = arith.subf %84, %83 : vector<4x32x1xf32>
    %86 = vector.broadcast %81 : vector<4x32x1xf32> to vector<4x32x128xf32>
    %87 = arith.mulf %62, %86 : vector<4x32x128xf32>
    %88 = vector.broadcast %85 : vector<4x32x1xf32> to vector<4x32x128xf32>
    %89 = arith.addf %87, %88 : vector<4x32x128xf32>
    %cst_43 = arith.constant 0.000000e+00 : f32
    %90 = vector.broadcast %cst_43 : f32 to vector<4x32x128xf32>
    %91 = arith.maximumf %89, %90 : vector<4x32x128xf32>
    %92 = arith.truncf %91 : vector<4x32x128xf32> to vector<4x32x128xbf16>
    %c0_44 = arith.constant 0 : index
    %c0_45 = arith.constant 0 : index
    %93 = vector.load %arg12[%c0_44, %c0_45] : memref<32x32xbf16, #tpu.memory_space<vmem>>, vector<32x32xbf16>
    %94 = vector.shape_cast %93 : vector<32x32xbf16> to vector<1x32x32xbf16>
    %95 = vector.broadcast %94 : vector<1x32x32xbf16> to vector<4x32x32xbf16>
    "tpu.trace_start"() <{level = 10 : i32, message = "boc,bcn->bon"}> : () -> ()
    %cst_46 = arith.constant dense<0.000000e+00> : vector<4x32x128xf32>
    %96 = tpu.matmul %95, %92, %cst_46 {dimension_numbers = #tpu.dot_dimension_numbers<[2], [1], [1], [2], [0, 0, 0, 1, 1, 2], [0], [0]>} : vector<4x32x32xbf16>, vector<4x32x128xbf16>, vector<4x32x128xf32> -> vector<4x32x128xf32>
    "tpu.trace_stop"() : () -> ()
    %c0_47 = arith.constant 0 : index
    %c0_48 = arith.constant 0 : index
    %c0_49 = arith.constant 0 : index
    %97 = vector.load %arg13[%c0_47, %c0_48, %c0_49] : memref<1x32x1xf32, #tpu.memory_space<vmem>>, vector<1x32x1xf32>
    %98 = vector.broadcast %97 : vector<1x32x1xf32> to vector<4x32x128xf32>
    %99 = arith.addf %96, %98 : vector<4x32x128xf32>
    %c0_50 = arith.constant 0 : index
    %c0_51 = arith.constant 0 : index
    %c0_52 = arith.constant 0 : index
    %100 = vector.load %arg1[%c0_50, %c0_51, %c0_52] : memref<4x32x128xbf16, #tpu.memory_space<vmem>>, vector<4x32x128xbf16>
    %101 = arith.extf %100 : vector<4x32x128xbf16> to vector<4x32x128xf32>
    %102 = arith.addf %99, %101 : vector<4x32x128xf32>
    %c0_53 = arith.constant 0 : index
    %c0_54 = arith.constant 0 : index
    %c0_55 = arith.constant 0 : index
    %103 = vector.load %arg14[%c0_53, %c0_54, %c0_55] : memref<4x32x128xf32, #tpu.memory_space<vmem>>, vector<4x32x128xf32>
    tpu.vector_store %arg14[%c0_53, %c0_54, %c0_55], %102 {strides = array<i32>} : memref<4x32x128xf32, #tpu.memory_space<vmem>>, vector<4x32x128xf32>,
    return
  }
  func.func @transform_0(%arg0: i32) -> (i32, i32, i32) {
    %c0_i32 = arith.constant 0 : i32
    %c0_i32_0 = arith.constant 0 : i32
    %c0_i32_1 = arith.constant 0 : i32
    return %arg0, %c0_i32, %c0_i32_0 : i32, i32, i32
  }
  func.func @transform_1(%arg0: i32) -> (i32, i32, i32) {
    %c0_i32 = arith.constant 0 : i32
    %c0_i32_0 = arith.constant 0 : i32
    %c0_i32_1 = arith.constant 0 : i32
    %c0_i32_2 = arith.constant 0 : i32
    return %c0_i32, %c0_i32_0, %c0_i32_1 : i32, i32, i32
  }
  func.func @transform_2(%arg0: i32) -> (i32, i32, i32) {
    %c0_i32 = arith.constant 0 : i32
    %c0_i32_0 = arith.constant 0 : i32
    %c0_i32_1 = arith.constant 0 : i32
    %c0_i32_2 = arith.constant 0 : i32
    return %c0_i32, %c0_i32_0, %c0_i32_1 : i32, i32, i32
  }
  func.func @transform_3(%arg0: i32) -> (i32, i32) {
    %c0_i32 = arith.constant 0 : i32
    %c0_i32_0 = arith.constant 0 : i32
    %c0_i32_1 = arith.constant 0 : i32
    return %c0_i32, %c0_i32_0 : i32, i32
  }
  func.func @transform_4(%arg0: i32) -> (i32, i32, i32) {
    %c0_i32 = arith.constant 0 : i32
    %c0_i32_0 = arith.constant 0 : i32
    %c0_i32_1 = arith.constant 0 : i32
    %c0_i32_2 = arith.constant 0 : i32
    return %c0_i32, %c0_i32_0, %c0_i32_1 : i32, i32, i32
  }
  func.func @transform_5(%arg0: i32) -> (i32, i32) {
    %c0_i32 = arith.constant 0 : i32
    %c0_i32_0 = arith.constant 0 : i32
    %c0_i32_1 = arith.constant 0 : i32
    return %c0_i32, %c0_i32_0 : i32, i32
  }
  func.func @transform_6(%arg0: i32) -> (i32, i32) {
    %c0_i32 = arith.constant 0 : i32
    %c0_i32_0 = arith.constant 0 : i32
    %c0_i32_1 = arith.constant 0 : i32
    return %c0_i32, %c0_i32_0 : i32, i32
  }
  func.func @transform_7(%arg0: i32) -> (i32, i32) {
    %c0_i32 = arith.constant 0 : i32
    %c0_i32_0 = arith.constant 0 : i32
    %c0_i32_1 = arith.constant 0 : i32
    return %c0_i32, %c0_i32_0 : i32, i32
  }
  func.func @transform_8(%arg0: i32) -> (i32, i32) {
    %c0_i32 = arith.constant 0 : i32
    %c0_i32_0 = arith.constant 0 : i32
    %c0_i32_1 = arith.constant 0 : i32
    return %c0_i32, %c0_i32_0 : i32, i32
  }
  func.func @transform_9(%arg0: i32) -> (i32, i32, i32) {
    %c0_i32 = arith.constant 0 : i32
    %c0_i32_0 = arith.constant 0 : i32
    %c0_i32_1 = arith.constant 0 : i32
    %c0_i32_2 = arith.constant 0 : i32
    return %c0_i32, %c0_i32_0, %c0_i32_1 : i32, i32, i32
  }
  func.func @transform_10(%arg0: i32) -> (i32, i32, i32) {
    %c0_i32 = arith.constant 0 : i32
    %c0_i32_0 = arith.constant 0 : i32
    %c0_i32_1 = arith.constant 0 : i32
    %c0_i32_2 = arith.constant 0 : i32
    return %c0_i32, %c0_i32_0, %c0_i32_1 : i32, i32, i32
  }
  func.func @transform_11(%arg0: i32) -> (i32, i32) {
    %c0_i32 = arith.constant 0 : i32
    %c0_i32_0 = arith.constant 0 : i32
    %c0_i32_1 = arith.constant 0 : i32
    return %c0_i32, %c0_i32_0 : i32, i32
  }
  func.func @transform_12(%arg0: i32) -> (i32, i32, i32) {
    %c0_i32 = arith.constant 0 : i32
    %c0_i32_0 = arith.constant 0 : i32
    %c0_i32_1 = arith.constant 0 : i32
    %c0_i32_2 = arith.constant 0 : i32
    return %c0_i32, %c0_i32_0, %c0_i32_1 : i32, i32, i32
  }
  func.func @transform_13(%arg0: i32) -> (i32, i32, i32) {
    %c0_i32 = arith.constant 0 : i32
    %c0_i32_0 = arith.constant 0 : i32
    %c0_i32_1 = arith.constant 0 : i32
    return %arg0, %c0_i32, %c0_i32_0 : i32, i32, i32
  }
}

</mosaic_0001>

<llo_original>
// kernel: tpu_custom_call.1
$region0: #{tpu_custom_call.1}
  #allocation0 [shape = 'u32[]', space=smem, size = 0x4, offset = 0x4, fixed_abs, tag = 'smem constant byte address 0x4 - core index']
  #allocation1 [shape = 'u32[72,128]{1,0:T(1,128)}', space=vmem, size = 0x9000, scoped, tag = 'internal scratch']
  %s0 = inlined_call_operand.vmem [shape: bf16[8,32,128], index: 0, kind: input, shape index: {}]
  %s1 = inlined_call_operand.vmem [shape: f32[1,32,1], index: 1, kind: input, shape index: {}]
  %s2 = inlined_call_operand.vmem [shape: f32[1,32,1], index: 2, kind: input, shape index: {}]
  %s3 = inlined_call_operand.hbm [shape: bf16[32,32], index: 3, kind: input, shape index: {}]
  %s4 = inlined_call_operand.vmem [shape: f32[1,32,1], index: 4, kind: input, shape index: {}]
  %s5 = inlined_call_operand.vmem [shape: f32[1,128], index: 5, kind: input, shape index: {}]
  %s6 = inlined_call_operand.vmem [shape: f32[1,128], index: 6, kind: input, shape index: {}]
  %s7 = inlined_call_operand.vmem [shape: bf16[128,128], index: 7, kind: input, shape index: {}]
  %s8 = inlined_call_operand.vmem [shape: f32[1,128], index: 8, kind: input, shape index: {}]
  %s9 = inlined_call_operand.vmem [shape: f32[1,32,1], index: 9, kind: input, shape index: {}]
  %s10 = inlined_call_operand.vmem [shape: f32[1,32,1], index: 10, kind: input, shape index: {}]
  %s11 = inlined_call_operand.hbm [shape: bf16[32,32], index: 11, kind: input, shape index: {}]
  %s12 = inlined_call_operand.vmem [shape: f32[1,32,1], index: 12, kind: input, shape index: {}]
  %s13 = inlined_call_operand.hbm [shape: f32[8,32,128], index: 13, kind: output, shape index: {}]
  %s14 = sld [smem:[#allocation0]]
  $region93: #{tpu_custom_call.1} parent=0
    _
  %s16 = ssub.s32 1, %s14
  %s17 = scalar_select 0, %s16, %s14
  $region1: #{tpu_custom_call.1} parent=0
    #allocation2 [shape = 'u8[8192]{0}', space=vmem, size = 0x2000, scoped, tag = 'input window, operand 3, single buffered']
    #allocation3 [shape = 's32[2]{0}', space=sflag, size = 0x8, scoped, tag = 'scoped memory for tpu_custom_call.1']
    #allocation4 [shape = 's32[2]{0}', space=sflag, size = 0x8, scoped, tag = 'scoped memory for tpu_custom_call.1']
    #allocation5 [shape = 'u8[8192]{0}', space=vmem, size = 0x2000, scoped, tag = 'input window, operand 11, single buffered']
    #allocation6 [shape = 's32[1]{0}', space=sflag, size = 0x4, scoped, tag = 'scoped memory for tpu_custom_call.1']
    #allocation7 [shape = 'u8[131072]{0}', space=vmem, size = 0x20000, scoped, tag = 'output window, operand 0']
    %18 = vsyncpa [#allocation3], 0
    %19 = vsyncpa [#allocation6], 0
    %20 = vsyncpa [#allocation4], 0
    %s21 = scalar_lea.sflag [#allocation4], 1
    %22 = vsyncpa %s21, 0
    loop: start=0, step=1, limit=4
    $region2: #{tpu_custom_call.1} parent=1 // loop_pre_header
      _
    $region3: #{tpu_custom_call.1} parent=1 // loop_header
      %s24 = sphi 0, %s28
      %p25 = scmp.ge.s32.totalorder %s24, 4
      %s34 = sphi 0, %s36
      %s37 = sphi 0, %s34
      %s38 = sphi 0, %s37
      %s54 = sphi 0, %s38
      %s58 = sphi 0, %s58
      %s60 = sphi 0, %s58
      %s61 = sphi 0, %s60
      %s75 = sphi 0, %s61
      %s79 = sphi 0, %s79
      %s81 = sphi 0, %s79
      %s82 = sphi 0, %s81
      %s96 = sphi 0, %s82
      %s100 = sphi 0, %s100
      %s102 = sphi 0, %s100
      %s103 = sphi 0, %s102
      %s117 = sphi 0, %s103
      %s121 = sphi 0, %s121
      %s123 = sphi 0, %s121
      %s124 = sphi 0, %s123
      %s138 = sphi 0, %s124
      %s142 = sphi 0, %s142
      %s144 = sphi 0, %s142
      %s145 = sphi 0, %s144
      %s159 = sphi 0, %s145
      %s163 = sphi 0, %s163
      %s165 = sphi 0, %s163
      %s166 = sphi 0, %s165
      %s180 = sphi 0, %s166
      %s184 = sphi 0, %s184
      %s186 = sphi 0, %s184
      %s187 = sphi 0, %s186
      %s201 = sphi 0, %s187
      %s205 = sphi 0, %s205
      %s207 = sphi 0, %s205
      %s208 = sphi 0, %s207
      %s222 = sphi 0, %s208
      %s226 = sphi 0, %s226
      %s228 = sphi 0, %s226
      %s229 = sphi 0, %s228
      %s243 = sphi 0, %s229
      %s247 = sphi 0, %s247
      %s249 = sphi 0, %s247
      %s250 = sphi 0, %s249
      %s264 = sphi 0, %s250
      %s268 = sphi 0, %s268
      %s270 = sphi 0, %s268
      %s271 = sphi 0, %s270
      %s285 = sphi 0, %s271
      %s289 = sphi 0, %s289
      %s291 = sphi 0, %s289
      %s292 = sphi 0, %s291
      %s306 = sphi 0, %s292
      %s312 = sphi 0, %s314
      %s315 = sphi 0, %s312
      %s316 = sphi 0, %s315
      %s332 = sphi 0, %s316
    $region4: #{tpu_custom_call.1} parent=1 // loop_header_branch
      %27 = sbr.rel (%p25) target = $region8
    $region5: #{tpu_custom_call.1} parent=1 // loop_body
      %s29 = ssub.s32 %s24, 1
      %s30 = ssub.s32 %s24, 2
      %s31 = sadd.s32 %s24, 1
      %s32 = ssub.s32 %s24, %s31
      %p33 = scmp.eq.s32.totalorder %s32, 0
      %s35 = sadd.s32 %s34, 1
      %s36 = scalar_select %p33, %s34, %s35
      %p39 = pneg %p33
      %p40 = scmp.eq.s32.totalorder %s24, 1
      %p41 = por %p39, %p40
      %p42 = scmp.ne.s32.totalorder %s34, %s37
      %p43 = scmp.eq.s32.totalorder %s24, 0
      %p44 = por %p42, %p43
      %p45 = scmp.ne.s32.totalorder %s34, %s37
      %p46 = scmp.eq.s32.totalorder %s29, 1
      %p47 = por %p45, %p46
      %p48 = scmp.ne.s32.totalorder %s37, %s38
      %p49 = scmp.eq.s32.totalorder %s29, 0
      %p50 = por %p48, %p49
      %p51 = scmp.ne.s32.totalorder %s37, %s38
      %p52 = scmp.eq.s32.totalorder %s30, 1
      %p53 = por %p51, %p52
      %p55 = scmp.ne.s32.totalorder %s38, %s54
      %p56 = scmp.eq.s32.totalorder %s30, 0
      %p57 = por %p55, %p56
      %s59 = sadd.s32 %s58, 1
      %p62 = scmp.eq.s32.totalorder %s24, 1
      %p63 = scmp.ne.s32.totalorder %s58, %s60
      %p64 = scmp.eq.s32.totalorder %s24, 0
      %p65 = por %p63, %p64
      %p66 = scmp.ne.s32.totalorder %s58, %s60
      %p67 = scmp.eq.s32.totalorder %s29, 1
      %p68 = por %p66, %p67
      %p69 = scmp.ne.s32.totalorder %s60, %s61
      %p70 = scmp.eq.s32.totalorder %s29, 0
      %p71 = por %p69, %p70
      %p72 = scmp.ne.s32.totalorder %s60, %s61
      %p73 = scmp.eq.s32.totalorder %s30, 1
      %p74 = por %p72, %p73
      %p76 = scmp.ne.s32.totalorder %s61, %s75
      %p77 = scmp.eq.s32.totalorder %s30, 0
      %p78 = por %p76, %p77
      %s80 = sadd.s32 %s79, 1
      %p83 = scmp.eq.s32.totalorder %s24, 1
      %p84 = scmp.ne.s32.totalorder %s79, %s81
      %p85 = scmp.eq.s32.totalorder %s24, 0
      %p86 = por %p84, %p85
      %p87 = scmp.ne.s32.totalorder %s79, %s81
      %p88 = scmp.eq.s32.totalorder %s29, 1
      %p89 = por %p87, %p88
      %p90 = scmp.ne.s32.totalorder %s81, %s82
      %p91 = scmp.eq.s32.totalorder %s29, 0
      %p92 = por %p90, %p91
      %p93 = scmp.ne.s32.totalorder %s81, %s82
      %p94 = scmp.eq.s32.totalorder %s30, 1
      %p95 = por %p93, %p94
      %p97 = scmp.ne.s32.totalorder %s82, %s96
      %p98 = scmp.eq.s32.totalorder %s30, 0
      %p99 = por %p97, %p98
      %s101 = sadd.s32 %s100, 1
      %p104 = scmp.eq.s32.totalorder %s24, 1
      %p105 = scmp.ne.s32.totalorder %s100, %s102
      %p106 = scmp.eq.s32.totalorder %s24, 0
      %p107 = por %p105, %p106
      %p108 = scmp.ne.s32.totalorder %s100, %s102
      %p109 = scmp.eq.s32.totalorder %s29, 1
      %p110 = por %p108, %p109
      %p111 = scmp.ne.s32.totalorder %s102, %s103
      %p112 = scmp.eq.s32.totalorder %s29, 0
      %p113 = por %p111, %p112
      %p114 = scmp.ne.s32.totalorder %s102, %s103
      %p115 = scmp.eq.s32.totalorder %s30, 1
      %p116 = por %p114, %p115
      %p118 = scmp.ne.s32.totalorder %s103, %s117
      %p119 = scmp.eq.s32.totalorder %s30, 0
      %p120 = por %p118, %p119
      %s122 = sadd.s32 %s121, 1
      %p125 = scmp.eq.s32.totalorder %s24, 1
      %p126 = scmp.ne.s32.totalorder %s121, %s123
      %p127 = scmp.eq.s32.totalorder %s24, 0
      %p128 = por %p126, %p127
      %p129 = scmp.ne.s32.totalorder %s121, %s123
      %p130 = scmp.eq.s32.totalorder %s29, 1
      %p131 = por %p129, %p130
      %p132 = scmp.ne.s32.totalorder %s123, %s124
      %p133 = scmp.eq.s32.totalorder %s29, 0
      %p134 = por %p132, %p133
      %p135 = scmp.ne.s32.totalorder %s123, %s124
      %p136 = scmp.eq.s32.totalorder %s30, 1
      %p137 = por %p135, %p136
      %p139 = scmp.ne.s32.totalorder %s124, %s138
      %p140 = scmp.eq.s32.totalorder %s30, 0
      %p141 = por %p139, %p140
      %s143 = sadd.s32 %s142, 1
      %p146 = scmp.eq.s32.totalorder %s24, 1
      %p147 = scmp.ne.s32.totalorder %s142, %s144
      %p148 = scmp.eq.s32.totalorder %s24, 0
      %p149 = por %p147, %p148
      %p150 = scmp.ne.s32.totalorder %s142, %s144
      %p151 = scmp.eq.s32.totalorder %s29, 1
      %p152 = por %p150, %p151
      %p153 = scmp.ne.s32.totalorder %s144, %s145
      %p154 = scmp.eq.s32.totalorder %s29, 0
      %p155 = por %p153, %p154
      %p156 = scmp.ne.s32.totalorder %s144, %s145
      %p157 = scmp.eq.s32.totalorder %s30, 1
      %p158 = por %p156, %p157
      %p160 = scmp.ne.s32.totalorder %s145, %s159
      %p161 = scmp.eq.s32.totalorder %s30, 0
      %p162 = por %p160, %p161
      %s164 = sadd.s32 %s163, 1
      %p167 = scmp.eq.s32.totalorder %s24, 1
      %p168 = scmp.ne.s32.totalorder %s163, %s165
      %p169 = scmp.eq.s32.totalorder %s24, 0
      %p170 = por %p168, %p169
      %p171 = scmp.ne.s32.totalorder %s163, %s165
      %p172 = scmp.eq.s32.totalorder %s29, 1
      %p173 = por %p171, %p172
      %p174 = scmp.ne.s32.totalorder %s165, %s166
      %p175 = scmp.eq.s32.totalorder %s29, 0
      %p176 = por %p174, %p175
      %p177 = scmp.ne.s32.totalorder %s165, %s166
      %p178 = scmp.eq.s32.totalorder %s30, 1
      %p179 = por %p177, %p178
      %p181 = scmp.ne.s32.totalorder %s166, %s180
      %p182 = scmp.eq.s32.totalorder %s30, 0
      %p183 = por %p181, %p182
      %s185 = sadd.s32 %s184, 1
      %p188 = scmp.eq.s32.totalorder %s24, 1
      %p189 = scmp.ne.s32.totalorder %s184, %s186
      %p190 = scmp.eq.s32.totalorder %s24, 0
      %p191 = por %p189, %p190
      %p192 = scmp.ne.s32.totalorder %s184, %s186
      %p193 = scmp.eq.s32.totalorder %s29, 1
      %p194 = por %p192, %p193
      %p195 = scmp.ne.s32.totalorder %s186, %s187
      %p196 = scmp.eq.s32.totalorder %s29, 0
      %p197 = por %p195, %p196
      %p198 = scmp.ne.s32.totalorder %s186, %s187
      %p199 = scmp.eq.s32.totalorder %s30, 1
      %p200 = por %p198, %p199
      %p202 = scmp.ne.s32.totalorder %s187, %s201
      %p203 = scmp.eq.s32.totalorder %s30, 0
      %p204 = por %p202, %p203
      %s206 = sadd.s32 %s205, 1
      %p209 = scmp.eq.s32.totalorder %s24, 1
      %p210 = scmp.ne.s32.totalorder %s205, %s207
      %p211 = scmp.eq.s32.totalorder %s24, 0
      %p212 = por %p210, %p211
      %p213 = scmp.ne.s32.totalorder %s205, %s207
      %p214 = scmp.eq.s32.totalorder %s29, 1
      %p215 = por %p213, %p214
      %p216 = scmp.ne.s32.totalorder %s207, %s208
      %p217 = scmp.eq.s32.totalorder %s29, 0
      %p218 = por %p216, %p217
      %p219 = scmp.ne.s32.totalorder %s207, %s208
      %p220 = scmp.eq.s32.totalorder %s30, 1
      %p221 = por %p219, %p220
      %p223 = scmp.ne.s32.totalorder %s208, %s222
      %p224 = scmp.eq.s32.totalorder %s30, 0
      %p225 = por %p223, %p224
      %s227 = sadd.s32 %s226, 1
      %p230 = scmp.eq.s32.totalorder %s24, 1
      %p231 = scmp.ne.s32.totalorder %s226, %s228
      %p232 = scmp.eq.s32.totalorder %s24, 0
      %p233 = por %p231, %p232
      %p234 = scmp.ne.s32.totalorder %s226, %s228
      %p235 = scmp.eq.s32.totalorder %s29, 1
      %p236 = por %p234, %p235
      %p237 = scmp.ne.s32.totalorder %s228, %s229
      %p238 = scmp.eq.s32.totalorder %s29, 0
      %p239 = por %p237, %p238
      %p240 = scmp.ne.s32.totalorder %s228, %s229
      %p241 = scmp.eq.s32.totalorder %s30, 1
      %p242 = por %p240, %p241
      %p244 = scmp.ne.s32.totalorder %s229, %s243
      %p245 = scmp.eq.s32.totalorder %s30, 0
      %p246 = por %p244, %p245
      %s248 = sadd.s32 %s247, 1
      %p251 = scmp.eq.s32.totalorder %s24, 1
      %p252 = scmp.ne.s32.totalorder %s247, %s249
      %p253 = scmp.eq.s32.totalorder %s24, 0
      %p254 = por %p252, %p253
      %p255 = scmp.ne.s32.totalorder %s247, %s249
      %p256 = scmp.eq.s32.totalorder %s29, 1
      %p257 = por %p255, %p256
      %p258 = scmp.ne.s32.totalorder %s249, %s250
      %p259 = scmp.eq.s32.totalorder %s29, 0
      %p260 = por %p258, %p259
      %p261 = scmp.ne.s32.totalorder %s249, %s250
      %p262 = scmp.eq.s32.totalorder %s30, 1
      %p263 = por %p261, %p262
      %p265 = scmp.ne.s32.totalorder %s250, %s264
      %p266 = scmp.eq.s32.totalorder %s30, 0
      %p267 = por %p265, %p266
      %s269 = sadd.s32 %s268, 1
      %p272 = scmp.eq.s32.totalorder %s24, 1
      %p273 = scmp.ne.s32.totalorder %s268, %s270
      %p274 = scmp.eq.s32.totalorder %s24, 0
      %p275 = por %p273, %p274
      %p276 = scmp.ne.s32.totalorder %s268, %s270
      %p277 = scmp.eq.s32.totalorder %s29, 1
      %p278 = por %p276, %p277
      %p279 = scmp.ne.s32.totalorder %s270, %s271
      %p280 = scmp.eq.s32.totalorder %s29, 0
      %p281 = por %p279, %p280
      %p282 = scmp.ne.s32.totalorder %s270, %s271
      %p283 = scmp.eq.s32.totalorder %s30, 1
      %p284 = por %p282, %p283
      %p286 = scmp.ne.s32.totalorder %s271, %s285
      %p287 = scmp.eq.s32.totalorder %s30, 0
      %p288 = por %p286, %p287
      %s290 = sadd.s32 %s289, 1
      %p293 = scmp.eq.s32.totalorder %s24, 1
      %p294 = scmp.ne.s32.totalorder %s289, %s291
      %p295 = scmp.eq.s32.totalorder %s24, 0
      %p296 = por %p294, %p295
      %p297 = scmp.ne.s32.totalorder %s289, %s291
      %p298 = scmp.eq.s32.totalorder %s29, 1
      %p299 = por %p297, %p298
      %p300 = scmp.ne.s32.totalorder %s291, %s292
      %p301 = scmp.eq.s32.totalorder %s29, 0
      %p302 = por %p300, %p301
      %p303 = scmp.ne.s32.totalorder %s291, %s292
      %p304 = scmp.eq.s32.totalorder %s30, 1
      %p305 = por %p303, %p304
      %p307 = scmp.ne.s32.totalorder %s292, %s306
      %p308 = scmp.eq.s32.totalorder %s30, 0
      %p309 = por %p307, %p308
      %s310 = ssub.s32 %s24, %s31
      %p311 = scmp.eq.s32.totalorder %s310, 0
      %s313 = sadd.s32 %s312, 1
      %s314 = scalar_select %p311, %s312, %s313
      %p317 = pneg %p311
      %p318 = scmp.eq.s32.totalorder %s24, 1
      %p319 = por %p317, %p318
      %p320 = scmp.ne.s32.totalorder %s312, %s315
      %p321 = scmp.eq.s32.totalorder %s24, 0
      %p322 = por %p320, %p321
      %p323 = scmp.ne.s32.totalorder %s312, %s315
      %p324 = scmp.eq.s32.totalorder %s29, 1
      %p325 = por %p323, %p324
      %p326 = scmp.ne.s32.totalorder %s315, %s316
      %p327 = scmp.eq.s32.totalorder %s29, 0
      %p328 = por %p326, %p327
      %p329 = scmp.ne.s32.totalorder %s315, %s316
      %p330 = scmp.eq.s32.totalorder %s30, 1
      %p331 = por %p329, %p330
      %p333 = scmp.ne.s32.totalorder %s316, %s332
      %p334 = scmp.eq.s32.totalorder %s30, 0
      %p335 = por %p333, %p334
      %p336 = scmp.le.s32.totalorder 1, %s24
      %p337 = scmp.lt.s32.totalorder %s24, 3
      %p338 = pnand %p336, %p337
      %p339 = pneg %p338
      // Predicated region
      $region9: #{tpu_custom_call.1} parent=5 // pred_check
        _
      $region10: #{tpu_custom_call.1} parent=5 // pred_check_branch
        %341 = sbr.rel (%p338) target = $region12
      $region11: #{tpu_custom_call.1} parent=5 // pred_region
        %s342 = ssub.s32 %s24, 1
        // Predicated region
        $region13: #{tpu_custom_call.1} parent=11 // pred_check
          %p343 = pneg %p71
        $region14: #{tpu_custom_call.1} parent=11 // pred_check_branch
          %345 = sbr.rel (%p343) target = $region16
        $region15: #{tpu_custom_call.1} parent=11 // pred_region
          _
        $region16: #{tpu_custom_call.1} parent=11 // pred_fallthru
          _
        // Predicated region
        $region17: #{tpu_custom_call.1} parent=11 // pred_check
          %p346 = pneg %p92
        $region18: #{tpu_custom_call.1} parent=11 // pred_check_branch
          %348 = sbr.rel (%p346) target = $region20
        $region19: #{tpu_custom_call.1} parent=11 // pred_region
          _
        $region20: #{tpu_custom_call.1} parent=11 // pred_fallthru
          _
        // Predicated region
        $region21: #{tpu_custom_call.1} parent=11 // pred_check
          %p349 = pneg %p113
        $region22: #{tpu_custom_call.1} parent=11 // pred_check_branch
          %351 = sbr.rel (%p349) target = $region24
        $region23: #{tpu_custom_call.1} parent=11 // pred_region
          %353 = vsyncadd [#allocation3], 0
          %s354 = sshll.u32 %s3, 4
          %s355 = int_to_ptr.hbm [resolvable:$true] %s354
          %s356 = sshll.u32 [#allocation2], 4
          %s357 = int_to_ptr.vmem [resolvable:$true] %s356
          %362 = dma.hbm_to_vmem [thread:$0]  %s355, 256, %s357, [#allocation3], 64, 64, 4
        $region24: #{tpu_custom_call.1} parent=11 // pred_fallthru
          _
        // Predicated region
        $region25: #{tpu_custom_call.1} parent=11 // pred_check
          %p363 = pneg %p134
        $region26: #{tpu_custom_call.1} parent=11 // pred_check_branch
          %365 = sbr.rel (%p363) target = $region28
        $region27: #{tpu_custom_call.1} parent=11 // pred_region
          _
        $region28: #{tpu_custom_call.1} parent=11 // pred_fallthru
          _
        // Predicated region
        $region29: #{tpu_custom_call.1} parent=11 // pred_check
          %p366 = pneg %p155
        $region30: #{tpu_custom_call.1} parent=11 // pred_check_branch
          %368 = sbr.rel (%p366) target = $region32
        $region31: #{tpu_custom_call.1} parent=11 // pred_region
          _
        $region32: #{tpu_custom_call.1} parent=11 // pred_fallthru
          _
        // Predicated region
        $region33: #{tpu_custom_call.1} parent=11 // pred_check
          %p369 = pneg %p176
        $region34: #{tpu_custom_call.1} parent=11 // pred_check_branch
          %371 = sbr.rel (%p369) target = $region36
        $region35: #{tpu_custom_call.1} parent=11 // pred_region
          _
        $region36: #{tpu_custom_call.1} parent=11 // pred_fallthru
          _
        // Predicated region
        $region37: #{tpu_custom_call.1} parent=11 // pred_check
          %p372 = pneg %p197
        $region38: #{tpu_custom_call.1} parent=11 // pred_check_branch
          %374 = sbr.rel (%p372) target = $region40
        $region39: #{tpu_custom_call.1} parent=11 // pred_region
          _
        $region40: #{tpu_custom_call.1} parent=11 // pred_fallthru
          _
        // Predicated region
        $region41: #{tpu_custom_call.1} parent=11 // pred_check
          %p375 = pneg %p218
        $region42: #{tpu_custom_call.1} parent=11 // pred_check_branch
          %377 = sbr.rel (%p375) target = $region44
        $region43: #{tpu_custom_call.1} parent=11 // pred_region
          _
        $region44: #{tpu_custom_call.1} parent=11 // pred_fallthru
          _
        // Predicated region
        $region45: #{tpu_custom_call.1} parent=11 // pred_check
          %p378 = pneg %p239
        $region46: #{tpu_custom_call.1} parent=11 // pred_check_branch
          %380 = sbr.rel (%p378) target = $region48
        $region47: #{tpu_custom_call.1} parent=11 // pred_region
          _
        $region48: #{tpu_custom_call.1} parent=11 // pred_fallthru
          _
        // Predicated region
        $region49: #{tpu_custom_call.1} parent=11 // pred_check
          %p381 = pneg %p260
        $region50: #{tpu_custom_call.1} parent=11 // pred_check_branch
          %383 = sbr.rel (%p381) target = $region52
        $region51: #{tpu_custom_call.1} parent=11 // pred_region
          _
        $region52: #{tpu_custom_call.1} parent=11 // pred_fallthru
          _
        // Predicated region
        $region53: #{tpu_custom_call.1} parent=11 // pred_check
          %p384 = pneg %p281
        $region54: #{tpu_custom_call.1} parent=11 // pred_check_branch
          %386 = sbr.rel (%p384) target = $region56
        $region55: #{tpu_custom_call.1} parent=11 // pred_region
          %388 = vsyncadd [#allocation6], 0
          %s389 = sshll.u32 %s11, 4
          %s390 = int_to_ptr.hbm [resolvable:$true] %s389
          %s391 = sshll.u32 [#allocation5], 4
          %s392 = int_to_ptr.vmem [resolvable:$true] %s391
          %397 = dma.hbm_to_vmem [thread:$0]  %s390, 256, %s392, [#allocation6], 64, 64, 4
        $region56: #{tpu_custom_call.1} parent=11 // pred_fallthru
          _
        // Predicated region
        $region57: #{tpu_custom_call.1} parent=11 // pred_check
          %p398 = pneg %p302
        $region58: #{tpu_custom_call.1} parent=11 // pred_check_branch
          %400 = sbr.rel (%p398) target = $region60
        $region59: #{tpu_custom_call.1} parent=11 // pred_region
          _
        $region60: #{tpu_custom_call.1} parent=11 // pred_fallthru
          _
      $region12: #{tpu_custom_call.1} parent=5 // pred_fallthru
        _
      %p401 = scmp.lt.s32.totalorder %s24, 2
      // Predicated region
      $region61: #{tpu_custom_call.1} parent=5 // pred_check
        %p402 = pneg %p401
      $region62: #{tpu_custom_call.1} parent=5 // pred_check_branch
        %404 = sbr.rel (%p402) target = $region64
      $region63: #{tpu_custom_call.1} parent=5 // pred_region
        // Predicated region
        $region65: #{tpu_custom_call.1} parent=63 // pred_check
          %p405 = pneg %p44
        $region66: #{tpu_custom_call.1} parent=63 // pred_check_branch
          %407 = sbr.rel (%p405) target = $region68
        $region67: #{tpu_custom_call.1} parent=63 // pred_region
          %s408 = smul.u32 4, %s24
          %p409 = scmp.lt.s32.totalorder %s408, 7
          %s410 = scalar_select %p409, %s408, 7
          %s411 = smul.addr %s410, 4
          %s412 = smul.addr %s411, 4
          %s413 = scalar_lea.vmem %s0, %s412
          %s414 = smul.u32 4, %s24
        $region68: #{tpu_custom_call.1} parent=63 // pred_fallthru
          _
      $region64: #{tpu_custom_call.1} parent=5 // pred_fallthru
        _
      %p415 = scmp.le.s32.totalorder 1, %s24
      %p416 = scmp.lt.s32.totalorder %s24, 3
      %p417 = pnand %p415, %p416
      %p418 = pneg %p417
      // Predicated region
      $region69: #{tpu_custom_call.1} parent=5 // pred_check
        _
      $region70: #{tpu_custom_call.1} parent=5 // pred_check_branch
        %420 = sbr.rel (%p417) target = $region72
      $region71: #{tpu_custom_call.1} parent=5 // pred_region
        %s421 = ssub.s32 %s24, 1
        // Predicated region
        $region73: #{tpu_custom_call.1} parent=71 // pred_check
          %p422 = pneg %p113
        $region74: #{tpu_custom_call.1} parent=71 // pred_check_branch
          %424 = sbr.rel (%p422) target = $region76
        $region75: #{tpu_custom_call.1} parent=71 // pred_region
          %426 = dma.done [#allocation3], 256
        $region76: #{tpu_custom_call.1} parent=71 // pred_fallthru
          _
        // Predicated region
        $region77: #{tpu_custom_call.1} parent=71 // pred_check
          %p427 = pneg %p281
        $region78: #{tpu_custom_call.1} parent=71 // pred_check_branch
          %429 = sbr.rel (%p427) target = $region80
        $region79: #{tpu_custom_call.1} parent=71 // pred_region
          %431 = dma.done [#allocation6], 256
        $region80: #{tpu_custom_call.1} parent=71 // pred_fallthru
          _
        %s432 = smul.u32 4, %s29
        %p433 = scmp.lt.s32.totalorder %s432, 7
        %s434 = scalar_select %p433, %s432, 7
        %s435 = smul.addr %s434, 4
        %s436 = smul.addr %s435, 4
        %s437 = scalar_lea.vmem %s0, %s436
        %p438 = pneg %p50
        %p439 = pneg %p47
        %p440 = pneg %p71
        %p441 = pneg %p68
        %p442 = pneg %p92
        %p443 = pneg %p89
        %p444 = pneg %p113
        %p445 = pneg %p110
        %p446 = pneg %p134
        %p447 = pneg %p131
        %p448 = pneg %p155
        %p449 = pneg %p152
        %p450 = pneg %p176
        %p451 = pneg %p173
        %p452 = pneg %p197
        %p453 = pneg %p194
        %p454 = pneg %p218
        %p455 = pneg %p215
        %p456 = pneg %p239
        %p457 = pneg %p236
        %p458 = pneg %p260
        %p459 = pneg %p257
        %p460 = pneg %p281
        %p461 = pneg %p278
        %p462 = pneg %p302
        %p463 = pneg %p299
        %p464 = pneg %p328
        %p465 = pneg %p325
        %s466 = sand.u32 %s315, 1
        %s467 = scalar_lea.sflag [#allocation4], %s466
        %s468 = sand.u32 %s315, 1
        %s469 = smul.addr %s468, 128
        %s470 = scalar_lea.vmem [#allocation7], %s469
        %s471 = smul.u32 4, %s29
        %p472 = scmp.lt.s32.totalorder %s471, 7
        %s473 = scalar_select %p472, %s471, 7
        %s474 = smul.addr %s473, 4
        %s475 = smul.addr %s474, 4
        %s476 = scalar_lea.vmem %s0, %s475
        %s477 = smul.u32 4, %s29
        %s478 = smul.u32 4, %s29
        %v480 = vld [vmem:[%s476] sm:$0xf]
        %v481 = vld [vmem:[%s476 + $0x4] sm:$0xf]
        %v482 = vld [vmem:[%s476 + $0x8] sm:$0xf]
        %v483 = vld [vmem:[%s476 + $0xc] sm:$0xf]
        %v484 = vld [vmem:[%s476 + $0x10] sm:$0xf]
        %v485 = vld [vmem:[%s476 + $0x14] sm:$0xf]
        %v486 = vld [vmem:[%s476 + $0x18] sm:$0xf]
        %v487 = vld [vmem:[%s476 + $0x1c] sm:$0xf]
        %v488 = vld [vmem:[%s476 + $0x20] sm:$0xf]
        %v489 = vld [vmem:[%s476 + $0x24] sm:$0xf]
        %v490 = vld [vmem:[%s476 + $0x28] sm:$0xf]
        %v491 = vld [vmem:[%s476 + $0x2c] sm:$0xf]
        %v492 = vld [vmem:[%s476 + $0x30] sm:$0xf]
        %v493 = vld [vmem:[%s476 + $0x34] sm:$0xf]
        %v494 = vld [vmem:[%s476 + $0x38] sm:$0xf]
        %v495 = vld [vmem:[%s476 + $0x3c] sm:$0xf]
        %v496 = vunpack.c.l.bf16 %v480
        %v497 = vunpack.c.l.bf16 %v481
        %v498 = vunpack.c.l.bf16 %v482
        %v499 = vunpack.c.l.bf16 %v483
        %v500 = vunpack.c.l.bf16 %v484
        %v501 = vunpack.c.l.bf16 %v485
        %v502 = vunpack.c.l.bf16 %v486
        %v503 = vunpack.c.l.bf16 %v487
        %v504 = vunpack.c.l.bf16 %v488
        %v505 = vunpack.c.l.bf16 %v489
        %v506 = vunpack.c.l.bf16 %v490
        %v507 = vunpack.c.l.bf16 %v491
        %v508 = vunpack.c.l.bf16 %v492
        %v509 = vunpack.c.l.bf16 %v493
        %v510 = vunpack.c.l.bf16 %v494
        %v511 = vunpack.c.l.bf16 %v495
        %512 = vadd.xlane.f32.xlu0 %v496
        %v513 = vpop.xlane.xlu0 %512
        %514 = vadd.xlane.f32.xlu0 %v497
        %v515 = vpop.xlane.xlu0 %514
        %516 = vadd.xlane.f32.xlu0 %v498
        %v517 = vpop.xlane.xlu0 %516
        %518 = vadd.xlane.f32.xlu0 %v499
        %v519 = vpop.xlane.xlu0 %518
        %520 = vadd.xlane.f32.xlu0 %v500
        %v521 = vpop.xlane.xlu0 %520
        %522 = vadd.xlane.f32.xlu0 %v501
        %v523 = vpop.xlane.xlu0 %522
        %524 = vadd.xlane.f32.xlu0 %v502
        %v525 = vpop.xlane.xlu0 %524
        %526 = vadd.xlane.f32.xlu0 %v503
        %v527 = vpop.xlane.xlu0 %526
        %528 = vadd.xlane.f32.xlu0 %v504
        %v529 = vpop.xlane.xlu0 %528
        %530 = vadd.xlane.f32.xlu0 %v505
        %v531 = vpop.xlane.xlu0 %530
        %532 = vadd.xlane.f32.xlu0 %v506
        %v533 = vpop.xlane.xlu0 %532
        %534 = vadd.xlane.f32.xlu0 %v507
        %v535 = vpop.xlane.xlu0 %534
        %536 = vadd.xlane.f32.xlu0 %v508
        %v537 = vpop.xlane.xlu0 %536
        %538 = vadd.xlane.f32.xlu0 %v509
        %v539 = vpop.xlane.xlu0 %538
        %540 = vadd.xlane.f32.xlu0 %v510
        %v541 = vpop.xlane.xlu0 %540
        %542 = vadd.xlane.f32.xlu0 %v511
        %v543 = vpop.xlane.xlu0 %542
        %v544 = vmul.f32 %v513, 0.010416667
        %v545 = vmul.f32 %v515, 0.010416667
        %v546 = vmul.f32 %v517, 0.010416667
        %v547 = vmul.f32 %v519, 0.010416667
        %v548 = vmul.f32 %v521, 0.010416667
        %v549 = vmul.f32 %v523, 0.010416667
        %v550 = vmul.f32 %v525, 0.010416667
        %v551 = vmul.f32 %v527, 0.010416667
        %v552 = vmul.f32 %v529, 0.010416667
        %v553 = vmul.f32 %v531, 0.010416667
        %v554 = vmul.f32 %v533, 0.010416667
        %v555 = vmul.f32 %v535, 0.010416667
        %v556 = vmul.f32 %v537, 0.010416667
        %v557 = vmul.f32 %v539, 0.010416667
        %v558 = vmul.f32 %v541, 0.010416667
        %v559 = vmul.f32 %v543, 0.010416667
        %v560 = vmul.f32 %v496, %v496
        %v561 = vmul.f32 %v497, %v497
        %v562 = vmul.f32 %v498, %v498
        %v563 = vmul.f32 %v499, %v499
        %v564 = vmul.f32 %v500, %v500
        %v565 = vmul.f32 %v501, %v501
        %v566 = vmul.f32 %v502, %v502
        %v567 = vmul.f32 %v503, %v503
        %v568 = vmul.f32 %v504, %v504
        %v569 = vmul.f32 %v505, %v505
        %v570 = vmul.f32 %v506, %v506
        %v571 = vmul.f32 %v507, %v507
        %v572 = vmul.f32 %v508, %v508
        %v573 = vmul.f32 %v509, %v509
        %v574 = vmul.f32 %v510, %v510
        %v575 = vmul.f32 %v511, %v511
        %576 = vadd.xlane.f32.xlu0 %v560
        %v577 = vpop.xlane.xlu0 %576
        %578 = vadd.xlane.f32.xlu0 %v561
        %v579 = vpop.xlane.xlu0 %578
        %580 = vadd.xlane.f32.xlu0 %v562
        %v581 = vpop.xlane.xlu0 %580
        %582 = vadd.xlane.f32.xlu0 %v563
        %v583 = vpop.xlane.xlu0 %582
        %584 = vadd.xlane.f32.xlu0 %v564
        %v585 = vpop.xlane.xlu0 %584
        %586 = vadd.xlane.f32.xlu0 %v565
        %v587 = vpop.xlane.xlu0 %586
        %588 = vadd.xlane.f32.xlu0 %v566
        %v589 = vpop.xlane.xlu0 %588
        %590 = vadd.xlane.f32.xlu0 %v567
        %v591 = vpop.xlane.xlu0 %590
        %592 = vadd.xlane.f32.xlu0 %v568
        %v593 = vpop.xlane.xlu0 %592
        %594 = vadd.xlane.f32.xlu0 %v569
        %v595 = vpop.xlane.xlu0 %594
        %596 = vadd.xlane.f32.xlu0 %v570
        %v597 = vpop.xlane.xlu0 %596
        %598 = vadd.xlane.f32.xlu0 %v571
        %v599 = vpop.xlane.xlu0 %598
        %600 = vadd.xlane.f32.xlu0 %v572
        %v601 = vpop.xlane.xlu0 %600
        %602 = vadd.xlane.f32.xlu0 %v573
        %v603 = vpop.xlane.xlu0 %602
        %604 = vadd.xlane.f32.xlu0 %v574
        %v605 = vpop.xlane.xlu0 %604
        %606 = vadd.xlane.f32.xlu0 %v575
        %v607 = vpop.xlane.xlu0 %606
        %v608 = vmul.f32 %v577, 0.010416667
        %v609 = vmul.f32 %v579, 0.010416667
        %v610 = vmul.f32 %v581, 0.010416667
        %v611 = vmul.f32 %v583, 0.010416667
        %v612 = vmul.f32 %v585, 0.010416667
        %v613 = vmul.f32 %v587, 0.010416667
        %v614 = vmul.f32 %v589, 0.010416667
        %v615 = vmul.f32 %v591, 0.010416667
        %v616 = vmul.f32 %v593, 0.010416667
        %v617 = vmul.f32 %v595, 0.010416667
        %v618 = vmul.f32 %v597, 0.010416667
        %v619 = vmul.f32 %v599, 0.010416667
        %v620 = vmul.f32 %v601, 0.010416667
        %v621 = vmul.f32 %v603, 0.010416667
        %v622 = vmul.f32 %v605, 0.010416667
        %v623 = vmul.f32 %v607, 0.010416667
        %v624 = vmul.f32 %v544, %v544
        %v625 = vmul.f32 %v545, %v545
        %v626 = vmul.f32 %v546, %v546
        %v627 = vmul.f32 %v547, %v547
        %v628 = vmul.f32 %v548, %v548
        %v629 = vmul.f32 %v549, %v549
        %v630 = vmul.f32 %v550, %v550
        %v631 = vmul.f32 %v551, %v551
        %v632 = vmul.f32 %v552, %v552
        %v633 = vmul.f32 %v553, %v553
        %v634 = vmul.f32 %v554, %v554
        %v635 = vmul.f32 %v555, %v555
        %v636 = vmul.f32 %v556, %v556
        %v637 = vmul.f32 %v557, %v557
        %v638 = vmul.f32 %v558, %v558
        %v639 = vmul.f32 %v559, %v559
        %v640 = vsub.f32 %v608, %v624
        %v641 = vsub.f32 %v609, %v625
        %v642 = vsub.f32 %v610, %v626
        %v643 = vsub.f32 %v611, %v627
        %v644 = vsub.f32 %v612, %v628
        %v645 = vsub.f32 %v613, %v629
        %v646 = vsub.f32 %v614, %v630
        %v647 = vsub.f32 %v615, %v631
        %v648 = vsub.f32 %v616, %v632
        %v649 = vsub.f32 %v617, %v633
        %v650 = vsub.f32 %v618, %v634
        %v651 = vsub.f32 %v619, %v635
        %v652 = vsub.f32 %v620, %v636
        %v653 = vsub.f32 %v621, %v637
        %v654 = vsub.f32 %v622, %v638
        %v655 = vsub.f32 %v623, %v639
        %v656 = vmax.f32 %v640, 0.0
        %v657 = vmax.f32 %v641, 0.0
        %v658 = vmax.f32 %v642, 0.0
        %v659 = vmax.f32 %v643, 0.0
        %v660 = vmax.f32 %v644, 0.0
        %v661 = vmax.f32 %v645, 0.0
        %v662 = vmax.f32 %v646, 0.0
        %v663 = vmax.f32 %v647, 0.0
        %v664 = vmax.f32 %v648, 0.0
        %v665 = vmax.f32 %v649, 0.0
        %v666 = vmax.f32 %v650, 0.0
        %v667 = vmax.f32 %v651, 0.0
        %v668 = vmax.f32 %v652, 0.0
        %v669 = vmax.f32 %v653, 0.0
        %v670 = vmax.f32 %v654, 0.0
        %v671 = vmax.f32 %v655, 0.0
        %v672 = vadd.f32 %v656, 0.001
        %v673 = vadd.f32 %v657, 0.001
        %v674 = vadd.f32 %v658, 0.001
        %v675 = vadd.f32 %v659, 0.001
        %v676 = vadd.f32 %v660, 0.001
        %v677 = vadd.f32 %v661, 0.001
        %v678 = vadd.f32 %v662, 0.001
        %v679 = vadd.f32 %v663, 0.001
        %v680 = vadd.f32 %v664, 0.001
        %v681 = vadd.f32 %v665, 0.001
        %v682 = vadd.f32 %v666, 0.001
        %v683 = vadd.f32 %v667, 0.001
        %v684 = vadd.f32 %v668, 0.001
        %v685 = vadd.f32 %v669, 0.001
        %v686 = vadd.f32 %v670, 0.001
        %v687 = vadd.f32 %v671, 0.001
        %v688 = vrsqrt.pop %v672
        %v689 = vmul.f32 %v688, %v672
        %v690 = vmul.f32 %v689, %v688
        %v691 = vmul.f32 0.5, %v690
        %v692 = vsub.f32 1.5, %v691
        %v693 = vmul.f32 %v688, %v692
        %vm694 = vweird.f32 %v672
        %vm695 = vweird.f32 %v688
        %vm696 = vmor %vm694, %vm695
        %v697 = vsel %vm696, %v688, %v693
        %v698 = vrsqrt.pop %v673
        %v699 = vmul.f32 %v698, %v673
        %v700 = vmul.f32 %v699, %v698
        %v701 = vmul.f32 0.5, %v700
        %v702 = vsub.f32 1.5, %v701
        %v703 = vmul.f32 %v698, %v702
        %vm704 = vweird.f32 %v673
        %vm705 = vweird.f32 %v698
        %vm706 = vmor %vm704, %vm705
        %v707 = vsel %vm706, %v698, %v703
        %v708 = vrsqrt.pop %v674
        %v709 = vmul.f32 %v708, %v674
        %v710 = vmul.f32 %v709, %v708
        %v711 = vmul.f32 0.5, %v710
        %v712 = vsub.f32 1.5, %v711
        %v713 = vmul.f32 %v708, %v712
        %vm714 = vweird.f32 %v674
        %vm715 = vweird.f32 %v708
        %vm716 = vmor %vm714, %vm715
        %v717 = vsel %vm716, %v708, %v713
        %v718 = vrsqrt.pop %v675
        %v719 = vmul.f32 %v718, %v675
        %v720 = vmul.f32 %v719, %v718
        %v721 = vmul.f32 0.5, %v720
        %v722 = vsub.f32 1.5, %v721
        %v723 = vmul.f32 %v718, %v722
        %vm724 = vweird.f32 %v675
        %vm725 = vweird.f32 %v718
        %vm726 = vmor %vm724, %vm725
        %v727 = vsel %vm726, %v718, %v723
        %v728 = vrsqrt.pop %v676
        %v729 = vmul.f32 %v728, %v676
        %v730 = vmul.f32 %v729, %v728
        %v731 = vmul.f32 0.5, %v730
        %v732 = vsub.f32 1.5, %v731
        %v733 = vmul.f32 %v728, %v732
        %vm734 = vweird.f32 %v676
        %vm735 = vweird.f32 %v728
        %vm736 = vmor %vm734, %vm735
        %v737 = vsel %vm736, %v728, %v733
        %v738 = vrsqrt.pop %v677
        %v739 = vmul.f32 %v738, %v677
        %v740 = vmul.f32 %v739, %v738
        %v741 = vmul.f32 0.5, %v740
        %v742 = vsub.f32 1.5, %v741
        %v743 = vmul.f32 %v738, %v742
        %vm744 = vweird.f32 %v677
        %vm745 = vweird.f32 %v738
        %vm746 = vmor %vm744, %vm745
        %v747 = vsel %vm746, %v738, %v743
        %v748 = vrsqrt.pop %v678
        %v749 = vmul.f32 %v748, %v678
        %v750 = vmul.f32 %v749, %v748
        %v751 = vmul.f32 0.5, %v750
        %v752 = vsub.f32 1.5, %v751
        %v753 = vmul.f32 %v748, %v752
        %vm754 = vweird.f32 %v678
        %vm755 = vweird.f32 %v748
        %vm756 = vmor %vm754, %vm755
        %v757 = vsel %vm756, %v748, %v753
        %v758 = vrsqrt.pop %v679
        %v759 = vmul.f32 %v758, %v679
        %v760 = vmul.f32 %v759, %v758
        %v761 = vmul.f32 0.5, %v760
        %v762 = vsub.f32 1.5, %v761
        %v763 = vmul.f32 %v758, %v762
        %vm764 = vweird.f32 %v679
        %vm765 = vweird.f32 %v758
        %vm766 = vmor %vm764, %vm765
        %v767 = vsel %vm766, %v758, %v763
        %v768 = vrsqrt.pop %v680
        %v769 = vmul.f32 %v768, %v680
        %v770 = vmul.f32 %v769, %v768
        %v771 = vmul.f32 0.5, %v770
        %v772 = vsub.f32 1.5, %v771
        %v773 = vmul.f32 %v768, %v772
        %vm774 = vweird.f32 %v680
        %vm775 = vweird.f32 %v768
        %vm776 = vmor %vm774, %vm775
        %v777 = vsel %vm776, %v768, %v773
        %v778 = vrsqrt.pop %v681
        %v779 = vmul.f32 %v778, %v681
        %v780 = vmul.f32 %v779, %v778
        %v781 = vmul.f32 0.5, %v780
        %v782 = vsub.f32 1.5, %v781
        %v783 = vmul.f32 %v778, %v782
        %vm784 = vweird.f32 %v681
        %vm785 = vweird.f32 %v778
        %vm786 = vmor %vm784, %vm785
        %v787 = vsel %vm786, %v778, %v783
        %v788 = vrsqrt.pop %v682
        %v789 = vmul.f32 %v788, %v682
        %v790 = vmul.f32 %v789, %v788
        %v791 = vmul.f32 0.5, %v790
        %v792 = vsub.f32 1.5, %v791
        %v793 = vmul.f32 %v788, %v792
        %vm794 = vweird.f32 %v682
        %vm795 = vweird.f32 %v788
        %vm796 = vmor %vm794, %vm795
        %v797 = vsel %vm796, %v788, %v793
        %v798 = vrsqrt.pop %v683
        %v799 = vmul.f32 %v798, %v683
        %v800 = vmul.f32 %v799, %v798
        %v801 = vmul.f32 0.5, %v800
        %v802 = vsub.f32 1.5, %v801
        %v803 = vmul.f32 %v798, %v802
        %vm804 = vweird.f32 %v683
        %vm805 = vweird.f32 %v798
        %vm806 = vmor %vm804, %vm805
        %v807 = vsel %vm806, %v798, %v803
        %v808 = vrsqrt.pop %v684
        %v809 = vmul.f32 %v808, %v684
        %v810 = vmul.f32 %v809, %v808
        %v811 = vmul.f32 0.5, %v810
        %v812 = vsub.f32 1.5, %v811
        %v813 = vmul.f32 %v808, %v812
        %vm814 = vweird.f32 %v684
        %vm815 = vweird.f32 %v808
        %vm816 = vmor %vm814, %vm815
        %v817 = vsel %vm816, %v808, %v813
        %v818 = vrsqrt.pop %v685
        %v819 = vmul.f32 %v818, %v685
        %v820 = vmul.f32 %v819, %v818
        %v821 = vmul.f32 0.5, %v820
        %v822 = vsub.f32 1.5, %v821
        %v823 = vmul.f32 %v818, %v822
        %vm824 = vweird.f32 %v685
        %vm825 = vweird.f32 %v818
        %vm826 = vmor %vm824, %vm825
        %v827 = vsel %vm826, %v818, %v823
        %v828 = vrsqrt.pop %v686
        %v829 = vmul.f32 %v828, %v686
        %v830 = vmul.f32 %v829, %v828
        %v831 = vmul.f32 0.5, %v830
        %v832 = vsub.f32 1.5, %v831
        %v833 = vmul.f32 %v828, %v832
        %vm834 = vweird.f32 %v686
        %vm835 = vweird.f32 %v828
        %vm836 = vmor %vm834, %vm835
        %v837 = vsel %vm836, %v828, %v833
        %v838 = vrsqrt.pop %v687
        %v839 = vmul.f32 %v838, %v687
        %v840 = vmul.f32 %v839, %v838
        %v841 = vmul.f32 0.5, %v840
        %v842 = vsub.f32 1.5, %v841
        %v843 = vmul.f32 %v838, %v842
        %vm844 = vweird.f32 %v687
        %vm845 = vweird.f32 %v838
        %vm846 = vmor %vm844, %vm845
        %v847 = vsel %vm846, %v838, %v843
        %v848 = vld [vmem:[%s1] sm:$0xff]
        %v849 = vld [vmem:[%s1 + $0x8] sm:$0xff]
        %v850 = vld [vmem:[%s1 + $0x10] sm:$0xff]
        %v851 = vld [vmem:[%s1 + $0x18] sm:$0xff]
        %v852 = vmul.f32 %v697, %v848
        %v853 = vmul.f32 %v707, %v849
        %v854 = vmul.f32 %v717, %v850
        %v855 = vmul.f32 %v727, %v851
        %v856 = vmul.f32 %v737, %v848
        %v857 = vmul.f32 %v747, %v849
        %v858 = vmul.f32 %v757, %v850
        %v859 = vmul.f32 %v767, %v851
        %v860 = vmul.f32 %v777, %v848
        %v861 = vmul.f32 %v787, %v849
        %v862 = vmul.f32 %v797, %v850
        %v863 = vmul.f32 %v807, %v851
        %v864 = vmul.f32 %v817, %v848
        %v865 = vmul.f32 %v827, %v849
        %v866 = vmul.f32 %v837, %v850
        %v867 = vmul.f32 %v847, %v851
        %v868 = vld [vmem:[%s2] sm:$0xff]
        %v869 = vld [vmem:[%s2 + $0x8] sm:$0xff]
        %v870 = vld [vmem:[%s2 + $0x10] sm:$0xff]
        %v871 = vld [vmem:[%s2 + $0x18] sm:$0xff]
        %v872 = vmul.f32 %v544, %v852
        %v873 = vmul.f32 %v545, %v853
        %v874 = vmul.f32 %v546, %v854
        %v875 = vmul.f32 %v547, %v855
        %v876 = vmul.f32 %v548, %v856
        %v877 = vmul.f32 %v549, %v857
        %v878 = vmul.f32 %v550, %v858
        %v879 = vmul.f32 %v551, %v859
        %v880 = vmul.f32 %v552, %v860
        %v881 = vmul.f32 %v553, %v861
        %v882 = vmul.f32 %v554, %v862
        %v883 = vmul.f32 %v555, %v863
        %v884 = vmul.f32 %v556, %v864
        %v885 = vmul.f32 %v557, %v865
        %v886 = vmul.f32 %v558, %v866
        %v887 = vmul.f32 %v559, %v867
        %v888 = vsub.f32 %v868, %v872
        %v889 = vsub.f32 %v869, %v873
        %v890 = vsub.f32 %v870, %v874
        %v891 = vsub.f32 %v871, %v875
        %v892 = vsub.f32 %v868, %v876
        %v893 = vsub.f32 %v869, %v877
        %v894 = vsub.f32 %v870, %v878
        %v895 = vsub.f32 %v871, %v879
        %v896 = vsub.f32 %v868, %v880
        %v897 = vsub.f32 %v869, %v881
        %v898 = vsub.f32 %v870, %v882
        %v899 = vsub.f32 %v871, %v883
        %v900 = vsub.f32 %v868, %v884
        %v901 = vsub.f32 %v869, %v885
        %v902 = vsub.f32 %v870, %v886
        %v903 = vsub.f32 %v871, %v887
        %905 = vset.pattern.permute.xlu0 0
        %906 = vperm.xlu0 %905, %v852
        %v907 = vpop.permute.xlu0 %906
        %910 = vset.pattern.permute.xlu0 0
        %911 = vperm.xlu0 %910, %v853
        %v912 = vpop.permute.xlu0 %911
        %915 = vset.pattern.permute.xlu0 0
        %916 = vperm.xlu0 %915, %v854
        %v917 = vpop.permute.xlu0 %916
        %920 = vset.pattern.permute.xlu0 0
        %921 = vperm.xlu0 %920, %v855
        %v922 = vpop.permute.xlu0 %921
        %925 = vset.pattern.permute.xlu0 0
        %926 = vperm.xlu0 %925, %v856
        %v927 = vpop.permute.xlu0 %926
        %930 = vset.pattern.permute.xlu0 0
        %931 = vperm.xlu0 %930, %v857
        %v932 = vpop.permute.xlu0 %931
        %935 = vset.pattern.permute.xlu0 0
        %936 = vperm.xlu0 %935, %v858
        %v937 = vpop.permute.xlu0 %936
        %940 = vset.pattern.permute.xlu0 0
        %941 = vperm.xlu0 %940, %v859
        %v942 = vpop.permute.xlu0 %941
        %945 = vset.pattern.permute.xlu0 0
        %946 = vperm.xlu0 %945, %v860
        %v947 = vpop.permute.xlu0 %946
        %950 = vset.pattern.permute.xlu0 0
        %951 = vperm.xlu0 %950, %v861
        %v952 = vpop.permute.xlu0 %951
        %955 = vset.pattern.permute.xlu0 0
        %956 = vperm.xlu0 %955, %v862
        %v957 = vpop.permute.xlu0 %956
        %960 = vset.pattern.permute.xlu0 0
        %961 = vperm.xlu0 %960, %v863
        %v962 = vpop.permute.xlu0 %961
        %965 = vset.pattern.permute.xlu0 0
        %966 = vperm.xlu0 %965, %v864
        %v967 = vpop.permute.xlu0 %966
        %970 = vset.pattern.permute.xlu0 0
        %971 = vperm.xlu0 %970, %v865
        %v972 = vpop.permute.xlu0 %971
        %975 = vset.pattern.permute.xlu0 0
        %976 = vperm.xlu0 %975, %v866
        %v977 = vpop.permute.xlu0 %976
        %980 = vset.pattern.permute.xlu0 0
        %981 = vperm.xlu0 %980, %v867
        %v982 = vpop.permute.xlu0 %981
        %v984 = vmul.f32 %v496, %v907
        %v985 = vmul.f32 %v497, %v912
        %v986 = vmul.f32 %v498, %v917
        %v987 = vmul.f32 %v499, %v922
        %v988 = vmul.f32 %v500, %v927
        %v989 = vmul.f32 %v501, %v932
        %v990 = vmul.f32 %v502, %v937
        %v991 = vmul.f32 %v503, %v942
        %v992 = vmul.f32 %v504, %v947
        %v993 = vmul.f32 %v505, %v952
        %v994 = vmul.f32 %v506, %v957
        %v995 = vmul.f32 %v507, %v962
        %v996 = vmul.f32 %v508, %v967
        %v997 = vmul.f32 %v509, %v972
        %v998 = vmul.f32 %v510, %v977
        %v999 = vmul.f32 %v511, %v982
        %1001 = vset.pattern.permute.xlu0 0
        %1002 = vperm.xlu0 %1001, %v888
        %v1003 = vpop.permute.xlu0 %1002
        %1006 = vset.pattern.permute.xlu0 0
        %1007 = vperm.xlu0 %1006, %v889
        %v1008 = vpop.permute.xlu0 %1007
        %1011 = vset.pattern.permute.xlu0 0
        %1012 = vperm.xlu0 %1011, %v890
        %v1013 = vpop.permute.xlu0 %1012
        %1016 = vset.pattern.permute.xlu0 0
        %1017 = vperm.xlu0 %1016, %v891
        %v1018 = vpop.permute.xlu0 %1017
        %1021 = vset.pattern.permute.xlu0 0
        %1022 = vperm.xlu0 %1021, %v892
        %v1023 = vpop.permute.xlu0 %1022
        %1026 = vset.pattern.permute.xlu0 0
        %1027 = vperm.xlu0 %1026, %v893
        %v1028 = vpop.permute.xlu0 %1027
        %1031 = vset.pattern.permute.xlu0 0
        %1032 = vperm.xlu0 %1031, %v894
        %v1033 = vpop.permute.xlu0 %1032
        %1036 = vset.pattern.permute.xlu0 0
        %1037 = vperm.xlu0 %1036, %v895
        %v1038 = vpop.permute.xlu0 %1037
        %1041 = vset.pattern.permute.xlu0 0
        %1042 = vperm.xlu0 %1041, %v896
        %v1043 = vpop.permute.xlu0 %1042
        %1046 = vset.pattern.permute.xlu0 0
        %1047 = vperm.xlu0 %1046, %v897
        %v1048 = vpop.permute.xlu0 %1047
        %1051 = vset.pattern.permute.xlu0 0
        %1052 = vperm.xlu0 %1051, %v898
        %v1053 = vpop.permute.xlu0 %1052
        %1056 = vset.pattern.permute.xlu0 0
        %1057 = vperm.xlu0 %1056, %v899
        %v1058 = vpop.permute.xlu0 %1057
        %1061 = vset.pattern.permute.xlu0 0
        %1062 = vperm.xlu0 %1061, %v900
        %v1063 = vpop.permute.xlu0 %1062
        %1066 = vset.pattern.permute.xlu0 0
        %1067 = vperm.xlu0 %1066, %v901
        %v1068 = vpop.permute.xlu0 %1067
        %1071 = vset.pattern.permute.xlu0 0
        %1072 = vperm.xlu0 %1071, %v902
        %v1073 = vpop.permute.xlu0 %1072
        %1076 = vset.pattern.permute.xlu0 0
        %1077 = vperm.xlu0 %1076, %v903
        %v1078 = vpop.permute.xlu0 %1077
        %v1080 = vadd.f32 %v984, %v1003
        %v1081 = vadd.f32 %v985, %v1008
        %v1082 = vadd.f32 %v986, %v1013
        %v1083 = vadd.f32 %v987, %v1018
        %v1084 = vadd.f32 %v988, %v1023
        %v1085 = vadd.f32 %v989, %v1028
        %v1086 = vadd.f32 %v990, %v1033
        %v1087 = vadd.f32 %v991, %v1038
        %v1088 = vadd.f32 %v992, %v1043
        %v1089 = vadd.f32 %v993, %v1048
        %v1090 = vadd.f32 %v994, %v1053
        %v1091 = vadd.f32 %v995, %v1058
        %v1092 = vadd.f32 %v996, %v1063
        %v1093 = vadd.f32 %v997, %v1068
        %v1094 = vadd.f32 %v998, %v1073
        %v1095 = vadd.f32 %v999, %v1078
        %v1096 = vmax.f32 %v1080, 0.0
        %v1097 = vmax.f32 %v1081, 0.0
        %v1098 = vmax.f32 %v1082, 0.0
        %v1099 = vmax.f32 %v1083, 0.0
        %v1100 = vmax.f32 %v1084, 0.0
        %v1101 = vmax.f32 %v1085, 0.0
        %v1102 = vmax.f32 %v1086, 0.0
        %v1103 = vmax.f32 %v1087, 0.0
        %v1104 = vmax.f32 %v1088, 0.0
        %v1105 = vmax.f32 %v1089, 0.0
        %v1106 = vmax.f32 %v1090, 0.0
        %v1107 = vmax.f32 %v1091, 0.0
        %v1108 = vmax.f32 %v1092, 0.0
        %v1109 = vmax.f32 %v1093, 0.0
        %v1110 = vmax.f32 %v1094, 0.0
        %v1111 = vmax.f32 %v1095, 0.0
        %v1112 = vpack.c.bf16 %v1096, %v1096
        %v1113 = vpack.c.bf16 %v1097, %v1097
        %v1114 = vpack.c.bf16 %v1098, %v1098
        %v1115 = vpack.c.bf16 %v1099, %v1099
        %v1116 = vpack.c.bf16 %v1100, %v1100
        %v1117 = vpack.c.bf16 %v1101, %v1101
        %v1118 = vpack.c.bf16 %v1102, %v1102
        %v1119 = vpack.c.bf16 %v1103, %v1103
        %v1120 = vpack.c.bf16 %v1104, %v1104
        %v1121 = vpack.c.bf16 %v1105, %v1105
        %v1122 = vpack.c.bf16 %v1106, %v1106
        %v1123 = vpack.c.bf16 %v1107, %v1107
        %v1124 = vpack.c.bf16 %v1108, %v1108
        %v1125 = vpack.c.bf16 %v1109, %v1109
        %v1126 = vpack.c.bf16 %v1110, %v1110
        %v1127 = vpack.c.bf16 %v1111, %v1111
        %v1128 = vld [vmem:[#allocation2] sm:$0xf]
        %v1129 = vld [vmem:[#allocation2 + $0x4] sm:$0xf]
        %v1130 = vld [vmem:[#allocation2 + $0x8] sm:$0xf]
        %v1131 = vld [vmem:[#allocation2 + $0xc] sm:$0xf]
        %v1132 = vld [vmem:[%s4] sm:$0xff]
        %v1133 = vld [vmem:[%s4 + $0x8] sm:$0xff]
        %v1134 = vld [vmem:[%s4 + $0x10] sm:$0xff]
        %v1135 = vld [vmem:[%s4 + $0x18] sm:$0xff]
        %1137 = vset.pattern.permute.xlu0 0
        %1138 = vperm.xlu0 %1137, %v1132
        %v1139 = vpop.permute.xlu0 %1138
        %1142 = vset.pattern.permute.xlu0 0
        %1143 = vperm.xlu0 %1142, %v1133
        %v1144 = vpop.permute.xlu0 %1143
        %1147 = vset.pattern.permute.xlu0 0
        %1148 = vperm.xlu0 %1147, %v1134
        %v1149 = vpop.permute.xlu0 %1148
        %1152 = vset.pattern.permute.xlu0 0
        %1153 = vperm.xlu0 %1152, %v1135
        %v1154 = vpop.permute.xlu0 %1153
        %v1160 = vunpack.c.l.b16 %v1128
        %v1161 = vunpack.c.l.b16 %v1129
        %v1162 = vunpack.c.l.b16 %v1130
        %v1163 = vunpack.c.l.b16 %v1131
        %v1164 = vpack.c.b16 %v1161, %v1160
        %v1165 = vpack.c.b16 %v1163, %v1162
        %v1170 = vunpack.c.l.b16 %v1112
        %v1171 = vunpack.c.l.b16 %v1113
        %v1172 = vunpack.c.l.b16 %v1114
        %v1173 = vunpack.c.l.b16 %v1115
        %v1174 = vpack.c.b16 %v1171, %v1170
        %v1175 = vpack.c.b16 %v1173, %v1172
        %vm1178 = vcmask 261120
        %v1180 = vsel %vm1178, %v1164, 0
        %v1183 = vsel %vm1178, %v1165, 0
        %1185 = vmatpush.bf16.msra.mxu0 0
        %1186 = vmatpush.bf16.msra.mxu0 0
        %1187 = vmatpush.bf16.msra.mxu0 0
        %1188 = vmatpush.bf16.msra.mxu0 0
        %1189 = vmatpush.bf16.msra.mxu0 0
        %1190 = vmatpush.bf16.msra.mxu0 0
        %1191 = vmatpush.bf16.msra.mxu0 %v1175
        %1192 = vmatpush.bf16.msra.mxu0 %v1174
        %1193 = vmatmul.bf16.gmra.mxu0 %v1180
        %v1194 = vpop.f32.mrf.mxu0
        %v1195 = vadd.f32 %v1139, %v1194
        %v1196 = vpop.f32.mrf.mxu0
        %v1197 = vadd.f32 %v1144, %v1196
        %1198 = vmatmul.bf16.gmra.mxu0 %v1183
        %v1199 = vpop.f32.mrf.mxu0
        %v1200 = vadd.f32 %v1149, %v1199
        %v1201 = vpop.f32.mrf.mxu0
        %v1202 = vadd.f32 %v1154, %v1201
        %1203 = vdwg.mxu0
        %v1208 = vunpack.c.l.b16 %v1116
        %v1209 = vunpack.c.l.b16 %v1117
        %v1210 = vunpack.c.l.b16 %v1118
        %v1211 = vunpack.c.l.b16 %v1119
        %v1212 = vpack.c.b16 %v1209, %v1208
        %v1213 = vpack.c.b16 %v1211, %v1210
        %1216 = vmatpush.bf16.msra.mxu0 0
        %1217 = vmatpush.bf16.msra.mxu0 0
        %1218 = vmatpush.bf16.msra.mxu0 0
        %1219 = vmatpush.bf16.msra.mxu0 0
        %1220 = vmatpush.bf16.msra.mxu0 0
        %1221 = vmatpush.bf16.msra.mxu0 0
        %1222 = vmatpush.bf16.msra.mxu0 %v1213
        %1223 = vmatpush.bf16.msra.mxu0 %v1212
        %1224 = vmatmul.bf16.gmra.mxu0 %v1180
        %v1225 = vpop.f32.mrf.mxu0
        %v1226 = vadd.f32 %v1139, %v1225
        %v1227 = vpop.f32.mrf.mxu0
        %v1228 = vadd.f32 %v1144, %v1227
        %1229 = vmatmul.bf16.gmra.mxu0 %v1183
        %v1230 = vpop.f32.mrf.mxu0
        %v1231 = vadd.f32 %v1149, %v1230
        %v1232 = vpop.f32.mrf.mxu0
        %v1233 = vadd.f32 %v1154, %v1232
        %1234 = vdwg.mxu0
        %v1239 = vunpack.c.l.b16 %v1120
        %v1240 = vunpack.c.l.b16 %v1121
        %v1241 = vunpack.c.l.b16 %v1122
        %v1242 = vunpack.c.l.b16 %v1123
        %v1243 = vpack.c.b16 %v1240, %v1239
        %v1244 = vpack.c.b16 %v1242, %v1241
        %1247 = vmatpush.bf16.msra.mxu0 0
        %1248 = vmatpush.bf16.msra.mxu0 0
        %1249 = vmatpush.bf16.msra.mxu0 0
        %1250 = vmatpush.bf16.msra.mxu0 0
        %1251 = vmatpush.bf16.msra.mxu0 0
        %1252 = vmatpush.bf16.msra.mxu0 0
        %1253 = vmatpush.bf16.msra.mxu0 %v1244
        %1254 = vmatpush.bf16.msra.mxu0 %v1243
        %1255 = vmatmul.bf16.gmra.mxu0 %v1180
        %v1256 = vpop.f32.mrf.mxu0
        %v1257 = vadd.f32 %v1139, %v1256
        %v1258 = vpop.f32.mrf.mxu0
        %v1259 = vadd.f32 %v1144, %v1258
        %1260 = vmatmul.bf16.gmra.mxu0 %v1183
        %v1261 = vpop.f32.mrf.mxu0
        %v1262 = vadd.f32 %v1149, %v1261
        %v1263 = vpop.f32.mrf.mxu0
        %v1264 = vadd.f32 %v1154, %v1263
        %1265 = vdwg.mxu0
        %v1270 = vunpack.c.l.b16 %v1124
        %v1271 = vunpack.c.l.b16 %v1125
        %v1272 = vunpack.c.l.b16 %v1126
        %v1273 = vunpack.c.l.b16 %v1127
        %v1274 = vpack.c.b16 %v1271, %v1270
        %v1275 = vpack.c.b16 %v1273, %v1272
        %1278 = vmatpush.bf16.msra.mxu0 0
        %1279 = vmatpush.bf16.msra.mxu0 0
        %1280 = vmatpush.bf16.msra.mxu0 0
        %1281 = vmatpush.bf16.msra.mxu0 0
        %1282 = vmatpush.bf16.msra.mxu0 0
        %1283 = vmatpush.bf16.msra.mxu0 0
        %1284 = vmatpush.bf16.msra.mxu0 %v1275
        %1285 = vmatpush.bf16.msra.mxu0 %v1274
        %1286 = vmatmul.bf16.gmra.mxu0 %v1180
        %v1287 = vpop.f32.mrf.mxu0
        %v1288 = vadd.f32 %v1139, %v1287
        %v1289 = vpop.f32.mrf.mxu0
        %v1290 = vadd.f32 %v1144, %v1289
        %1291 = vmatmul.bf16.gmra.mxu0 %v1183
        %v1292 = vpop.f32.mrf.mxu0
        %v1293 = vadd.f32 %v1149, %v1292
        %v1294 = vpop.f32.mrf.mxu0
        %v1295 = vadd.f32 %v1154, %v1294
        %1296 = vdwg.mxu0
        %v1297 = vlaneseq
        %v1298 = vand.u32 %v1297, 127
        %vm1299 = vcmp.lt.s32.totalorder %v1298, 96
        %v1300 = vsel %vm1299, 1, 0
        %vm1301 = vcmp.eq.s32.totalorder %v1300, 1
        %v1302 = vsel %vm1301, %v1195, 0.0
        %v1303 = vsel %vm1301, %v1197, 0.0
        %v1304 = vsel %vm1301, %v1200, 0.0
        %v1305 = vsel %vm1301, %v1202, 0.0
        %v1306 = vsel %vm1301, %v1226, 0.0
        %v1307 = vsel %vm1301, %v1228, 0.0
        %v1308 = vsel %vm1301, %v1231, 0.0
        %v1309 = vsel %vm1301, %v1233, 0.0
        %v1310 = vsel %vm1301, %v1257, 0.0
        %v1311 = vsel %vm1301, %v1259, 0.0
        %v1312 = vsel %vm1301, %v1262, 0.0
        %v1313 = vsel %vm1301, %v1264, 0.0
        %v1314 = vsel %vm1301, %v1288, 0.0
        %v1315 = vsel %vm1301, %v1290, 0.0
        %v1316 = vsel %vm1301, %v1293, 0.0
        %v1317 = vsel %vm1301, %v1295, 0.0
        %v1318 = vld [vmem:[%s5] sm:$0x1]
        %v1320 = vperm.slane %v1318, 0
        %v1322 = vmul.f32 %v1302, %v1320
        %v1323 = vmul.f32 %v1303, %v1320
        %v1324 = vmul.f32 %v1304, %v1320
        %v1325 = vmul.f32 %v1305, %v1320
        %v1326 = vmul.f32 %v1306, %v1320
        %v1327 = vmul.f32 %v1307, %v1320
        %v1328 = vmul.f32 %v1308, %v1320
        %v1329 = vmul.f32 %v1309, %v1320
        %v1330 = vmul.f32 %v1310, %v1320
        %v1331 = vmul.f32 %v1311, %v1320
        %v1332 = vmul.f32 %v1312, %v1320
        %v1333 = vmul.f32 %v1313, %v1320
        %v1334 = vmul.f32 %v1314, %v1320
        %v1335 = vmul.f32 %v1315, %v1320
        %v1336 = vmul.f32 %v1316, %v1320
        %v1337 = vmul.f32 %v1317, %v1320
        %v1338 = vld [vmem:[%s6] sm:$0x1]
        %v1340 = vperm.slane %v1338, 0
        %v1342 = vadd.f32 %v1322, %v1340
        %v1343 = vadd.f32 %v1323, %v1340
        %v1344 = vadd.f32 %v1324, %v1340
        %v1345 = vadd.f32 %v1325, %v1340
        %v1346 = vadd.f32 %v1326, %v1340
        %v1347 = vadd.f32 %v1327, %v1340
        %v1348 = vadd.f32 %v1328, %v1340
        %v1349 = vadd.f32 %v1329, %v1340
        %v1350 = vadd.f32 %v1330, %v1340
        %v1351 = vadd.f32 %v1331, %v1340
        %v1352 = vadd.f32 %v1332, %v1340
        %v1353 = vadd.f32 %v1333, %v1340
        %v1354 = vadd.f32 %v1334, %v1340
        %v1355 = vadd.f32 %v1335, %v1340
        %v1356 = vadd.f32 %v1336, %v1340
        %v1357 = vadd.f32 %v1337, %v1340
        %v1358 = vmax.f32 %v1342, 0.0
        %v1359 = vmax.f32 %v1343, 0.0
        %v1360 = vmax.f32 %v1344, 0.0
        %v1361 = vmax.f32 %v1345, 0.0
        %v1362 = vmax.f32 %v1346, 0.0
        %v1363 = vmax.f32 %v1347, 0.0
        %v1364 = vmax.f32 %v1348, 0.0
        %v1365 = vmax.f32 %v1349, 0.0
        %v1366 = vmax.f32 %v1350, 0.0
        %v1367 = vmax.f32 %v1351, 0.0
        %v1368 = vmax.f32 %v1352, 0.0
        %v1369 = vmax.f32 %v1353, 0.0
        %v1370 = vmax.f32 %v1354, 0.0
        %v1371 = vmax.f32 %v1355, 0.0
        %v1372 = vmax.f32 %v1356, 0.0
        %v1373 = vmax.f32 %v1357, 0.0
        %v1374 = vpack.c.bf16 %v1359, %v1358
        %v1375 = vpack.c.bf16 %v1361, %v1360
        %v1376 = vpack.c.bf16 %v1363, %v1362
        %v1377 = vpack.c.bf16 %v1365, %v1364
        %v1378 = vpack.c.bf16 %v1367, %v1366
        %v1379 = vpack.c.bf16 %v1369, %v1368
        %v1380 = vpack.c.bf16 %v1371, %v1370
        %v1381 = vpack.c.bf16 %v1373, %v1372
        %v1382 = vld [vmem:[%s7] sm:$0xf]
        %v1383 = vld [vmem:[%s7 + $0x4] sm:$0xf]
        %v1384 = vld [vmem:[%s7 + $0x8] sm:$0xf]
        %v1385 = vld [vmem:[%s7 + $0xc] sm:$0xf]
        %v1386 = vld [vmem:[%s7 + $0x10] sm:$0xf]
        %v1387 = vld [vmem:[%s7 + $0x14] sm:$0xf]
        %v1388 = vld [vmem:[%s7 + $0x18] sm:$0xf]
        %v1389 = vld [vmem:[%s7 + $0x1c] sm:$0xf]
        %v1390 = vld [vmem:[%s7 + $0x20] sm:$0xf]
        %v1391 = vld [vmem:[%s7 + $0x24] sm:$0xf]
        %v1392 = vld [vmem:[%s7 + $0x28] sm:$0xf]
        %v1393 = vld [vmem:[%s7 + $0x2c] sm:$0xf]
        %v1394 = vld [vmem:[%s7 + $0x30] sm:$0xf]
        %v1395 = vld [vmem:[%s7 + $0x34] sm:$0xf]
        %v1396 = vld [vmem:[%s7 + $0x38] sm:$0xf]
        %v1397 = vld [vmem:[%s7 + $0x3c] sm:$0xf]
        %v1414 = vunpack.c.l.b16 %v1382
        %v1415 = vunpack.c.l.b16 %v1383
        %v1416 = vunpack.c.l.b16 %v1384
        %v1417 = vunpack.c.l.b16 %v1385
        %v1418 = vunpack.c.l.b16 %v1386
        %v1419 = vunpack.c.l.b16 %v1387
        %v1420 = vunpack.c.l.b16 %v1388
        %v1421 = vunpack.c.l.b16 %v1389
        %v1422 = vunpack.c.l.b16 %v1390
        %v1423 = vunpack.c.l.b16 %v1391
        %v1424 = vunpack.c.l.b16 %v1392
        %v1425 = vunpack.c.l.b16 %v1393
        %v1426 = vunpack.c.l.b16 %v1394
        %v1427 = vunpack.c.l.b16 %v1395
        %v1428 = vunpack.c.l.b16 %v1396
        %v1429 = vunpack.c.l.b16 %v1397
        %v1430 = vpack.c.b16 %v1415, %v1414
        %v1431 = vpack.c.b16 %v1417, %v1416
        %v1432 = vpack.c.b16 %v1419, %v1418
        %v1433 = vpack.c.b16 %v1421, %v1420
        %v1434 = vpack.c.b16 %v1423, %v1422
        %v1435 = vpack.c.b16 %v1425, %v1424
        %v1436 = vpack.c.b16 %v1427, %v1426
        %v1437 = vpack.c.b16 %v1429, %v1428
        %1446 = vmatpush.bf16.msra.mxu0 %v1437
        %1447 = vmatpush.bf16.msra.mxu0 %v1436
        %1448 = vmatpush.bf16.msra.mxu0 %v1435
        %1449 = vmatpush.bf16.msra.mxu0 %v1434
        %1450 = vmatpush.bf16.msra.mxu0 %v1433
        %1451 = vmatpush.bf16.msra.mxu0 %v1432
        %1452 = vmatpush.bf16.msra.mxu0 %v1431
        %1453 = vmatpush.bf16.msra.mxu0 %v1430
        %1454 = vmatmul.bf16.gmra.mxu0 %v1374
        %v1455 = vpop.f32.mrf.mxu0
        %v1456 = vadd.f32 0.0, %v1455
        %v1457 = vpop.f32.mrf.mxu0
        %v1458 = vadd.f32 0.0, %v1457
        %1459 = vmatmul.bf16.gmra.mxu0 %v1375
        %v1460 = vpop.f32.mrf.mxu0
        %v1461 = vadd.f32 0.0, %v1460
        %v1462 = vpop.f32.mrf.mxu0
        %v1463 = vadd.f32 0.0, %v1462
        %1464 = vmatmul.bf16.gmra.mxu0 %v1376
        %v1465 = vpop.f32.mrf.mxu0
        %v1466 = vadd.f32 0.0, %v1465
        %v1467 = vpop.f32.mrf.mxu0
        %v1468 = vadd.f32 0.0, %v1467
        %1469 = vmatmul.bf16.gmra.mxu0 %v1377
        %v1470 = vpop.f32.mrf.mxu0
        %v1471 = vadd.f32 0.0, %v1470
        %v1472 = vpop.f32.mrf.mxu0
        %v1473 = vadd.f32 0.0, %v1472
        %1474 = vmatmul.bf16.gmra.mxu0 %v1378
        %v1475 = vpop.f32.mrf.mxu0
        %v1476 = vadd.f32 0.0, %v1475
        %v1477 = vpop.f32.mrf.mxu0
        %v1478 = vadd.f32 0.0, %v1477
        %1479 = vmatmul.bf16.gmra.mxu0 %v1379
        %v1480 = vpop.f32.mrf.mxu0
        %v1481 = vadd.f32 0.0, %v1480
        %v1482 = vpop.f32.mrf.mxu0
        %v1483 = vadd.f32 0.0, %v1482
        %1484 = vmatmul.bf16.gmra.mxu0 %v1380
        %v1485 = vpop.f32.mrf.mxu0
        %v1486 = vadd.f32 0.0, %v1485
        %v1487 = vpop.f32.mrf.mxu0
        %v1488 = vadd.f32 0.0, %v1487
        %1489 = vmatmul.bf16.gmra.mxu0 %v1381
        %v1490 = vpop.f32.mrf.mxu0
        %v1491 = vadd.f32 0.0, %v1490
        %v1492 = vpop.f32.mrf.mxu0
        %v1493 = vadd.f32 0.0, %v1492
        %1494 = vdwg.mxu0
        %v1495 = vadd.f32 %v1302, %v1456
        %v1496 = vadd.f32 %v1303, %v1458
        %v1497 = vadd.f32 %v1304, %v1461
        %v1498 = vadd.f32 %v1305, %v1463
        %v1499 = vadd.f32 %v1306, %v1466
        %v1500 = vadd.f32 %v1307, %v1468
        %v1501 = vadd.f32 %v1308, %v1471
        %v1502 = vadd.f32 %v1309, %v1473
        %v1503 = vadd.f32 %v1310, %v1476
        %v1504 = vadd.f32 %v1311, %v1478
        %v1505 = vadd.f32 %v1312, %v1481
        %v1506 = vadd.f32 %v1313, %v1483
        %v1507 = vadd.f32 %v1314, %v1486
        %v1508 = vadd.f32 %v1315, %v1488
        %v1509 = vadd.f32 %v1316, %v1491
        %v1510 = vadd.f32 %v1317, %v1493
        %v1511 = vld [vmem:[%s8] sm:$0x1]
        %v1513 = vperm.slane %v1511, 0
        %v1515 = vadd.f32 %v1495, %v1513
        %v1516 = vadd.f32 %v1496, %v1513
        %v1517 = vadd.f32 %v1497, %v1513
        %v1518 = vadd.f32 %v1498, %v1513
        %v1519 = vadd.f32 %v1499, %v1513
        %v1520 = vadd.f32 %v1500, %v1513
        %v1521 = vadd.f32 %v1501, %v1513
        %v1522 = vadd.f32 %v1502, %v1513
        %v1523 = vadd.f32 %v1503, %v1513
        %v1524 = vadd.f32 %v1504, %v1513
        %v1525 = vadd.f32 %v1505, %v1513
        %v1526 = vadd.f32 %v1506, %v1513
        %v1527 = vadd.f32 %v1507, %v1513
        %v1528 = vadd.f32 %v1508, %v1513
        %v1529 = vadd.f32 %v1509, %v1513
        %v1530 = vadd.f32 %v1510, %v1513
        %1531 = vadd.xlane.f32.xlu0 %v1515
        %v1532 = vpop.xlane.xlu0 %1531
        %1533 = vadd.xlane.f32.xlu0 %v1516
        %v1534 = vpop.xlane.xlu0 %1533
        %1535 = vadd.xlane.f32.xlu0 %v1517
        %v1536 = vpop.xlane.xlu0 %1535
        %1537 = vadd.xlane.f32.xlu0 %v1518
        %v1538 = vpop.xlane.xlu0 %1537
        %1539 = vadd.xlane.f32.xlu0 %v1519
        %v1540 = vpop.xlane.xlu0 %1539
        %1541 = vadd.xlane.f32.xlu0 %v1520
        %v1542 = vpop.xlane.xlu0 %1541
        %1543 = vadd.xlane.f32.xlu0 %v1521
        %v1544 = vpop.xlane.xlu0 %1543
        %1545 = vadd.xlane.f32.xlu0 %v1522
        %v1546 = vpop.xlane.xlu0 %1545
        %1547 = vadd.xlane.f32.xlu0 %v1523
        %v1548 = vpop.xlane.xlu0 %1547
        %1549 = vadd.xlane.f32.xlu0 %v1524
        %v1550 = vpop.xlane.xlu0 %1549
        %1551 = vadd.xlane.f32.xlu0 %v1525
        %v1552 = vpop.xlane.xlu0 %1551
        %1553 = vadd.xlane.f32.xlu0 %v1526
        %v1554 = vpop.xlane.xlu0 %1553
        %1555 = vadd.xlane.f32.xlu0 %v1527
        %v1556 = vpop.xlane.xlu0 %1555
        %1557 = vadd.xlane.f32.xlu0 %v1528
        %v1558 = vpop.xlane.xlu0 %1557
        %1559 = vadd.xlane.f32.xlu0 %v1529
        %v1560 = vpop.xlane.xlu0 %1559
        %1561 = vadd.xlane.f32.xlu0 %v1530
        %v1562 = vpop.xlane.xlu0 %1561
        %v1563 = vmul.f32 %v1532, 0.010416667
        %v1564 = vmul.f32 %v1534, 0.010416667
        %v1565 = vmul.f32 %v1536, 0.010416667
        %v1566 = vmul.f32 %v1538, 0.010416667
        %v1567 = vmul.f32 %v1540, 0.010416667
        %v1568 = vmul.f32 %v1542, 0.010416667
        %v1569 = vmul.f32 %v1544, 0.010416667
        %v1570 = vmul.f32 %v1546, 0.010416667
        %v1571 = vmul.f32 %v1548, 0.010416667
        %v1572 = vmul.f32 %v1550, 0.010416667
        %v1573 = vmul.f32 %v1552, 0.010416667
        %v1574 = vmul.f32 %v1554, 0.010416667
        %v1575 = vmul.f32 %v1556, 0.010416667
        %v1576 = vmul.f32 %v1558, 0.010416667
        %v1577 = vmul.f32 %v1560, 0.010416667
        %v1578 = vmul.f32 %v1562, 0.010416667
        %v1579 = vmul.f32 %v1515, %v1515
        %v1580 = vmul.f32 %v1516, %v1516
        %v1581 = vmul.f32 %v1517, %v1517
        %v1582 = vmul.f32 %v1518, %v1518
        %v1583 = vmul.f32 %v1519, %v1519
        %v1584 = vmul.f32 %v1520, %v1520
        %v1585 = vmul.f32 %v1521, %v1521
        %v1586 = vmul.f32 %v1522, %v1522
        %v1587 = vmul.f32 %v1523, %v1523
        %v1588 = vmul.f32 %v1524, %v1524
        %v1589 = vmul.f32 %v1525, %v1525
        %v1590 = vmul.f32 %v1526, %v1526
        %v1591 = vmul.f32 %v1527, %v1527
        %v1592 = vmul.f32 %v1528, %v1528
        %v1593 = vmul.f32 %v1529, %v1529
        %v1594 = vmul.f32 %v1530, %v1530
        %1595 = vadd.xlane.f32.xlu0 %v1579
        %v1596 = vpop.xlane.xlu0 %1595
        %1597 = vadd.xlane.f32.xlu0 %v1580
        %v1598 = vpop.xlane.xlu0 %1597
        %1599 = vadd.xlane.f32.xlu0 %v1581
        %v1600 = vpop.xlane.xlu0 %1599
        %1601 = vadd.xlane.f32.xlu0 %v1582
        %v1602 = vpop.xlane.xlu0 %1601
        %1603 = vadd.xlane.f32.xlu0 %v1583
        %v1604 = vpop.xlane.xlu0 %1603
        %1605 = vadd.xlane.f32.xlu0 %v1584
        %v1606 = vpop.xlane.xlu0 %1605
        %1607 = vadd.xlane.f32.xlu0 %v1585
        %v1608 = vpop.xlane.xlu0 %1607
        %1609 = vadd.xlane.f32.xlu0 %v1586
        %v1610 = vpop.xlane.xlu0 %1609
        %1611 = vadd.xlane.f32.xlu0 %v1587
        %v1612 = vpop.xlane.xlu0 %1611
        %1613 = vadd.xlane.f32.xlu0 %v1588
        %v1614 = vpop.xlane.xlu0 %1613
        %1615 = vadd.xlane.f32.xlu0 %v1589
        %v1616 = vpop.xlane.xlu0 %1615
        %1617 = vadd.xlane.f32.xlu0 %v1590
        %v1618 = vpop.xlane.xlu0 %1617
        %1619 = vadd.xlane.f32.xlu0 %v1591
        %v1620 = vpop.xlane.xlu0 %1619
        %1621 = vadd.xlane.f32.xlu0 %v1592
        %v1622 = vpop.xlane.xlu0 %1621
        %1623 = vadd.xlane.f32.xlu0 %v1593
        %v1624 = vpop.xlane.xlu0 %1623
        %1625 = vadd.xlane.f32.xlu0 %v1594
        %v1626 = vpop.xlane.xlu0 %1625
        %v1627 = vmul.f32 %v1596, 0.010416667
        %v1628 = vmul.f32 %v1598, 0.010416667
        %v1629 = vmul.f32 %v1600, 0.010416667
        %v1630 = vmul.f32 %v1602, 0.010416667
        %v1631 = vmul.f32 %v1604, 0.010416667
        %v1632 = vmul.f32 %v1606, 0.010416667
        %v1633 = vmul.f32 %v1608, 0.010416667
        %v1634 = vmul.f32 %v1610, 0.010416667
        %v1635 = vmul.f32 %v1612, 0.010416667
        %v1636 = vmul.f32 %v1614, 0.010416667
        %v1637 = vmul.f32 %v1616, 0.010416667
        %v1638 = vmul.f32 %v1618, 0.010416667
        %v1639 = vmul.f32 %v1620, 0.010416667
        %v1640 = vmul.f32 %v1622, 0.010416667
        %v1641 = vmul.f32 %v1624, 0.010416667
        %v1642 = vmul.f32 %v1626, 0.010416667
        %v1643 = vmul.f32 %v1563, %v1563
        %v1644 = vmul.f32 %v1564, %v1564
        %v1645 = vmul.f32 %v1565, %v1565
        %v1646 = vmul.f32 %v1566, %v1566
        %v1647 = vmul.f32 %v1567, %v1567
        %v1648 = vmul.f32 %v1568, %v1568
        %v1649 = vmul.f32 %v1569, %v1569
        %v1650 = vmul.f32 %v1570, %v1570
        %v1651 = vmul.f32 %v1571, %v1571
        %v1652 = vmul.f32 %v1572, %v1572
        %v1653 = vmul.f32 %v1573, %v1573
        %v1654 = vmul.f32 %v1574, %v1574
        %v1655 = vmul.f32 %v1575, %v1575
        %v1656 = vmul.f32 %v1576, %v1576
        %v1657 = vmul.f32 %v1577, %v1577
        %v1658 = vmul.f32 %v1578, %v1578
        %v1659 = vsub.f32 %v1627, %v1643
        %v1660 = vsub.f32 %v1628, %v1644
        %v1661 = vsub.f32 %v1629, %v1645
        %v1662 = vsub.f32 %v1630, %v1646
        %v1663 = vsub.f32 %v1631, %v1647
        %v1664 = vsub.f32 %v1632, %v1648
        %v1665 = vsub.f32 %v1633, %v1649
        %v1666 = vsub.f32 %v1634, %v1650
        %v1667 = vsub.f32 %v1635, %v1651
        %v1668 = vsub.f32 %v1636, %v1652
        %v1669 = vsub.f32 %v1637, %v1653
        %v1670 = vsub.f32 %v1638, %v1654
        %v1671 = vsub.f32 %v1639, %v1655
        %v1672 = vsub.f32 %v1640, %v1656
        %v1673 = vsub.f32 %v1641, %v1657
        %v1674 = vsub.f32 %v1642, %v1658
        %v1675 = vmax.f32 %v1659, 0.0
        %v1676 = vmax.f32 %v1660, 0.0
        %v1677 = vmax.f32 %v1661, 0.0
        %v1678 = vmax.f32 %v1662, 0.0
        %v1679 = vmax.f32 %v1663, 0.0
        %v1680 = vmax.f32 %v1664, 0.0
        %v1681 = vmax.f32 %v1665, 0.0
        %v1682 = vmax.f32 %v1666, 0.0
        %v1683 = vmax.f32 %v1667, 0.0
        %v1684 = vmax.f32 %v1668, 0.0
        %v1685 = vmax.f32 %v1669, 0.0
        %v1686 = vmax.f32 %v1670, 0.0
        %v1687 = vmax.f32 %v1671, 0.0
        %v1688 = vmax.f32 %v1672, 0.0
        %v1689 = vmax.f32 %v1673, 0.0
        %v1690 = vmax.f32 %v1674, 0.0
        %v1691 = vadd.f32 %v1675, 0.001
        %v1692 = vadd.f32 %v1676, 0.001
        %v1693 = vadd.f32 %v1677, 0.001
        %v1694 = vadd.f32 %v1678, 0.001
        %v1695 = vadd.f32 %v1679, 0.001
        %v1696 = vadd.f32 %v1680, 0.001
        %v1697 = vadd.f32 %v1681, 0.001
        %v1698 = vadd.f32 %v1682, 0.001
        %v1699 = vadd.f32 %v1683, 0.001
        %v1700 = vadd.f32 %v1684, 0.001
        %v1701 = vadd.f32 %v1685, 0.001
        %v1702 = vadd.f32 %v1686, 0.001
        %v1703 = vadd.f32 %v1687, 0.001
        %v1704 = vadd.f32 %v1688, 0.001
        %v1705 = vadd.f32 %v1689, 0.001
        %v1706 = vadd.f32 %v1690, 0.001
        %v1707 = vrsqrt.pop %v1691
        %v1708 = vmul.f32 %v1707, %v1691
        %v1709 = vmul.f32 %v1708, %v1707
        %v1710 = vmul.f32 0.5, %v1709
        %v1711 = vsub.f32 1.5, %v1710
        %v1712 = vmul.f32 %v1707, %v1711
        %vm1713 = vweird.f32 %v1691
        %vm1714 = vweird.f32 %v1707
        %vm1715 = vmor %vm1713, %vm1714
        %v1716 = vsel %vm1715, %v1707, %v1712
        %v1717 = vrsqrt.pop %v1692
        %v1718 = vmul.f32 %v1717, %v1692
        %v1719 = vmul.f32 %v1718, %v1717
        %v1720 = vmul.f32 0.5, %v1719
        %v1721 = vsub.f32 1.5, %v1720
        %v1722 = vmul.f32 %v1717, %v1721
        %vm1723 = vweird.f32 %v1692
        %vm1724 = vweird.f32 %v1717
        %vm1725 = vmor %vm1723, %vm1724
        %v1726 = vsel %vm1725, %v1717, %v1722
        %v1727 = vrsqrt.pop %v1693
        %v1728 = vmul.f32 %v1727, %v1693
        %v1729 = vmul.f32 %v1728, %v1727
        %v1730 = vmul.f32 0.5, %v1729
        %v1731 = vsub.f32 1.5, %v1730
        %v1732 = vmul.f32 %v1727, %v1731
        %vm1733 = vweird.f32 %v1693
        %vm1734 = vweird.f32 %v1727
        %vm1735 = vmor %vm1733, %vm1734
        %v1736 = vsel %vm1735, %v1727, %v1732
        %v1737 = vrsqrt.pop %v1694
        %v1738 = vmul.f32 %v1737, %v1694
        %v1739 = vmul.f32 %v1738, %v1737
        %v1740 = vmul.f32 0.5, %v1739
        %v1741 = vsub.f32 1.5, %v1740
        %v1742 = vmul.f32 %v1737, %v1741
        %vm1743 = vweird.f32 %v1694
        %vm1744 = vweird.f32 %v1737
        %vm1745 = vmor %vm1743, %vm1744
        %v1746 = vsel %vm1745, %v1737, %v1742
        %v1747 = vrsqrt.pop %v1695
        %v1748 = vmul.f32 %v1747, %v1695
        %v1749 = vmul.f32 %v1748, %v1747
        %v1750 = vmul.f32 0.5, %v1749
        %v1751 = vsub.f32 1.5, %v1750
        %v1752 = vmul.f32 %v1747, %v1751
        %vm1753 = vweird.f32 %v1695
        %vm1754 = vweird.f32 %v1747
        %vm1755 = vmor %vm1753, %vm1754
        %v1756 = vsel %vm1755, %v1747, %v1752
        %v1757 = vrsqrt.pop %v1696
        %v1758 = vmul.f32 %v1757, %v1696
        %v1759 = vmul.f32 %v1758, %v1757
        %v1760 = vmul.f32 0.5, %v1759
        %v1761 = vsub.f32 1.5, %v1760
        %v1762 = vmul.f32 %v1757, %v1761
        %vm1763 = vweird.f32 %v1696
        %vm1764 = vweird.f32 %v1757
        %vm1765 = vmor %vm1763, %vm1764
        %v1766 = vsel %vm1765, %v1757, %v1762
        %v1767 = vrsqrt.pop %v1697
        %v1768 = vmul.f32 %v1767, %v1697
        %v1769 = vmul.f32 %v1768, %v1767
        %v1770 = vmul.f32 0.5, %v1769
        %v1771 = vsub.f32 1.5, %v1770
        %v1772 = vmul.f32 %v1767, %v1771
        %vm1773 = vweird.f32 %v1697
        %vm1774 = vweird.f32 %v1767
        %vm1775 = vmor %vm1773, %vm1774
        %v1776 = vsel %vm1775, %v1767, %v1772
        %v1777 = vrsqrt.pop %v1698
        %v1778 = vmul.f32 %v1777, %v1698
        %v1779 = vmul.f32 %v1778, %v1777
        %v1780 = vmul.f32 0.5, %v1779
        %v1781 = vsub.f32 1.5, %v1780
        %v1782 = vmul.f32 %v1777, %v1781
        %vm1783 = vweird.f32 %v1698
        %vm1784 = vweird.f32 %v1777
        %vm1785 = vmor %vm1783, %vm1784
        %v1786 = vsel %vm1785, %v1777, %v1782
        %v1787 = vrsqrt.pop %v1699
        %v1788 = vmul.f32 %v1787, %v1699
        %v1789 = vmul.f32 %v1788, %v1787
        %v1790 = vmul.f32 0.5, %v1789
        %v1791 = vsub.f32 1.5, %v1790
        %v1792 = vmul.f32 %v1787, %v1791
        %vm1793 = vweird.f32 %v1699
        %vm1794 = vweird.f32 %v1787
        %vm1795 = vmor %vm1793, %vm1794
        %v1796 = vsel %vm1795, %v1787, %v1792
        %v1797 = vrsqrt.pop %v1700
        %v1798 = vmul.f32 %v1797, %v1700
        %v1799 = vmul.f32 %v1798, %v1797
        %v1800 = vmul.f32 0.5, %v1799
        %v1801 = vsub.f32 1.5, %v1800
        %v1802 = vmul.f32 %v1797, %v1801
        %vm1803 = vweird.f32 %v1700
        %vm1804 = vweird.f32 %v1797
        %vm1805 = vmor %vm1803, %vm1804
        %v1806 = vsel %vm1805, %v1797, %v1802
        %v1807 = vrsqrt.pop %v1701
        %v1808 = vmul.f32 %v1807, %v1701
        %v1809 = vmul.f32 %v1808, %v1807
        %v1810 = vmul.f32 0.5, %v1809
        %v1811 = vsub.f32 1.5, %v1810
        %v1812 = vmul.f32 %v1807, %v1811
        %vm1813 = vweird.f32 %v1701
        %vm1814 = vweird.f32 %v1807
        %vm1815 = vmor %vm1813, %vm1814
        %v1816 = vsel %vm1815, %v1807, %v1812
        %v1817 = vrsqrt.pop %v1702
        %v1818 = vmul.f32 %v1817, %v1702
        %v1819 = vmul.f32 %v1818, %v1817
        %v1820 = vmul.f32 0.5, %v1819
        %v1821 = vsub.f32 1.5, %v1820
        %v1822 = vmul.f32 %v1817, %v1821
        %vm1823 = vweird.f32 %v1702
        %vm1824 = vweird.f32 %v1817
        %vm1825 = vmor %vm1823, %vm1824
        %v1826 = vsel %vm1825, %v1817, %v1822
        %v1827 = vrsqrt.pop %v1703
        %v1828 = vmul.f32 %v1827, %v1703
        %v1829 = vmul.f32 %v1828, %v1827
        %v1830 = vmul.f32 0.5, %v1829
        %v1831 = vsub.f32 1.5, %v1830
        %v1832 = vmul.f32 %v1827, %v1831
        %vm1833 = vweird.f32 %v1703
        %vm1834 = vweird.f32 %v1827
        %vm1835 = vmor %vm1833, %vm1834
        %v1836 = vsel %vm1835, %v1827, %v1832
        %v1837 = vrsqrt.pop %v1704
        %v1838 = vmul.f32 %v1837, %v1704
        %v1839 = vmul.f32 %v1838, %v1837
        %v1840 = vmul.f32 0.5, %v1839
        %v1841 = vsub.f32 1.5, %v1840
        %v1842 = vmul.f32 %v1837, %v1841
        %vm1843 = vweird.f32 %v1704
        %vm1844 = vweird.f32 %v1837
        %vm1845 = vmor %vm1843, %vm1844
        %v1846 = vsel %vm1845, %v1837, %v1842
        %v1847 = vrsqrt.pop %v1705
        %v1848 = vmul.f32 %v1847, %v1705
        %v1849 = vmul.f32 %v1848, %v1847
        %v1850 = vmul.f32 0.5, %v1849
        %v1851 = vsub.f32 1.5, %v1850
        %v1852 = vmul.f32 %v1847, %v1851
        %vm1853 = vweird.f32 %v1705
        %vm1854 = vweird.f32 %v1847
        %vm1855 = vmor %vm1853, %vm1854
        %v1856 = vsel %vm1855, %v1847, %v1852
        %v1857 = vrsqrt.pop %v1706
        %v1858 = vmul.f32 %v1857, %v1706
        %v1859 = vmul.f32 %v1858, %v1857
        %v1860 = vmul.f32 0.5, %v1859
        %v1861 = vsub.f32 1.5, %v1860
        %v1862 = vmul.f32 %v1857, %v1861
        %vm1863 = vweird.f32 %v1706
        %vm1864 = vweird.f32 %v1857
        %vm1865 = vmor %vm1863, %vm1864
        %v1866 = vsel %vm1865, %v1857, %v1862
        %v1867 = vld [vmem:[%s9] sm:$0xff]
        %v1868 = vld [vmem:[%s9 + $0x8] sm:$0xff]
        %v1869 = vld [vmem:[%s9 + $0x10] sm:$0xff]
        %v1870 = vld [vmem:[%s9 + $0x18] sm:$0xff]
        %v1871 = vmul.f32 %v1716, %v1867
        %v1872 = vmul.f32 %v1726, %v1868
        %v1873 = vmul.f32 %v1736, %v1869
        %v1874 = vmul.f32 %v1746, %v1870
        %v1875 = vmul.f32 %v1756, %v1867
        %v1876 = vmul.f32 %v1766, %v1868
        %v1877 = vmul.f32 %v1776, %v1869
        %v1878 = vmul.f32 %v1786, %v1870
        %v1879 = vmul.f32 %v1796, %v1867
        %v1880 = vmul.f32 %v1806, %v1868
        %v1881 = vmul.f32 %v1816, %v1869
        %v1882 = vmul.f32 %v1826, %v1870
        %v1883 = vmul.f32 %v1836, %v1867
        %v1884 = vmul.f32 %v1846, %v1868
        %v1885 = vmul.f32 %v1856, %v1869
        %v1886 = vmul.f32 %v1866, %v1870
        %v1887 = vld [vmem:[%s10] sm:$0xff]
        %v1888 = vld [vmem:[%s10 + $0x8] sm:$0xff]
        %v1889 = vld [vmem:[%s10 + $0x10] sm:$0xff]
        %v1890 = vld [vmem:[%s10 + $0x18] sm:$0xff]
        %v1891 = vmul.f32 %v1563, %v1871
        %v1892 = vmul.f32 %v1564, %v1872
        %v1893 = vmul.f32 %v1565, %v1873
        %v1894 = vmul.f32 %v1566, %v1874
        %v1895 = vmul.f32 %v1567, %v1875
        %v1896 = vmul.f32 %v1568, %v1876
        %v1897 = vmul.f32 %v1569, %v1877
        %v1898 = vmul.f32 %v1570, %v1878
        %v1899 = vmul.f32 %v1571, %v1879
        %v1900 = vmul.f32 %v1572, %v1880
        %v1901 = vmul.f32 %v1573, %v1881
        %v1902 = vmul.f32 %v1574, %v1882
        %v1903 = vmul.f32 %v1575, %v1883
        %v1904 = vmul.f32 %v1576, %v1884
        %v1905 = vmul.f32 %v1577, %v1885
        %v1906 = vmul.f32 %v1578, %v1886
        %v1907 = vsub.f32 %v1887, %v1891
        %v1908 = vsub.f32 %v1888, %v1892
        %v1909 = vsub.f32 %v1889, %v1893
        %v1910 = vsub.f32 %v1890, %v1894
        %v1911 = vsub.f32 %v1887, %v1895
        %v1912 = vsub.f32 %v1888, %v1896
        %v1913 = vsub.f32 %v1889, %v1897
        %v1914 = vsub.f32 %v1890, %v1898
        %v1915 = vsub.f32 %v1887, %v1899
        %v1916 = vsub.f32 %v1888, %v1900
        %v1917 = vsub.f32 %v1889, %v1901
        %v1918 = vsub.f32 %v1890, %v1902
        %v1919 = vsub.f32 %v1887, %v1903
        %v1920 = vsub.f32 %v1888, %v1904
        %v1921 = vsub.f32 %v1889, %v1905
        %v1922 = vsub.f32 %v1890, %v1906
        %1924 = vset.pattern.permute.xlu0 0
        %1925 = vperm.xlu0 %1924, %v1871
        %v1926 = vpop.permute.xlu0 %1925
        %1929 = vset.pattern.permute.xlu0 0
        %1930 = vperm.xlu0 %1929, %v1872
        %v1931 = vpop.permute.xlu0 %1930
        %1934 = vset.pattern.permute.xlu0 0
        %1935 = vperm.xlu0 %1934, %v1873
        %v1936 = vpop.permute.xlu0 %1935
        %1939 = vset.pattern.permute.xlu0 0
        %1940 = vperm.xlu0 %1939, %v1874
        %v1941 = vpop.permute.xlu0 %1940
        %1944 = vset.pattern.permute.xlu0 0
        %1945 = vperm.xlu0 %1944, %v1875
        %v1946 = vpop.permute.xlu0 %1945
        %1949 = vset.pattern.permute.xlu0 0
        %1950 = vperm.xlu0 %1949, %v1876
        %v1951 = vpop.permute.xlu0 %1950
        %1954 = vset.pattern.permute.xlu0 0
        %1955 = vperm.xlu0 %1954, %v1877
        %v1956 = vpop.permute.xlu0 %1955
        %1959 = vset.pattern.permute.xlu0 0
        %1960 = vperm.xlu0 %1959, %v1878
        %v1961 = vpop.permute.xlu0 %1960
        %1964 = vset.pattern.permute.xlu0 0
        %1965 = vperm.xlu0 %1964, %v1879
        %v1966 = vpop.permute.xlu0 %1965
        %1969 = vset.pattern.permute.xlu0 0
        %1970 = vperm.xlu0 %1969, %v1880
        %v1971 = vpop.permute.xlu0 %1970
        %1974 = vset.pattern.permute.xlu0 0
        %1975 = vperm.xlu0 %1974, %v1881
        %v1976 = vpop.permute.xlu0 %1975
        %1979 = vset.pattern.permute.xlu0 0
        %1980 = vperm.xlu0 %1979, %v1882
        %v1981 = vpop.permute.xlu0 %1980
        %1984 = vset.pattern.permute.xlu0 0
        %1985 = vperm.xlu0 %1984, %v1883
        %v1986 = vpop.permute.xlu0 %1985
        %1989 = vset.pattern.permute.xlu0 0
        %1990 = vperm.xlu0 %1989, %v1884
        %v1991 = vpop.permute.xlu0 %1990
        %1994 = vset.pattern.permute.xlu0 0
        %1995 = vperm.xlu0 %1994, %v1885
        %v1996 = vpop.permute.xlu0 %1995
        %1999 = vset.pattern.permute.xlu0 0
        %2000 = vperm.xlu0 %1999, %v1886
        %v2001 = vpop.permute.xlu0 %2000
        %v2003 = vmul.f32 %v1515, %v1926
        %v2004 = vmul.f32 %v1516, %v1931
        %v2005 = vmul.f32 %v1517, %v1936
        %v2006 = vmul.f32 %v1518, %v1941
        %v2007 = vmul.f32 %v1519, %v1946
        %v2008 = vmul.f32 %v1520, %v1951
        %v2009 = vmul.f32 %v1521, %v1956
        %v2010 = vmul.f32 %v1522, %v1961
        %v2011 = vmul.f32 %v1523, %v1966
        %v2012 = vmul.f32 %v1524, %v1971
        %v2013 = vmul.f32 %v1525, %v1976
        %v2014 = vmul.f32 %v1526, %v1981
        %v2015 = vmul.f32 %v1527, %v1986
        %v2016 = vmul.f32 %v1528, %v1991
        %v2017 = vmul.f32 %v1529, %v1996
        %v2018 = vmul.f32 %v1530, %v2001
        %2020 = vset.pattern.permute.xlu0 0
        %2021 = vperm.xlu0 %2020, %v1907
        %v2022 = vpop.permute.xlu0 %2021
        %2025 = vset.pattern.permute.xlu0 0
        %2026 = vperm.xlu0 %2025, %v1908
        %v2027 = vpop.permute.xlu0 %2026
        %2030 = vset.pattern.permute.xlu0 0
        %2031 = vperm.xlu0 %2030, %v1909
        %v2032 = vpop.permute.xlu0 %2031
        %2035 = vset.pattern.permute.xlu0 0
        %2036 = vperm.xlu0 %2035, %v1910
        %v2037 = vpop.permute.xlu0 %2036
        %2040 = vset.pattern.permute.xlu0 0
        %2041 = vperm.xlu0 %2040, %v1911
        %v2042 = vpop.permute.xlu0 %2041
        %2045 = vset.pattern.permute.xlu0 0
        %2046 = vperm.xlu0 %2045, %v1912
        %v2047 = vpop.permute.xlu0 %2046
        %2050 = vset.pattern.permute.xlu0 0
        %2051 = vperm.xlu0 %2050, %v1913
        %v2052 = vpop.permute.xlu0 %2051
        %2055 = vset.pattern.permute.xlu0 0
        %2056 = vperm.xlu0 %2055, %v1914
        %v2057 = vpop.permute.xlu0 %2056
        %2060 = vset.pattern.permute.xlu0 0
        %2061 = vperm.xlu0 %2060, %v1915
        %v2062 = vpop.permute.xlu0 %2061
        %2065 = vset.pattern.permute.xlu0 0
        %2066 = vperm.xlu0 %2065, %v1916
        %v2067 = vpop.permute.xlu0 %2066
        %2070 = vset.pattern.permute.xlu0 0
        %2071 = vperm.xlu0 %2070, %v1917
        %v2072 = vpop.permute.xlu0 %2071
        %2075 = vset.pattern.permute.xlu0 0
        %2076 = vperm.xlu0 %2075, %v1918
        %v2077 = vpop.permute.xlu0 %2076
        %2080 = vset.pattern.permute.xlu0 0
        %2081 = vperm.xlu0 %2080, %v1919
        %v2082 = vpop.permute.xlu0 %2081
        %2085 = vset.pattern.permute.xlu0 0
        %2086 = vperm.xlu0 %2085, %v1920
        %v2087 = vpop.permute.xlu0 %2086
        %2090 = vset.pattern.permute.xlu0 0
        %2091 = vperm.xlu0 %2090, %v1921
        %v2092 = vpop.permute.xlu0 %2091
        %2095 = vset.pattern.permute.xlu0 0
        %2096 = vperm.xlu0 %2095, %v1922
        %v2097 = vpop.permute.xlu0 %2096
        %v2099 = vadd.f32 %v2003, %v2022
        %v2100 = vadd.f32 %v2004, %v2027
        %v2101 = vadd.f32 %v2005, %v2032
        %v2102 = vadd.f32 %v2006, %v2037
        %v2103 = vadd.f32 %v2007, %v2042
        %v2104 = vadd.f32 %v2008, %v2047
        %v2105 = vadd.f32 %v2009, %v2052
        %v2106 = vadd.f32 %v2010, %v2057
        %v2107 = vadd.f32 %v2011, %v2062
        %v2108 = vadd.f32 %v2012, %v2067
        %v2109 = vadd.f32 %v2013, %v2072
        %v2110 = vadd.f32 %v2014, %v2077
        %v2111 = vadd.f32 %v2015, %v2082
        %v2112 = vadd.f32 %v2016, %v2087
        %v2113 = vadd.f32 %v2017, %v2092
        %v2114 = vadd.f32 %v2018, %v2097
        %v2115 = vmax.f32 %v2099, 0.0
        %v2116 = vmax.f32 %v2100, 0.0
        %v2117 = vmax.f32 %v2101, 0.0
        %v2118 = vmax.f32 %v2102, 0.0
        %v2119 = vmax.f32 %v2103, 0.0
        %v2120 = vmax.f32 %v2104, 0.0
        %v2121 = vmax.f32 %v2105, 0.0
        %v2122 = vmax.f32 %v2106, 0.0
        %v2123 = vmax.f32 %v2107, 0.0
        %v2124 = vmax.f32 %v2108, 0.0
        %v2125 = vmax.f32 %v2109, 0.0
        %v2126 = vmax.f32 %v2110, 0.0
        %v2127 = vmax.f32 %v2111, 0.0
        %v2128 = vmax.f32 %v2112, 0.0
        %v2129 = vmax.f32 %v2113, 0.0
        %v2130 = vmax.f32 %v2114, 0.0
        %v2131 = vpack.c.bf16 %v2115, %v2115
        %v2132 = vpack.c.bf16 %v2116, %v2116
        %v2133 = vpack.c.bf16 %v2117, %v2117
        %v2134 = vpack.c.bf16 %v2118, %v2118
        %v2135 = vpack.c.bf16 %v2119, %v2119
        %v2136 = vpack.c.bf16 %v2120, %v2120
        %v2137 = vpack.c.bf16 %v2121, %v2121
        %v2138 = vpack.c.bf16 %v2122, %v2122
        %v2139 = vpack.c.bf16 %v2123, %v2123
        %v2140 = vpack.c.bf16 %v2124, %v2124
        %v2141 = vpack.c.bf16 %v2125, %v2125
        %v2142 = vpack.c.bf16 %v2126, %v2126
        %v2143 = vpack.c.bf16 %v2127, %v2127
        %v2144 = vpack.c.bf16 %v2128, %v2128
        %v2145 = vpack.c.bf16 %v2129, %v2129
        %v2146 = vpack.c.bf16 %v2130, %v2130
        %v2147 = vld [vmem:[#allocation5] sm:$0xf]
        %v2148 = vld [vmem:[#allocation5 + $0x4] sm:$0xf]
        %v2149 = vld [vmem:[#allocation5 + $0x8] sm:$0xf]
        %v2150 = vld [vmem:[#allocation5 + $0xc] sm:$0xf]
        %v2151 = vld [vmem:[%s12] sm:$0xff]
        %v2152 = vld [vmem:[%s12 + $0x8] sm:$0xff]
        %v2153 = vld [vmem:[%s12 + $0x10] sm:$0xff]
        %v2154 = vld [vmem:[%s12 + $0x18] sm:$0xff]
        %2156 = vset.pattern.permute.xlu0 0
        %2157 = vperm.xlu0 %2156, %v2151
        %v2158 = vpop.permute.xlu0 %2157
        %2161 = vset.pattern.permute.xlu0 0
        %2162 = vperm.xlu0 %2161, %v2152
        %v2163 = vpop.permute.xlu0 %2162
        %2166 = vset.pattern.permute.xlu0 0
        %2167 = vperm.xlu0 %2166, %v2153
        %v2168 = vpop.permute.xlu0 %2167
        %2171 = vset.pattern.permute.xlu0 0
        %2172 = vperm.xlu0 %2171, %v2154
        %v2173 = vpop.permute.xlu0 %2172
        %v2179 = vunpack.c.l.b16 %v2147
        %v2180 = vunpack.c.l.b16 %v2148
        %v2181 = vunpack.c.l.b16 %v2149
        %v2182 = vunpack.c.l.b16 %v2150
        %v2183 = vpack.c.b16 %v2180, %v2179
        %v2184 = vpack.c.b16 %v2182, %v2181
        %v2189 = vunpack.c.l.b16 %v2131
        %v2190 = vunpack.c.l.b16 %v2132
        %v2191 = vunpack.c.l.b16 %v2133
        %v2192 = vunpack.c.l.b16 %v2134
        %v2193 = vpack.c.b16 %v2190, %v2189
        %v2194 = vpack.c.b16 %v2192, %v2191
        %v2198 = vsel %vm1178, %v2183, 0
        %v2201 = vsel %vm1178, %v2184, 0
        %2203 = vmatpush.bf16.msra.mxu0 0
        %2204 = vmatpush.bf16.msra.mxu0 0
        %2205 = vmatpush.bf16.msra.mxu0 0
        %2206 = vmatpush.bf16.msra.mxu0 0
        %2207 = vmatpush.bf16.msra.mxu0 0
        %2208 = vmatpush.bf16.msra.mxu0 0
        %2209 = vmatpush.bf16.msra.mxu0 %v2194
        %2210 = vmatpush.bf16.msra.mxu0 %v2193
        %2211 = vmatmul.bf16.gmra.mxu0 %v2198
        %v2212 = vpop.f32.mrf.mxu0
        %v2213 = vadd.f32 %v2158, %v2212
        %v2214 = vpop.f32.mrf.mxu0
        %v2215 = vadd.f32 %v2163, %v2214
        %2216 = vmatmul.bf16.gmra.mxu0 %v2201
        %v2217 = vpop.f32.mrf.mxu0
        %v2218 = vadd.f32 %v2168, %v2217
        %v2219 = vpop.f32.mrf.mxu0
        %v2220 = vadd.f32 %v2173, %v2219
        %2221 = vdwg.mxu0
        %v2226 = vunpack.c.l.b16 %v2135
        %v2227 = vunpack.c.l.b16 %v2136
        %v2228 = vunpack.c.l.b16 %v2137
        %v2229 = vunpack.c.l.b16 %v2138
        %v2230 = vpack.c.b16 %v2227, %v2226
        %v2231 = vpack.c.b16 %v2229, %v2228
        %2234 = vmatpush.bf16.msra.mxu0 0
        %2235 = vmatpush.bf16.msra.mxu0 0
        %2236 = vmatpush.bf16.msra.mxu0 0
        %2237 = vmatpush.bf16.msra.mxu0 0
        %2238 = vmatpush.bf16.msra.mxu0 0
        %2239 = vmatpush.bf16.msra.mxu0 0
        %2240 = vmatpush.bf16.msra.mxu0 %v2231
        %2241 = vmatpush.bf16.msra.mxu0 %v2230
        %2242 = vmatmul.bf16.gmra.mxu0 %v2198
        %v2243 = vpop.f32.mrf.mxu0
        %v2244 = vadd.f32 %v2158, %v2243
        %v2245 = vpop.f32.mrf.mxu0
        %v2246 = vadd.f32 %v2163, %v2245
        %2247 = vmatmul.bf16.gmra.mxu0 %v2201
        %v2248 = vpop.f32.mrf.mxu0
        %v2249 = vadd.f32 %v2168, %v2248
        %v2250 = vpop.f32.mrf.mxu0
        %v2251 = vadd.f32 %v2173, %v2250
        %2252 = vdwg.mxu0
        %v2257 = vunpack.c.l.b16 %v2139
        %v2258 = vunpack.c.l.b16 %v2140
        %v2259 = vunpack.c.l.b16 %v2141
        %v2260 = vunpack.c.l.b16 %v2142
        %v2261 = vpack.c.b16 %v2258, %v2257
        %v2262 = vpack.c.b16 %v2260, %v2259
        %2265 = vmatpush.bf16.msra.mxu0 0
        %2266 = vmatpush.bf16.msra.mxu0 0
        %2267 = vmatpush.bf16.msra.mxu0 0
        %2268 = vmatpush.bf16.msra.mxu0 0
        %2269 = vmatpush.bf16.msra.mxu0 0
        %2270 = vmatpush.bf16.msra.mxu0 0
        %2271 = vmatpush.bf16.msra.mxu0 %v2262
        %2272 = vmatpush.bf16.msra.mxu0 %v2261
        %2273 = vmatmul.bf16.gmra.mxu0 %v2198
        %v2274 = vpop.f32.mrf.mxu0
        %v2275 = vadd.f32 %v2158, %v2274
        %v2276 = vpop.f32.mrf.mxu0
        %v2277 = vadd.f32 %v2163, %v2276
        %2278 = vmatmul.bf16.gmra.mxu0 %v2201
        %v2279 = vpop.f32.mrf.mxu0
        %v2280 = vadd.f32 %v2168, %v2279
        %v2281 = vpop.f32.mrf.mxu0
        %v2282 = vadd.f32 %v2173, %v2281
        %2283 = vdwg.mxu0
        %v2288 = vunpack.c.l.b16 %v2143
        %v2289 = vunpack.c.l.b16 %v2144
        %v2290 = vunpack.c.l.b16 %v2145
        %v2291 = vunpack.c.l.b16 %v2146
        %v2292 = vpack.c.b16 %v2289, %v2288
        %v2293 = vpack.c.b16 %v2291, %v2290
        %2296 = vmatpush.bf16.msra.mxu0 0
        %2297 = vmatpush.bf16.msra.mxu0 0
        %2298 = vmatpush.bf16.msra.mxu0 0
        %2299 = vmatpush.bf16.msra.mxu0 0
        %2300 = vmatpush.bf16.msra.mxu0 0
        %2301 = vmatpush.bf16.msra.mxu0 0
        %2302 = vmatpush.bf16.msra.mxu0 %v2293
        %2303 = vmatpush.bf16.msra.mxu0 %v2292
        %2304 = vmatmul.bf16.gmra.mxu0 %v2198
        %v2305 = vpop.f32.mrf.mxu0
        %v2306 = vadd.f32 %v2158, %v2305
        %v2307 = vpop.f32.mrf.mxu0
        %v2308 = vadd.f32 %v2163, %v2307
        %2309 = vmatmul.bf16.gmra.mxu0 %v2201
        %v2310 = vpop.f32.mrf.mxu0
        %v2311 = vadd.f32 %v2168, %v2310
        %v2312 = vpop.f32.mrf.mxu0
        %v2313 = vadd.f32 %v2173, %v2312
        %2314 = vdwg.mxu0
        %v2315 = vld [vmem:[%s476] sm:$0xf]
        %v2316 = vld [vmem:[%s476 + $0x4] sm:$0xf]
        %v2317 = vld [vmem:[%s476 + $0x8] sm:$0xf]
        %v2318 = vld [vmem:[%s476 + $0xc] sm:$0xf]
        %v2319 = vld [vmem:[%s476 + $0x10] sm:$0xf]
        %v2320 = vld [vmem:[%s476 + $0x14] sm:$0xf]
        %v2321 = vld [vmem:[%s476 + $0x18] sm:$0xf]
        %v2322 = vld [vmem:[%s476 + $0x1c] sm:$0xf]
        %v2323 = vld [vmem:[%s476 + $0x20] sm:$0xf]
        %v2324 = vld [vmem:[%s476 + $0x24] sm:$0xf]
        %v2325 = vld [vmem:[%s476 + $0x28] sm:$0xf]
        %v2326 = vld [vmem:[%s476 + $0x2c] sm:$0xf]
        %v2327 = vld [vmem:[%s476 + $0x30] sm:$0xf]
        %v2328 = vld [vmem:[%s476 + $0x34] sm:$0xf]
        %v2329 = vld [vmem:[%s476 + $0x38] sm:$0xf]
        %v2330 = vld [vmem:[%s476 + $0x3c] sm:$0xf]
        %v2331 = vunpack.c.l.bf16 %v2315
        %v2332 = vunpack.c.l.bf16 %v2316
        %v2333 = vunpack.c.l.bf16 %v2317
        %v2334 = vunpack.c.l.bf16 %v2318
        %v2335 = vunpack.c.l.bf16 %v2319
        %v2336 = vunpack.c.l.bf16 %v2320
        %v2337 = vunpack.c.l.bf16 %v2321
        %v2338 = vunpack.c.l.bf16 %v2322
        %v2339 = vunpack.c.l.bf16 %v2323
        %v2340 = vunpack.c.l.bf16 %v2324
        %v2341 = vunpack.c.l.bf16 %v2325
        %v2342 = vunpack.c.l.bf16 %v2326
        %v2343 = vunpack.c.l.bf16 %v2327
        %v2344 = vunpack.c.l.bf16 %v2328
        %v2345 = vunpack.c.l.bf16 %v2329
        %v2346 = vunpack.c.l.bf16 %v2330
        %v2347 = vadd.f32 %v2213, %v2331
        %v2348 = vadd.f32 %v2215, %v2332
        %v2349 = vadd.f32 %v2218, %v2333
        %v2350 = vadd.f32 %v2220, %v2334
        %v2351 = vadd.f32 %v2244, %v2335
        %v2352 = vadd.f32 %v2246, %v2336
        %v2353 = vadd.f32 %v2249, %v2337
        %v2354 = vadd.f32 %v2251, %v2338
        %v2355 = vadd.f32 %v2275, %v2339
        %v2356 = vadd.f32 %v2277, %v2340
        %v2357 = vadd.f32 %v2280, %v2341
        %v2358 = vadd.f32 %v2282, %v2342
        %v2359 = vadd.f32 %v2306, %v2343
        %v2360 = vadd.f32 %v2308, %v2344
        %v2361 = vadd.f32 %v2311, %v2345
        %v2362 = vadd.f32 %v2313, %v2346
        %2363 = vst [vmem:[%s470] sm:$0xff] %v2347
        %2364 = vst [vmem:[%s470 + $0x8] sm:$0xff] %v2348
        %2365 = vst [vmem:[%s470 + $0x10] sm:$0xff] %v2349
        %2366 = vst [vmem:[%s470 + $0x18] sm:$0xff] %v2350
        %2367 = vst [vmem:[%s470 + $0x20] sm:$0xff] %v2351
        %2368 = vst [vmem:[%s470 + $0x28] sm:$0xff] %v2352
        %2369 = vst [vmem:[%s470 + $0x30] sm:$0xff] %v2353
        %2370 = vst [vmem:[%s470 + $0x38] sm:$0xff] %v2354
        %2371 = vst [vmem:[%s470 + $0x40] sm:$0xff] %v2355
        %2372 = vst [vmem:[%s470 + $0x48] sm:$0xff] %v2356
        %2373 = vst [vmem:[%s470 + $0x50] sm:$0xff] %v2357
        %2374 = vst [vmem:[%s470 + $0x58] sm:$0xff] %v2358
        %2375 = vst [vmem:[%s470 + $0x60] sm:$0xff] %v2359
        %2376 = vst [vmem:[%s470 + $0x68] sm:$0xff] %v2360
        %2377 = vst [vmem:[%s470 + $0x70] sm:$0xff] %v2361
        %2378 = vst [vmem:[%s470 + $0x78] sm:$0xff] %v2362
        %s2379 = sand.u32 %s315, 1
        %s2380 = scalar_lea.sflag [#allocation4], %s2379
        %s2381 = sand.u32 %s315, 1
        %s2382 = smul.addr %s2381, 128
        %s2383 = scalar_lea.vmem [#allocation7], %s2382
        // Predicated region
        $region81: #{tpu_custom_call.1} parent=71 // pred_check
          %p2384 = pneg %p325
        $region82: #{tpu_custom_call.1} parent=71 // pred_check_branch
          %2386 = sbr.rel (%p2384) target = $region84
        $region83: #{tpu_custom_call.1} parent=71 // pred_region
          %s2387 = smul.u32 4, %s29
          %2389 = vsyncadd %s2380, 0
          %s2390 = smul.addr %s2387, 4
          %s2391 = smul.addr %s2390, 8
          %s2392 = scalar_lea.hbm %s13, %s2391
          %s2393 = sshll.u32 %s2383, 4
          %s2394 = int_to_ptr.vmem [resolvable:$true] %s2393
          %s2395 = sshll.u32 %s2392, 4
          %s2396 = int_to_ptr.hbm [resolvable:$true] %s2395
          %2401 = dma.vmem_to_hbm [thread:$0]  %s2394, 2048, %s2396, %s2380, 128, 128, 8
        $region84: #{tpu_custom_call.1} parent=71 // pred_fallthru
          _
      $region72: #{tpu_custom_call.1} parent=5 // pred_fallthru
        _
      %p2402 = scmp.le.s32.totalorder 2, %s24
      // Predicated region
      $region85: #{tpu_custom_call.1} parent=5 // pred_check
        %p2403 = pneg %p2402
      $region86: #{tpu_custom_call.1} parent=5 // pred_check_branch
        %2405 = sbr.rel (%p2403) target = $region88
      $region87: #{tpu_custom_call.1} parent=5 // pred_region
        %s2406 = ssub.s32 %s24, 2
        // Predicated region
        $region89: #{tpu_custom_call.1} parent=87 // pred_check
          %p2407 = pneg %p331
        $region90: #{tpu_custom_call.1} parent=87 // pred_check_branch
          %2409 = sbr.rel (%p2407) target = $region92
        $region91: #{tpu_custom_call.1} parent=87 // pred_region
          %s2410 = sand.u32 %s316, 1
          %s2411 = scalar_lea.sflag [#allocation4], %s2410
          %s2412 = sand.u32 %s316, 1
          %s2413 = smul.addr %s2412, 128
          %s2414 = scalar_lea.vmem [#allocation7], %s2413
          %2416 = dma.done %s2411, 2048
        $region92: #{tpu_custom_call.1} parent=87 // pred_fallthru
          _
      $region88: #{tpu_custom_call.1} parent=5 // pred_fallthru
        _
    $region6: #{tpu_custom_call.1} parent=1 // loop_footer
      %s28 = sadd.s32 1, %s24
    $region7: #{tpu_custom_call.1} parent=1 // loop_footer_branch
      %23 = sbr.rel target = $region3
    $region8: #{tpu_custom_call.1} parent=1 // loop_exit
      _
    %2417 = vsyncpa [#allocation3], 1
    %s2418 = scalar_lea.sflag [#allocation3], 1
    %2419 = vsyncpa %s2418, 1
    %2420 = vsyncpa [#allocation6], 1
    %2421 = vsyncpa [#allocation4], 1
    %s2422 = scalar_lea.sflag [#allocation4], 1
    %2423 = vsyncpa %s2422, 1

// kernel: tpu_custom_call.1
$region0: #{tpu_custom_call.1}
  #allocation0 [shape = 'u32[]', space=smem, size = 0x4, offset = 0x4, fixed_abs, tag = 'smem constant byte address 0x4 - core index']
  #allocation1 [shape = 'u32[72,128]{1,0:T(1,128)}', space=vmem, size = 0x9000, scoped, tag = 'internal scratch']
  %s0 = inlined_call_operand.hbm [shape: bf16[8,32,128], index: 0, kind: input, shape index: {}]
  %s1 = inlined_call_operand.vmem [shape: f32[1,32,1], index: 1, kind: input, shape index: {}]
  %s2 = inlined_call_operand.vmem [shape: f32[1,32,1], index: 2, kind: input, shape index: {}]
  %s3 = inlined_call_operand.vmem [shape: bf16[32,32], index: 3, kind: input, shape index: {}]
  %s4 = inlined_call_operand.vmem [shape: f32[1,32,1], index: 4, kind: input, shape index: {}]
  %s5 = inlined_call_operand.vmem [shape: f32[1,128], index: 5, kind: input, shape index: {}]
  %s6 = inlined_call_operand.vmem [shape: f32[1,128], index: 6, kind: input, shape index: {}]
  %s7 = inlined_call_operand.vmem [shape: bf16[128,128], index: 7, kind: input, shape index: {}]
  %s8 = inlined_call_operand.vmem [shape: f32[1,128], index: 8, kind: input, shape index: {}]
  %s9 = inlined_call_operand.vmem [shape: f32[1,32,1], index: 9, kind: input, shape index: {}]
  %s10 = inlined_call_operand.vmem [shape: f32[1,32,1], index: 10, kind: input, shape index: {}]
  %s11 = inlined_call_operand.vmem [shape: bf16[32,32], index: 11, kind: input, shape index: {}]
  %s12 = inlined_call_operand.vmem [shape: f32[1,32,1], index: 12, kind: input, shape index: {}]
  %s13 = inlined_call_operand.hbm [shape: f32[8,32,128], index: 13, kind: output, shape index: {}]
  %s14 = sld [smem:[#allocation0]]
  $region89: #{tpu_custom_call.1} parent=0
    _
  %s16 = ssub.s32 1, %s14
  %s17 = scalar_select 0, %s16, %s14
  $region1: #{tpu_custom_call.1} parent=0
    #allocation2 [shape = 'u8[65536]{0}', space=vmem, size = 0x10000, scoped, tag = 'input window, operand 0']
    #allocation3 [shape = 's32[2]{0}', space=sflag, size = 0x8, scoped, tag = 'scoped memory for tpu_custom_call.1']
    #allocation4 [shape = 's32[2]{0}', space=sflag, size = 0x8, scoped, tag = 'scoped memory for tpu_custom_call.1']
    #allocation5 [shape = 'u8[131072]{0}', space=vmem, size = 0x20000, scoped, tag = 'output window, operand 0']
    %18 = vsyncpa [#allocation3], 0
    %s19 = scalar_lea.sflag [#allocation3], 1
    %20 = vsyncpa %s19, 0
    %21 = vsyncpa [#allocation4], 0
    %s22 = scalar_lea.sflag [#allocation4], 1
    %23 = vsyncpa %s22, 0
    loop: start=0, step=1, limit=4
    $region2: #{tpu_custom_call.1} parent=1 // loop_pre_header
      _
    $region3: #{tpu_custom_call.1} parent=1 // loop_header
      %s25 = sphi 0, %s29
      %p26 = scmp.ge.s32.totalorder %s25, 4
      %s35 = sphi 0, %s37
      %s38 = sphi 0, %s35
      %s39 = sphi 0, %s38
      %s55 = sphi 0, %s39
      %s59 = sphi 0, %s59
      %s61 = sphi 0, %s59
      %s62 = sphi 0, %s61
      %s76 = sphi 0, %s62
      %s80 = sphi 0, %s80
      %s82 = sphi 0, %s80
      %s83 = sphi 0, %s82
      %s97 = sphi 0, %s83
      %s101 = sphi 0, %s101
      %s103 = sphi 0, %s101
      %s104 = sphi 0, %s103
      %s118 = sphi 0, %s104
      %s122 = sphi 0, %s122
      %s124 = sphi 0, %s122
      %s125 = sphi 0, %s124
      %s139 = sphi 0, %s125
      %s143 = sphi 0, %s143
      %s145 = sphi 0, %s143
      %s146 = sphi 0, %s145
      %s160 = sphi 0, %s146
      %s164 = sphi 0, %s164
      %s166 = sphi 0, %s164
      %s167 = sphi 0, %s166
      %s181 = sphi 0, %s167
      %s185 = sphi 0, %s185
      %s187 = sphi 0, %s185
      %s188 = sphi 0, %s187
      %s202 = sphi 0, %s188
      %s206 = sphi 0, %s206
      %s208 = sphi 0, %s206
      %s209 = sphi 0, %s208
      %s223 = sphi 0, %s209
      %s227 = sphi 0, %s227
      %s229 = sphi 0, %s227
      %s230 = sphi 0, %s229
      %s244 = sphi 0, %s230
      %s248 = sphi 0, %s248
      %s250 = sphi 0, %s248
      %s251 = sphi 0, %s250
      %s265 = sphi 0, %s251
      %s269 = sphi 0, %s269
      %s271 = sphi 0, %s269
      %s272 = sphi 0, %s271
      %s286 = sphi 0, %s272
      %s290 = sphi 0, %s290
      %s292 = sphi 0, %s290
      %s293 = sphi 0, %s292
      %s307 = sphi 0, %s293
      %s313 = sphi 0, %s315
      %s316 = sphi 0, %s313
      %s317 = sphi 0, %s316
      %s333 = sphi 0, %s317
    $region4: #{tpu_custom_call.1} parent=1 // loop_header_branch
      %28 = sbr.rel (%p26) target = $region8
    $region5: #{tpu_custom_call.1} parent=1 // loop_body
      %s30 = ssub.s32 %s25, 1
      %s31 = ssub.s32 %s25, 2
      %s32 = sadd.s32 %s25, 1
      %s33 = ssub.s32 %s25, %s32
      %p34 = scmp.eq.s32.totalorder %s33, 0
      %s36 = sadd.s32 %s35, 1
      %s37 = scalar_select %p34, %s35, %s36
      %p40 = pneg %p34
      %p41 = scmp.eq.s32.totalorder %s25, 1
      %p42 = por %p40, %p41
      %p43 = scmp.ne.s32.totalorder %s35, %s38
      %p44 = scmp.eq.s32.totalorder %s25, 0
      %p45 = por %p43, %p44
      %p46 = scmp.ne.s32.totalorder %s35, %s38
      %p47 = scmp.eq.s32.totalorder %s30, 1
      %p48 = por %p46, %p47
      %p49 = scmp.ne.s32.totalorder %s38, %s39
      %p50 = scmp.eq.s32.totalorder %s30, 0
      %p51 = por %p49, %p50
      %p52 = scmp.ne.s32.totalorder %s38, %s39
      %p53 = scmp.eq.s32.totalorder %s31, 1
      %p54 = por %p52, %p53
      %p56 = scmp.ne.s32.totalorder %s39, %s55
      %p57 = scmp.eq.s32.totalorder %s31, 0
      %p58 = por %p56, %p57
      %s60 = sadd.s32 %s59, 1
      %p63 = scmp.eq.s32.totalorder %s25, 1
      %p64 = scmp.ne.s32.totalorder %s59, %s61
      %p65 = scmp.eq.s32.totalorder %s25, 0
      %p66 = por %p64, %p65
      %p67 = scmp.ne.s32.totalorder %s59, %s61
      %p68 = scmp.eq.s32.totalorder %s30, 1
      %p69 = por %p67, %p68
      %p70 = scmp.ne.s32.totalorder %s61, %s62
      %p71 = scmp.eq.s32.totalorder %s30, 0
      %p72 = por %p70, %p71
      %p73 = scmp.ne.s32.totalorder %s61, %s62
      %p74 = scmp.eq.s32.totalorder %s31, 1
      %p75 = por %p73, %p74
      %p77 = scmp.ne.s32.totalorder %s62, %s76
      %p78 = scmp.eq.s32.totalorder %s31, 0
      %p79 = por %p77, %p78
      %s81 = sadd.s32 %s80, 1
      %p84 = scmp.eq.s32.totalorder %s25, 1
      %p85 = scmp.ne.s32.totalorder %s80, %s82
      %p86 = scmp.eq.s32.totalorder %s25, 0
      %p87 = por %p85, %p86
      %p88 = scmp.ne.s32.totalorder %s80, %s82
      %p89 = scmp.eq.s32.totalorder %s30, 1
      %p90 = por %p88, %p89
      %p91 = scmp.ne.s32.totalorder %s82, %s83
      %p92 = scmp.eq.s32.totalorder %s30, 0
      %p93 = por %p91, %p92
      %p94 = scmp.ne.s32.totalorder %s82, %s83
      %p95 = scmp.eq.s32.totalorder %s31, 1
      %p96 = por %p94, %p95
      %p98 = scmp.ne.s32.totalorder %s83, %s97
      %p99 = scmp.eq.s32.totalorder %s31, 0
      %p100 = por %p98, %p99
      %s102 = sadd.s32 %s101, 1
      %p105 = scmp.eq.s32.totalorder %s25, 1
      %p106 = scmp.ne.s32.totalorder %s101, %s103
      %p107 = scmp.eq.s32.totalorder %s25, 0
      %p108 = por %p106, %p107
      %p109 = scmp.ne.s32.totalorder %s101, %s103
      %p110 = scmp.eq.s32.totalorder %s30, 1
      %p111 = por %p109, %p110
      %p112 = scmp.ne.s32.totalorder %s103, %s104
      %p113 = scmp.eq.s32.totalorder %s30, 0
      %p114 = por %p112, %p113
      %p115 = scmp.ne.s32.totalorder %s103, %s104
      %p116 = scmp.eq.s32.totalorder %s31, 1
      %p117 = por %p115, %p116
      %p119 = scmp.ne.s32.totalorder %s104, %s118
      %p120 = scmp.eq.s32.totalorder %s31, 0
      %p121 = por %p119, %p120
      %s123 = sadd.s32 %s122, 1
      %p126 = scmp.eq.s32.totalorder %s25, 1
      %p127 = scmp.ne.s32.totalorder %s122, %s124
      %p128 = scmp.eq.s32.totalorder %s25, 0
      %p129 = por %p127, %p128
      %p130 = scmp.ne.s32.totalorder %s122, %s124
      %p131 = scmp.eq.s32.totalorder %s30, 1
      %p132 = por %p130, %p131
      %p133 = scmp.ne.s32.totalorder %s124, %s125
      %p134 = scmp.eq.s32.totalorder %s30, 0
      %p135 = por %p133, %p134
      %p136 = scmp.ne.s32.totalorder %s124, %s125
      %p137 = scmp.eq.s32.totalorder %s31, 1
      %p138 = por %p136, %p137
      %p140 = scmp.ne.s32.totalorder %s125, %s139
      %p141 = scmp.eq.s32.totalorder %s31, 0
      %p142 = por %p140, %p141
      %s144 = sadd.s32 %s143, 1
      %p147 = scmp.eq.s32.totalorder %s25, 1
      %p148 = scmp.ne.s32.totalorder %s143, %s145
      %p149 = scmp.eq.s32.totalorder %s25, 0
      %p150 = por %p148, %p149
      %p151 = scmp.ne.s32.totalorder %s143, %s145
      %p152 = scmp.eq.s32.totalorder %s30, 1
      %p153 = por %p151, %p152
      %p154 = scmp.ne.s32.totalorder %s145, %s146
      %p155 = scmp.eq.s32.totalorder %s30, 0
      %p156 = por %p154, %p155
      %p157 = scmp.ne.s32.totalorder %s145, %s146
      %p158 = scmp.eq.s32.totalorder %s31, 1
      %p159 = por %p157, %p158
      %p161 = scmp.ne.s32.totalorder %s146, %s160
      %p162 = scmp.eq.s32.totalorder %s31, 0
      %p163 = por %p161, %p162
      %s165 = sadd.s32 %s164, 1
      %p168 = scmp.eq.s32.totalorder %s25, 1
      %p169 = scmp.ne.s32.totalorder %s164, %s166
      %p170 = scmp.eq.s32.totalorder %s25, 0
      %p171 = por %p169, %p170
      %p172 = scmp.ne.s32.totalorder %s164, %s166
      %p173 = scmp.eq.s32.totalorder %s30, 1
      %p174 = por %p172, %p173
      %p175 = scmp.ne.s32.totalorder %s166, %s167
      %p176 = scmp.eq.s32.totalorder %s30, 0
      %p177 = por %p175, %p176
      %p178 = scmp.ne.s32.totalorder %s166, %s167
      %p179 = scmp.eq.s32.totalorder %s31, 1
      %p180 = por %p178, %p179
      %p182 = scmp.ne.s32.totalorder %s167, %s181
      %p183 = scmp.eq.s32.totalorder %s31, 0
      %p184 = por %p182, %p183
      %s186 = sadd.s32 %s185, 1
      %p189 = scmp.eq.s32.totalorder %s25, 1
      %p190 = scmp.ne.s32.totalorder %s185, %s187
      %p191 = scmp.eq.s32.totalorder %s25, 0
      %p192 = por %p190, %p191
      %p193 = scmp.ne.s32.totalorder %s185, %s187
      %p194 = scmp.eq.s32.totalorder %s30, 1
      %p195 = por %p193, %p194
      %p196 = scmp.ne.s32.totalorder %s187, %s188
      %p197 = scmp.eq.s32.totalorder %s30, 0
      %p198 = por %p196, %p197
      %p199 = scmp.ne.s32.totalorder %s187, %s188
      %p200 = scmp.eq.s32.totalorder %s31, 1
      %p201 = por %p199, %p200
      %p203 = scmp.ne.s32.totalorder %s188, %s202
      %p204 = scmp.eq.s32.totalorder %s31, 0
      %p205 = por %p203, %p204
      %s207 = sadd.s32 %s206, 1
      %p210 = scmp.eq.s32.totalorder %s25, 1
      %p211 = scmp.ne.s32.totalorder %s206, %s208
      %p212 = scmp.eq.s32.totalorder %s25, 0
      %p213 = por %p211, %p212
      %p214 = scmp.ne.s32.totalorder %s206, %s208
      %p215 = scmp.eq.s32.totalorder %s30, 1
      %p216 = por %p214, %p215
      %p217 = scmp.ne.s32.totalorder %s208, %s209
      %p218 = scmp.eq.s32.totalorder %s30, 0
      %p219 = por %p217, %p218
      %p220 = scmp.ne.s32.totalorder %s208, %s209
      %p221 = scmp.eq.s32.totalorder %s31, 1
      %p222 = por %p220, %p221
      %p224 = scmp.ne.s32.totalorder %s209, %s223
      %p225 = scmp.eq.s32.totalorder %s31, 0
      %p226 = por %p224, %p225
      %s228 = sadd.s32 %s227, 1
      %p231 = scmp.eq.s32.totalorder %s25, 1
      %p232 = scmp.ne.s32.totalorder %s227, %s229
      %p233 = scmp.eq.s32.totalorder %s25, 0
      %p234 = por %p232, %p233
      %p235 = scmp.ne.s32.totalorder %s227, %s229
      %p236 = scmp.eq.s32.totalorder %s30, 1
      %p237 = por %p235, %p236
      %p238 = scmp.ne.s32.totalorder %s229, %s230
      %p239 = scmp.eq.s32.totalorder %s30, 0
      %p240 = por %p238, %p239
      %p241 = scmp.ne.s32.totalorder %s229, %s230
      %p242 = scmp.eq.s32.totalorder %s31, 1
      %p243 = por %p241, %p242
      %p245 = scmp.ne.s32.totalorder %s230, %s244
      %p246 = scmp.eq.s32.totalorder %s31, 0
      %p247 = por %p245, %p246
      %s249 = sadd.s32 %s248, 1
      %p252 = scmp.eq.s32.totalorder %s25, 1
      %p253 = scmp.ne.s32.totalorder %s248, %s250
      %p254 = scmp.eq.s32.totalorder %s25, 0
      %p255 = por %p253, %p254
      %p256 = scmp.ne.s32.totalorder %s248, %s250
      %p257 = scmp.eq.s32.totalorder %s30, 1
      %p258 = por %p256, %p257
      %p259 = scmp.ne.s32.totalorder %s250, %s251
      %p260 = scmp.eq.s32.totalorder %s30, 0
      %p261 = por %p259, %p260
      %p262 = scmp.ne.s32.totalorder %s250, %s251
      %p263 = scmp.eq.s32.totalorder %s31, 1
      %p264 = por %p262, %p263
      %p266 = scmp.ne.s32.totalorder %s251, %s265
      %p267 = scmp.eq.s32.totalorder %s31, 0
      %p268 = por %p266, %p267
      %s270 = sadd.s32 %s269, 1
      %p273 = scmp.eq.s32.totalorder %s25, 1
      %p274 = scmp.ne.s32.totalorder %s269, %s271
      %p275 = scmp.eq.s32.totalorder %s25, 0
      %p276 = por %p274, %p275
      %p277 = scmp.ne.s32.totalorder %s269, %s271
      %p278 = scmp.eq.s32.totalorder %s30, 1
      %p279 = por %p277, %p278
      %p280 = scmp.ne.s32.totalorder %s271, %s272
      %p281 = scmp.eq.s32.totalorder %s30, 0
      %p282 = por %p280, %p281
      %p283 = scmp.ne.s32.totalorder %s271, %s272
      %p284 = scmp.eq.s32.totalorder %s31, 1
      %p285 = por %p283, %p284
      %p287 = scmp.ne.s32.totalorder %s272, %s286
      %p288 = scmp.eq.s32.totalorder %s31, 0
      %p289 = por %p287, %p288
      %s291 = sadd.s32 %s290, 1
      %p294 = scmp.eq.s32.totalorder %s25, 1
      %p295 = scmp.ne.s32.totalorder %s290, %s292
      %p296 = scmp.eq.s32.totalorder %s25, 0
      %p297 = por %p295, %p296
      %p298 = scmp.ne.s32.totalorder %s290, %s292
      %p299 = scmp.eq.s32.totalorder %s30, 1
      %p300 = por %p298, %p299
      %p301 = scmp.ne.s32.totalorder %s292, %s293
      %p302 = scmp.eq.s32.totalorder %s30, 0
      %p303 = por %p301, %p302
      %p304 = scmp.ne.s32.totalorder %s292, %s293
      %p305 = scmp.eq.s32.totalorder %s31, 1
      %p306 = por %p304, %p305
      %p308 = scmp.ne.s32.totalorder %s293, %s307
      %p309 = scmp.eq.s32.totalorder %s31, 0
      %p310 = por %p308, %p309
      %s311 = ssub.s32 %s25, %s32
      %p312 = scmp.eq.s32.totalorder %s311, 0
      %s314 = sadd.s32 %s313, 1
      %s315 = scalar_select %p312, %s313, %s314
      %p318 = pneg %p312
      %p319 = scmp.eq.s32.totalorder %s25, 1
      %p320 = por %p318, %p319
      %p321 = scmp.ne.s32.totalorder %s313, %s316
      %p322 = scmp.eq.s32.totalorder %s25, 0
      %p323 = por %p321, %p322
      %p324 = scmp.ne.s32.totalorder %s313, %s316
      %p325 = scmp.eq.s32.totalorder %s30, 1
      %p326 = por %p324, %p325
      %p327 = scmp.ne.s32.totalorder %s316, %s317
      %p328 = scmp.eq.s32.totalorder %s30, 0
      %p329 = por %p327, %p328
      %p330 = scmp.ne.s32.totalorder %s316, %s317
      %p331 = scmp.eq.s32.totalorder %s31, 1
      %p332 = por %p330, %p331
      %p334 = scmp.ne.s32.totalorder %s317, %s333
      %p335 = scmp.eq.s32.totalorder %s31, 0
      %p336 = por %p334, %p335
      %p337 = scmp.le.s32.totalorder 1, %s25
      %p338 = scmp.lt.s32.totalorder %s25, 3
      %p339 = pnand %p337, %p338
      %p340 = pneg %p339
      // Predicated region
      $region9: #{tpu_custom_call.1} parent=5 // pred_check
        _
      $region10: #{tpu_custom_call.1} parent=5 // pred_check_branch
        %342 = sbr.rel (%p339) target = $region12
      $region11: #{tpu_custom_call.1} parent=5 // pred_region
        %s343 = ssub.s32 %s25, 1
        // Predicated region
        $region13: #{tpu_custom_call.1} parent=11 // pred_check
          %p344 = pneg %p72
        $region14: #{tpu_custom_call.1} parent=11 // pred_check_branch
          %346 = sbr.rel (%p344) target = $region16
        $region15: #{tpu_custom_call.1} parent=11 // pred_region
          _
        $region16: #{tpu_custom_call.1} parent=11 // pred_fallthru
          _
        // Predicated region
        $region17: #{tpu_custom_call.1} parent=11 // pred_check
          %p347 = pneg %p93
        $region18: #{tpu_custom_call.1} parent=11 // pred_check_branch
          %349 = sbr.rel (%p347) target = $region20
        $region19: #{tpu_custom_call.1} parent=11 // pred_region
          _
        $region20: #{tpu_custom_call.1} parent=11 // pred_fallthru
          _
        // Predicated region
        $region21: #{tpu_custom_call.1} parent=11 // pred_check
          %p350 = pneg %p114
        $region22: #{tpu_custom_call.1} parent=11 // pred_check_branch
          %352 = sbr.rel (%p350) target = $region24
        $region23: #{tpu_custom_call.1} parent=11 // pred_region
          _
        $region24: #{tpu_custom_call.1} parent=11 // pred_fallthru
          _
        // Predicated region
        $region25: #{tpu_custom_call.1} parent=11 // pred_check
          %p353 = pneg %p135
        $region26: #{tpu_custom_call.1} parent=11 // pred_check_branch
          %355 = sbr.rel (%p353) target = $region28
        $region27: #{tpu_custom_call.1} parent=11 // pred_region
          _
        $region28: #{tpu_custom_call.1} parent=11 // pred_fallthru
          _
        // Predicated region
        $region29: #{tpu_custom_call.1} parent=11 // pred_check
          %p356 = pneg %p156
        $region30: #{tpu_custom_call.1} parent=11 // pred_check_branch
          %358 = sbr.rel (%p356) target = $region32
        $region31: #{tpu_custom_call.1} parent=11 // pred_region
          _
        $region32: #{tpu_custom_call.1} parent=11 // pred_fallthru
          _
        // Predicated region
        $region33: #{tpu_custom_call.1} parent=11 // pred_check
          %p359 = pneg %p177
        $region34: #{tpu_custom_call.1} parent=11 // pred_check_branch
          %361 = sbr.rel (%p359) target = $region36
        $region35: #{tpu_custom_call.1} parent=11 // pred_region
          _
        $region36: #{tpu_custom_call.1} parent=11 // pred_fallthru
          _
        // Predicated region
        $region37: #{tpu_custom_call.1} parent=11 // pred_check
          %p362 = pneg %p198
        $region38: #{tpu_custom_call.1} parent=11 // pred_check_branch
          %364 = sbr.rel (%p362) target = $region40
        $region39: #{tpu_custom_call.1} parent=11 // pred_region
          _
        $region40: #{tpu_custom_call.1} parent=11 // pred_fallthru
          _
        // Predicated region
        $region41: #{tpu_custom_call.1} parent=11 // pred_check
          %p365 = pneg %p219
        $region42: #{tpu_custom_call.1} parent=11 // pred_check_branch
          %367 = sbr.rel (%p365) target = $region44
        $region43: #{tpu_custom_call.1} parent=11 // pred_region
          _
        $region44: #{tpu_custom_call.1} parent=11 // pred_fallthru
          _
        // Predicated region
        $region45: #{tpu_custom_call.1} parent=11 // pred_check
          %p368 = pneg %p240
        $region46: #{tpu_custom_call.1} parent=11 // pred_check_branch
          %370 = sbr.rel (%p368) target = $region48
        $region47: #{tpu_custom_call.1} parent=11 // pred_region
          _
        $region48: #{tpu_custom_call.1} parent=11 // pred_fallthru
          _
        // Predicated region
        $region49: #{tpu_custom_call.1} parent=11 // pred_check
          %p371 = pneg %p261
        $region50: #{tpu_custom_call.1} parent=11 // pred_check_branch
          %373 = sbr.rel (%p371) target = $region52
        $region51: #{tpu_custom_call.1} parent=11 // pred_region
          _
        $region52: #{tpu_custom_call.1} parent=11 // pred_fallthru
          _
        // Predicated region
        $region53: #{tpu_custom_call.1} parent=11 // pred_check
          %p374 = pneg %p282
        $region54: #{tpu_custom_call.1} parent=11 // pred_check_branch
          %376 = sbr.rel (%p374) target = $region56
        $region55: #{tpu_custom_call.1} parent=11 // pred_region
          _
        $region56: #{tpu_custom_call.1} parent=11 // pred_fallthru
          _
        // Predicated region
        $region57: #{tpu_custom_call.1} parent=11 // pred_check
          %p377 = pneg %p303
        $region58: #{tpu_custom_call.1} parent=11 // pred_check_branch
          %379 = sbr.rel (%p377) target = $region60
        $region59: #{tpu_custom_call.1} parent=11 // pred_region
          _
        $region60: #{tpu_custom_call.1} parent=11 // pred_fallthru
          _
      $region12: #{tpu_custom_call.1} parent=5 // pred_fallthru
        _
      %p380 = scmp.lt.s32.totalorder %s25, 2
      // Predicated region
      $region61: #{tpu_custom_call.1} parent=5 // pred_check
        %p381 = pneg %p380
      $region62: #{tpu_custom_call.1} parent=5 // pred_check_branch
        %383 = sbr.rel (%p381) target = $region64
      $region63: #{tpu_custom_call.1} parent=5 // pred_region
        // Predicated region
        $region65: #{tpu_custom_call.1} parent=63 // pred_check
          %p384 = pneg %p45
        $region66: #{tpu_custom_call.1} parent=63 // pred_check_branch
          %386 = sbr.rel (%p384) target = $region68
        $region67: #{tpu_custom_call.1} parent=63 // pred_region
          %s387 = sand.u32 %s35, 1
          %s388 = scalar_lea.sflag [#allocation3], %s387
          %s389 = sand.u32 %s35, 1
          %s390 = smul.addr %s389, 64
          %s391 = scalar_lea.vmem [#allocation2], %s390
          %s392 = smul.u32 4, %s25
          %394 = vsyncadd %s388, 0
          %s395 = smul.addr %s392, 4
          %s396 = smul.addr %s395, 4
          %s397 = scalar_lea.hbm %s0, %s396
          %s398 = sshll.u32 %s397, 4
          %s399 = int_to_ptr.hbm [resolvable:$true] %s398
          %s400 = sshll.u32 %s391, 4
          %s401 = int_to_ptr.vmem [resolvable:$true] %s400
          %406 = dma.hbm_to_vmem [thread:$0]  %s399, 1024, %s401, %s388, 64, 64, 4
        $region68: #{tpu_custom_call.1} parent=63 // pred_fallthru
          _
      $region64: #{tpu_custom_call.1} parent=5 // pred_fallthru
        _
      %p407 = scmp.le.s32.totalorder 1, %s25
      %p408 = scmp.lt.s32.totalorder %s25, 3
      %p409 = pnand %p407, %p408
      %p410 = pneg %p409
      // Predicated region
      $region69: #{tpu_custom_call.1} parent=5 // pred_check
        _
      $region70: #{tpu_custom_call.1} parent=5 // pred_check_branch
        %412 = sbr.rel (%p409) target = $region72
      $region71: #{tpu_custom_call.1} parent=5 // pred_region
        %s413 = ssub.s32 %s25, 1
        %s414 = sand.u32 %s38, 1
        %s415 = scalar_lea.sflag [#allocation3], %s414
        %s416 = sand.u32 %s38, 1
        %s417 = smul.addr %s416, 64
        %s418 = scalar_lea.vmem [#allocation2], %s417
        // Predicated region
        $region73: #{tpu_custom_call.1} parent=71 // pred_check
          %p419 = pneg %p51
        $region74: #{tpu_custom_call.1} parent=71 // pred_check_branch
          %421 = sbr.rel (%p419) target = $region76
        $region75: #{tpu_custom_call.1} parent=71 // pred_region
          %423 = dma.done %s415, 1024
        $region76: #{tpu_custom_call.1} parent=71 // pred_fallthru
          _
        %s424 = sand.u32 %s38, 1
        %s425 = scalar_lea.sflag [#allocation3], %s424
        %s426 = sand.u32 %s38, 1
        %s427 = smul.addr %s426, 64
        %s428 = scalar_lea.vmem [#allocation2], %s427
        %p429 = pneg %p51
        %p430 = pneg %p48
        %p431 = pneg %p72
        %p432 = pneg %p69
        %p433 = pneg %p93
        %p434 = pneg %p90
        %p435 = pneg %p114
        %p436 = pneg %p111
        %p437 = pneg %p135
        %p438 = pneg %p132
        %p439 = pneg %p156
        %p440 = pneg %p153
        %p441 = pneg %p177
        %p442 = pneg %p174
        %p443 = pneg %p198
        %p444 = pneg %p195
        %p445 = pneg %p219
        %p446 = pneg %p216
        %p447 = pneg %p240
        %p448 = pneg %p237
        %p449 = pneg %p261
        %p450 = pneg %p258
        %p451 = pneg %p282
        %p452 = pneg %p279
        %p453 = pneg %p303
        %p454 = pneg %p300
        %p455 = pneg %p329
        %p456 = pneg %p326
        %s457 = sand.u32 %s316, 1
        %s458 = scalar_lea.sflag [#allocation4], %s457
        %s459 = sand.u32 %s316, 1
        %s460 = smul.addr %s459, 128
        %s461 = scalar_lea.vmem [#allocation5], %s460
        %s462 = smul.u32 4, %s30
        %s463 = smul.u32 4, %s30
        %v465 = vld [vmem:[%s418] sm:$0xf]
        %v466 = vld [vmem:[%s418 + $0x4] sm:$0xf]
        %v467 = vld [vmem:[%s418 + $0x8] sm:$0xf]
        %v468 = vld [vmem:[%s418 + $0xc] sm:$0xf]
        %v469 = vld [vmem:[%s418 + $0x10] sm:$0xf]
        %v470 = vld [vmem:[%s418 + $0x14] sm:$0xf]
        %v471 = vld [vmem:[%s418 + $0x18] sm:$0xf]
        %v472 = vld [vmem:[%s418 + $0x1c] sm:$0xf]
        %v473 = vld [vmem:[%s418 + $0x20] sm:$0xf]
        %v474 = vld [vmem:[%s418 + $0x24] sm:$0xf]
        %v475 = vld [vmem:[%s418 + $0x28] sm:$0xf]
        %v476 = vld [vmem:[%s418 + $0x2c] sm:$0xf]
        %v477 = vld [vmem:[%s418 + $0x30] sm:$0xf]
        %v478 = vld [vmem:[%s418 + $0x34] sm:$0xf]
        %v479 = vld [vmem:[%s418 + $0x38] sm:$0xf]
        %v480 = vld [vmem:[%s418 + $0x3c] sm:$0xf]
        %v481 = vunpack.c.l.bf16 %v465
        %v482 = vunpack.c.l.bf16 %v466
        %v483 = vunpack.c.l.bf16 %v467
        %v484 = vunpack.c.l.bf16 %v468
        %v485 = vunpack.c.l.bf16 %v469
        %v486 = vunpack.c.l.bf16 %v470
        %v487 = vunpack.c.l.bf16 %v471
        %v488 = vunpack.c.l.bf16 %v472
        %v489 = vunpack.c.l.bf16 %v473
        %v490 = vunpack.c.l.bf16 %v474
        %v491 = vunpack.c.l.bf16 %v475
        %v492 = vunpack.c.l.bf16 %v476
        %v493 = vunpack.c.l.bf16 %v477
        %v494 = vunpack.c.l.bf16 %v478
        %v495 = vunpack.c.l.bf16 %v479
        %v496 = vunpack.c.l.bf16 %v480
        %497 = vadd.xlane.f32.xlu0 %v481
        %v498 = vpop.xlane.xlu0 %497
        %499 = vadd.xlane.f32.xlu0 %v482
        %v500 = vpop.xlane.xlu0 %499
        %501 = vadd.xlane.f32.xlu0 %v483
        %v502 = vpop.xlane.xlu0 %501
        %503 = vadd.xlane.f32.xlu0 %v484
        %v504 = vpop.xlane.xlu0 %503
        %505 = vadd.xlane.f32.xlu0 %v485
        %v506 = vpop.xlane.xlu0 %505
        %507 = vadd.xlane.f32.xlu0 %v486
        %v508 = vpop.xlane.xlu0 %507
        %509 = vadd.xlane.f32.xlu0 %v487
        %v510 = vpop.xlane.xlu0 %509
        %511 = vadd.xlane.f32.xlu0 %v488
        %v512 = vpop.xlane.xlu0 %511
        %513 = vadd.xlane.f32.xlu0 %v489
        %v514 = vpop.xlane.xlu0 %513
        %515 = vadd.xlane.f32.xlu0 %v490
        %v516 = vpop.xlane.xlu0 %515
        %517 = vadd.xlane.f32.xlu0 %v491
        %v518 = vpop.xlane.xlu0 %517
        %519 = vadd.xlane.f32.xlu0 %v492
        %v520 = vpop.xlane.xlu0 %519
        %521 = vadd.xlane.f32.xlu0 %v493
        %v522 = vpop.xlane.xlu0 %521
        %523 = vadd.xlane.f32.xlu0 %v494
        %v524 = vpop.xlane.xlu0 %523
        %525 = vadd.xlane.f32.xlu0 %v495
        %v526 = vpop.xlane.xlu0 %525
        %527 = vadd.xlane.f32.xlu0 %v496
        %v528 = vpop.xlane.xlu0 %527
        %v529 = vmul.f32 %v498, 0.010416667
        %v530 = vmul.f32 %v500, 0.010416667
        %v531 = vmul.f32 %v502, 0.010416667
        %v532 = vmul.f32 %v504, 0.010416667
        %v533 = vmul.f32 %v506, 0.010416667
        %v534 = vmul.f32 %v508, 0.010416667
        %v535 = vmul.f32 %v510, 0.010416667
        %v536 = vmul.f32 %v512, 0.010416667
        %v537 = vmul.f32 %v514, 0.010416667
        %v538 = vmul.f32 %v516, 0.010416667
        %v539 = vmul.f32 %v518, 0.010416667
        %v540 = vmul.f32 %v520, 0.010416667
        %v541 = vmul.f32 %v522, 0.010416667
        %v542 = vmul.f32 %v524, 0.010416667
        %v543 = vmul.f32 %v526, 0.010416667
        %v544 = vmul.f32 %v528, 0.010416667
        %v545 = vmul.f32 %v481, %v481
        %v546 = vmul.f32 %v482, %v482
        %v547 = vmul.f32 %v483, %v483
        %v548 = vmul.f32 %v484, %v484
        %v549 = vmul.f32 %v485, %v485
        %v550 = vmul.f32 %v486, %v486
        %v551 = vmul.f32 %v487, %v487
        %v552 = vmul.f32 %v488, %v488
        %v553 = vmul.f32 %v489, %v489
        %v554 = vmul.f32 %v490, %v490
        %v555 = vmul.f32 %v491, %v491
        %v556 = vmul.f32 %v492, %v492
        %v557 = vmul.f32 %v493, %v493
        %v558 = vmul.f32 %v494, %v494
        %v559 = vmul.f32 %v495, %v495
        %v560 = vmul.f32 %v496, %v496
        %561 = vadd.xlane.f32.xlu0 %v545
        %v562 = vpop.xlane.xlu0 %561
        %563 = vadd.xlane.f32.xlu0 %v546
        %v564 = vpop.xlane.xlu0 %563
        %565 = vadd.xlane.f32.xlu0 %v547
        %v566 = vpop.xlane.xlu0 %565
        %567 = vadd.xlane.f32.xlu0 %v548
        %v568 = vpop.xlane.xlu0 %567
        %569 = vadd.xlane.f32.xlu0 %v549
        %v570 = vpop.xlane.xlu0 %569
        %571 = vadd.xlane.f32.xlu0 %v550
        %v572 = vpop.xlane.xlu0 %571
        %573 = vadd.xlane.f32.xlu0 %v551
        %v574 = vpop.xlane.xlu0 %573
        %575 = vadd.xlane.f32.xlu0 %v552
        %v576 = vpop.xlane.xlu0 %575
        %577 = vadd.xlane.f32.xlu0 %v553
        %v578 = vpop.xlane.xlu0 %577
        %579 = vadd.xlane.f32.xlu0 %v554
        %v580 = vpop.xlane.xlu0 %579
        %581 = vadd.xlane.f32.xlu0 %v555
        %v582 = vpop.xlane.xlu0 %581
        %583 = vadd.xlane.f32.xlu0 %v556
        %v584 = vpop.xlane.xlu0 %583
        %585 = vadd.xlane.f32.xlu0 %v557
        %v586 = vpop.xlane.xlu0 %585
        %587 = vadd.xlane.f32.xlu0 %v558
        %v588 = vpop.xlane.xlu0 %587
        %589 = vadd.xlane.f32.xlu0 %v559
        %v590 = vpop.xlane.xlu0 %589
        %591 = vadd.xlane.f32.xlu0 %v560
        %v592 = vpop.xlane.xlu0 %591
        %v593 = vmul.f32 %v562, 0.010416667
        %v594 = vmul.f32 %v564, 0.010416667
        %v595 = vmul.f32 %v566, 0.010416667
        %v596 = vmul.f32 %v568, 0.010416667
        %v597 = vmul.f32 %v570, 0.010416667
        %v598 = vmul.f32 %v572, 0.010416667
        %v599 = vmul.f32 %v574, 0.010416667
        %v600 = vmul.f32 %v576, 0.010416667
        %v601 = vmul.f32 %v578, 0.010416667
        %v602 = vmul.f32 %v580, 0.010416667
        %v603 = vmul.f32 %v582, 0.010416667
        %v604 = vmul.f32 %v584, 0.010416667
        %v605 = vmul.f32 %v586, 0.010416667
        %v606 = vmul.f32 %v588, 0.010416667
        %v607 = vmul.f32 %v590, 0.010416667
        %v608 = vmul.f32 %v592, 0.010416667
        %v609 = vmul.f32 %v529, %v529
        %v610 = vmul.f32 %v530, %v530
        %v611 = vmul.f32 %v531, %v531
        %v612 = vmul.f32 %v532, %v532
        %v613 = vmul.f32 %v533, %v533
        %v614 = vmul.f32 %v534, %v534
        %v615 = vmul.f32 %v535, %v535
        %v616 = vmul.f32 %v536, %v536
        %v617 = vmul.f32 %v537, %v537
        %v618 = vmul.f32 %v538, %v538
        %v619 = vmul.f32 %v539, %v539
        %v620 = vmul.f32 %v540, %v540
        %v621 = vmul.f32 %v541, %v541
        %v622 = vmul.f32 %v542, %v542
        %v623 = vmul.f32 %v543, %v543
        %v624 = vmul.f32 %v544, %v544
        %v625 = vsub.f32 %v593, %v609
        %v626 = vsub.f32 %v594, %v610
        %v627 = vsub.f32 %v595, %v611
        %v628 = vsub.f32 %v596, %v612
        %v629 = vsub.f32 %v597, %v613
        %v630 = vsub.f32 %v598, %v614
        %v631 = vsub.f32 %v599, %v615
        %v632 = vsub.f32 %v600, %v616
        %v633 = vsub.f32 %v601, %v617
        %v634 = vsub.f32 %v602, %v618
        %v635 = vsub.f32 %v603, %v619
        %v636 = vsub.f32 %v604, %v620
        %v637 = vsub.f32 %v605, %v621
        %v638 = vsub.f32 %v606, %v622
        %v639 = vsub.f32 %v607, %v623
        %v640 = vsub.f32 %v608, %v624
        %v641 = vmax.f32 %v625, 0.0
        %v642 = vmax.f32 %v626, 0.0
        %v643 = vmax.f32 %v627, 0.0
        %v644 = vmax.f32 %v628, 0.0
        %v645 = vmax.f32 %v629, 0.0
        %v646 = vmax.f32 %v630, 0.0
        %v647 = vmax.f32 %v631, 0.0
        %v648 = vmax.f32 %v632, 0.0
        %v649 = vmax.f32 %v633, 0.0
        %v650 = vmax.f32 %v634, 0.0
        %v651 = vmax.f32 %v635, 0.0
        %v652 = vmax.f32 %v636, 0.0
        %v653 = vmax.f32 %v637, 0.0
        %v654 = vmax.f32 %v638, 0.0
        %v655 = vmax.f32 %v639, 0.0
        %v656 = vmax.f32 %v640, 0.0
        %v657 = vadd.f32 %v641, 0.001
        %v658 = vadd.f32 %v642, 0.001
        %v659 = vadd.f32 %v643, 0.001
        %v660 = vadd.f32 %v644, 0.001
        %v661 = vadd.f32 %v645, 0.001
        %v662 = vadd.f32 %v646, 0.001
        %v663 = vadd.f32 %v647, 0.001
        %v664 = vadd.f32 %v648, 0.001
        %v665 = vadd.f32 %v649, 0.001
        %v666 = vadd.f32 %v650, 0.001
        %v667 = vadd.f32 %v651, 0.001
        %v668 = vadd.f32 %v652, 0.001
        %v669 = vadd.f32 %v653, 0.001
        %v670 = vadd.f32 %v654, 0.001
        %v671 = vadd.f32 %v655, 0.001
        %v672 = vadd.f32 %v656, 0.001
        %v673 = vrsqrt.pop %v657
        %v674 = vmul.f32 %v673, %v657
        %v675 = vmul.f32 %v674, %v673
        %v676 = vmul.f32 0.5, %v675
        %v677 = vsub.f32 1.5, %v676
        %v678 = vmul.f32 %v673, %v677
        %vm679 = vweird.f32 %v657
        %vm680 = vweird.f32 %v673
        %vm681 = vmor %vm679, %vm680
        %v682 = vsel %vm681, %v673, %v678
        %v683 = vrsqrt.pop %v658
        %v684 = vmul.f32 %v683, %v658
        %v685 = vmul.f32 %v684, %v683
        %v686 = vmul.f32 0.5, %v685
        %v687 = vsub.f32 1.5, %v686
        %v688 = vmul.f32 %v683, %v687
        %vm689 = vweird.f32 %v658
        %vm690 = vweird.f32 %v683
        %vm691 = vmor %vm689, %vm690
        %v692 = vsel %vm691, %v683, %v688
        %v693 = vrsqrt.pop %v659
        %v694 = vmul.f32 %v693, %v659
        %v695 = vmul.f32 %v694, %v693
        %v696 = vmul.f32 0.5, %v695
        %v697 = vsub.f32 1.5, %v696
        %v698 = vmul.f32 %v693, %v697
        %vm699 = vweird.f32 %v659
        %vm700 = vweird.f32 %v693
        %vm701 = vmor %vm699, %vm700
        %v702 = vsel %vm701, %v693, %v698
        %v703 = vrsqrt.pop %v660
        %v704 = vmul.f32 %v703, %v660
        %v705 = vmul.f32 %v704, %v703
        %v706 = vmul.f32 0.5, %v705
        %v707 = vsub.f32 1.5, %v706
        %v708 = vmul.f32 %v703, %v707
        %vm709 = vweird.f32 %v660
        %vm710 = vweird.f32 %v703
        %vm711 = vmor %vm709, %vm710
        %v712 = vsel %vm711, %v703, %v708
        %v713 = vrsqrt.pop %v661
        %v714 = vmul.f32 %v713, %v661
        %v715 = vmul.f32 %v714, %v713
        %v716 = vmul.f32 0.5, %v715
        %v717 = vsub.f32 1.5, %v716
        %v718 = vmul.f32 %v713, %v717
        %vm719 = vweird.f32 %v661
        %vm720 = vweird.f32 %v713
        %vm721 = vmor %vm719, %vm720
        %v722 = vsel %vm721, %v713, %v718
        %v723 = vrsqrt.pop %v662
        %v724 = vmul.f32 %v723, %v662
        %v725 = vmul.f32 %v724, %v723
        %v726 = vmul.f32 0.5, %v725
        %v727 = vsub.f32 1.5, %v726
        %v728 = vmul.f32 %v723, %v727
        %vm729 = vweird.f32 %v662
        %vm730 = vweird.f32 %v723
        %vm731 = vmor %vm729, %vm730
        %v732 = vsel %vm731, %v723, %v728
        %v733 = vrsqrt.pop %v663
        %v734 = vmul.f32 %v733, %v663
        %v735 = vmul.f32 %v734, %v733
        %v736 = vmul.f32 0.5, %v735
        %v737 = vsub.f32 1.5, %v736
        %v738 = vmul.f32 %v733, %v737
        %vm739 = vweird.f32 %v663
        %vm740 = vweird.f32 %v733
        %vm741 = vmor %vm739, %vm740
        %v742 = vsel %vm741, %v733, %v738
        %v743 = vrsqrt.pop %v664
        %v744 = vmul.f32 %v743, %v664
        %v745 = vmul.f32 %v744, %v743
        %v746 = vmul.f32 0.5, %v745
        %v747 = vsub.f32 1.5, %v746
        %v748 = vmul.f32 %v743, %v747
        %vm749 = vweird.f32 %v664
        %vm750 = vweird.f32 %v743
        %vm751 = vmor %vm749, %vm750
        %v752 = vsel %vm751, %v743, %v748
        %v753 = vrsqrt.pop %v665
        %v754 = vmul.f32 %v753, %v665
        %v755 = vmul.f32 %v754, %v753
        %v756 = vmul.f32 0.5, %v755
        %v757 = vsub.f32 1.5, %v756
        %v758 = vmul.f32 %v753, %v757
        %vm759 = vweird.f32 %v665
        %vm760 = vweird.f32 %v753
        %vm761 = vmor %vm759, %vm760
        %v762 = vsel %vm761, %v753, %v758
        %v763 = vrsqrt.pop %v666
        %v764 = vmul.f32 %v763, %v666
        %v765 = vmul.f32 %v764, %v763
        %v766 = vmul.f32 0.5, %v765
        %v767 = vsub.f32 1.5, %v766
        %v768 = vmul.f32 %v763, %v767
        %vm769 = vweird.f32 %v666
        %vm770 = vweird.f32 %v763
        %vm771 = vmor %vm769, %vm770
        %v772 = vsel %vm771, %v763, %v768
        %v773 = vrsqrt.pop %v667
        %v774 = vmul.f32 %v773, %v667
        %v775 = vmul.f32 %v774, %v773
        %v776 = vmul.f32 0.5, %v775
        %v777 = vsub.f32 1.5, %v776
        %v778 = vmul.f32 %v773, %v777
        %vm779 = vweird.f32 %v667
        %vm780 = vweird.f32 %v773
        %vm781 = vmor %vm779, %vm780
        %v782 = vsel %vm781, %v773, %v778
        %v783 = vrsqrt.pop %v668
        %v784 = vmul.f32 %v783, %v668
        %v785 = vmul.f32 %v784, %v783
        %v786 = vmul.f32 0.5, %v785
        %v787 = vsub.f32 1.5, %v786
        %v788 = vmul.f32 %v783, %v787
        %vm789 = vweird.f32 %v668
        %vm790 = vweird.f32 %v783
        %vm791 = vmor %vm789, %vm790
        %v792 = vsel %vm791, %v783, %v788
        %v793 = vrsqrt.pop %v669
        %v794 = vmul.f32 %v793, %v669
        %v795 = vmul.f32 %v794, %v793
        %v796 = vmul.f32 0.5, %v795
        %v797 = vsub.f32 1.5, %v796
        %v798 = vmul.f32 %v793, %v797
        %vm799 = vweird.f32 %v669
        %vm800 = vweird.f32 %v793
        %vm801 = vmor %vm799, %vm800
        %v802 = vsel %vm801, %v793, %v798
        %v803 = vrsqrt.pop %v670
        %v804 = vmul.f32 %v803, %v670
        %v805 = vmul.f32 %v804, %v803
        %v806 = vmul.f32 0.5, %v805
        %v807 = vsub.f32 1.5, %v806
        %v808 = vmul.f32 %v803, %v807
        %vm809 = vweird.f32 %v670
        %vm810 = vweird.f32 %v803
        %vm811 = vmor %vm809, %vm810
        %v812 = vsel %vm811, %v803, %v808
        %v813 = vrsqrt.pop %v671
        %v814 = vmul.f32 %v813, %v671
        %v815 = vmul.f32 %v814, %v813
        %v816 = vmul.f32 0.5, %v815
        %v817 = vsub.f32 1.5, %v816
        %v818 = vmul.f32 %v813, %v817
        %vm819 = vweird.f32 %v671
        %vm820 = vweird.f32 %v813
        %vm821 = vmor %vm819, %vm820
        %v822 = vsel %vm821, %v813, %v818
        %v823 = vrsqrt.pop %v672
        %v824 = vmul.f32 %v823, %v672
        %v825 = vmul.f32 %v824, %v823
        %v826 = vmul.f32 0.5, %v825
        %v827 = vsub.f32 1.5, %v826
        %v828 = vmul.f32 %v823, %v827
        %vm829 = vweird.f32 %v672
        %vm830 = vweird.f32 %v823
        %vm831 = vmor %vm829, %vm830
        %v832 = vsel %vm831, %v823, %v828
        %v833 = vld [vmem:[%s1] sm:$0xff]
        %v834 = vld [vmem:[%s1 + $0x8] sm:$0xff]
        %v835 = vld [vmem:[%s1 + $0x10] sm:$0xff]
        %v836 = vld [vmem:[%s1 + $0x18] sm:$0xff]
        %v837 = vmul.f32 %v682, %v833
        %v838 = vmul.f32 %v692, %v834
        %v839 = vmul.f32 %v702, %v835
        %v840 = vmul.f32 %v712, %v836
        %v841 = vmul.f32 %v722, %v833
        %v842 = vmul.f32 %v732, %v834
        %v843 = vmul.f32 %v742, %v835
        %v844 = vmul.f32 %v752, %v836
        %v845 = vmul.f32 %v762, %v833
        %v846 = vmul.f32 %v772, %v834
        %v847 = vmul.f32 %v782, %v835
        %v848 = vmul.f32 %v792, %v836
        %v849 = vmul.f32 %v802, %v833
        %v850 = vmul.f32 %v812, %v834
        %v851 = vmul.f32 %v822, %v835
        %v852 = vmul.f32 %v832, %v836
        %v853 = vld [vmem:[%s2] sm:$0xff]
        %v854 = vld [vmem:[%s2 + $0x8] sm:$0xff]
        %v855 = vld [vmem:[%s2 + $0x10] sm:$0xff]
        %v856 = vld [vmem:[%s2 + $0x18] sm:$0xff]
        %v857 = vmul.f32 %v529, %v837
        %v858 = vmul.f32 %v530, %v838
        %v859 = vmul.f32 %v531, %v839
        %v860 = vmul.f32 %v532, %v840
        %v861 = vmul.f32 %v533, %v841
        %v862 = vmul.f32 %v534, %v842
        %v863 = vmul.f32 %v535, %v843
        %v864 = vmul.f32 %v536, %v844
        %v865 = vmul.f32 %v537, %v845
        %v866 = vmul.f32 %v538, %v846
        %v867 = vmul.f32 %v539, %v847
        %v868 = vmul.f32 %v540, %v848
        %v869 = vmul.f32 %v541, %v849
        %v870 = vmul.f32 %v542, %v850
        %v871 = vmul.f32 %v543, %v851
        %v872 = vmul.f32 %v544, %v852
        %v873 = vsub.f32 %v853, %v857
        %v874 = vsub.f32 %v854, %v858
        %v875 = vsub.f32 %v855, %v859
        %v876 = vsub.f32 %v856, %v860
        %v877 = vsub.f32 %v853, %v861
        %v878 = vsub.f32 %v854, %v862
        %v879 = vsub.f32 %v855, %v863
        %v880 = vsub.f32 %v856, %v864
        %v881 = vsub.f32 %v853, %v865
        %v882 = vsub.f32 %v854, %v866
        %v883 = vsub.f32 %v855, %v867
        %v884 = vsub.f32 %v856, %v868
        %v885 = vsub.f32 %v853, %v869
        %v886 = vsub.f32 %v854, %v870
        %v887 = vsub.f32 %v855, %v871
        %v888 = vsub.f32 %v856, %v872
        %890 = vset.pattern.permute.xlu0 0
        %891 = vperm.xlu0 %890, %v837
        %v892 = vpop.permute.xlu0 %891
        %895 = vset.pattern.permute.xlu0 0
        %896 = vperm.xlu0 %895, %v838
        %v897 = vpop.permute.xlu0 %896
        %900 = vset.pattern.permute.xlu0 0
        %901 = vperm.xlu0 %900, %v839
        %v902 = vpop.permute.xlu0 %901
        %905 = vset.pattern.permute.xlu0 0
        %906 = vperm.xlu0 %905, %v840
        %v907 = vpop.permute.xlu0 %906
        %910 = vset.pattern.permute.xlu0 0
        %911 = vperm.xlu0 %910, %v841
        %v912 = vpop.permute.xlu0 %911
        %915 = vset.pattern.permute.xlu0 0
        %916 = vperm.xlu0 %915, %v842
        %v917 = vpop.permute.xlu0 %916
        %920 = vset.pattern.permute.xlu0 0
        %921 = vperm.xlu0 %920, %v843
        %v922 = vpop.permute.xlu0 %921
        %925 = vset.pattern.permute.xlu0 0
        %926 = vperm.xlu0 %925, %v844
        %v927 = vpop.permute.xlu0 %926
        %930 = vset.pattern.permute.xlu0 0
        %931 = vperm.xlu0 %930, %v845
        %v932 = vpop.permute.xlu0 %931
        %935 = vset.pattern.permute.xlu0 0
        %936 = vperm.xlu0 %935, %v846
        %v937 = vpop.permute.xlu0 %936
        %940 = vset.pattern.permute.xlu0 0
        %941 = vperm.xlu0 %940, %v847
        %v942 = vpop.permute.xlu0 %941
        %945 = vset.pattern.permute.xlu0 0
        %946 = vperm.xlu0 %945, %v848
        %v947 = vpop.permute.xlu0 %946
        %950 = vset.pattern.permute.xlu0 0
        %951 = vperm.xlu0 %950, %v849
        %v952 = vpop.permute.xlu0 %951
        %955 = vset.pattern.permute.xlu0 0
        %956 = vperm.xlu0 %955, %v850
        %v957 = vpop.permute.xlu0 %956
        %960 = vset.pattern.permute.xlu0 0
        %961 = vperm.xlu0 %960, %v851
        %v962 = vpop.permute.xlu0 %961
        %965 = vset.pattern.permute.xlu0 0
        %966 = vperm.xlu0 %965, %v852
        %v967 = vpop.permute.xlu0 %966
        %v969 = vmul.f32 %v481, %v892
        %v970 = vmul.f32 %v482, %v897
        %v971 = vmul.f32 %v483, %v902
        %v972 = vmul.f32 %v484, %v907
        %v973 = vmul.f32 %v485, %v912
        %v974 = vmul.f32 %v486, %v917
        %v975 = vmul.f32 %v487, %v922
        %v976 = vmul.f32 %v488, %v927
        %v977 = vmul.f32 %v489, %v932
        %v978 = vmul.f32 %v490, %v937
        %v979 = vmul.f32 %v491, %v942
        %v980 = vmul.f32 %v492, %v947
        %v981 = vmul.f32 %v493, %v952
        %v982 = vmul.f32 %v494, %v957
        %v983 = vmul.f32 %v495, %v962
        %v984 = vmul.f32 %v496, %v967
        %986 = vset.pattern.permute.xlu0 0
        %987 = vperm.xlu0 %986, %v873
        %v988 = vpop.permute.xlu0 %987
        %991 = vset.pattern.permute.xlu0 0
        %992 = vperm.xlu0 %991, %v874
        %v993 = vpop.permute.xlu0 %992
        %996 = vset.pattern.permute.xlu0 0
        %997 = vperm.xlu0 %996, %v875
        %v998 = vpop.permute.xlu0 %997
        %1001 = vset.pattern.permute.xlu0 0
        %1002 = vperm.xlu0 %1001, %v876
        %v1003 = vpop.permute.xlu0 %1002
        %1006 = vset.pattern.permute.xlu0 0
        %1007 = vperm.xlu0 %1006, %v877
        %v1008 = vpop.permute.xlu0 %1007
        %1011 = vset.pattern.permute.xlu0 0
        %1012 = vperm.xlu0 %1011, %v878
        %v1013 = vpop.permute.xlu0 %1012
        %1016 = vset.pattern.permute.xlu0 0
        %1017 = vperm.xlu0 %1016, %v879
        %v1018 = vpop.permute.xlu0 %1017
        %1021 = vset.pattern.permute.xlu0 0
        %1022 = vperm.xlu0 %1021, %v880
        %v1023 = vpop.permute.xlu0 %1022
        %1026 = vset.pattern.permute.xlu0 0
        %1027 = vperm.xlu0 %1026, %v881
        %v1028 = vpop.permute.xlu0 %1027
        %1031 = vset.pattern.permute.xlu0 0
        %1032 = vperm.xlu0 %1031, %v882
        %v1033 = vpop.permute.xlu0 %1032
        %1036 = vset.pattern.permute.xlu0 0
        %1037 = vperm.xlu0 %1036, %v883
        %v1038 = vpop.permute.xlu0 %1037
        %1041 = vset.pattern.permute.xlu0 0
        %1042 = vperm.xlu0 %1041, %v884
        %v1043 = vpop.permute.xlu0 %1042
        %1046 = vset.pattern.permute.xlu0 0
        %1047 = vperm.xlu0 %1046, %v885
        %v1048 = vpop.permute.xlu0 %1047
        %1051 = vset.pattern.permute.xlu0 0
        %1052 = vperm.xlu0 %1051, %v886
        %v1053 = vpop.permute.xlu0 %1052
        %1056 = vset.pattern.permute.xlu0 0
        %1057 = vperm.xlu0 %1056, %v887
        %v1058 = vpop.permute.xlu0 %1057
        %1061 = vset.pattern.permute.xlu0 0
        %1062 = vperm.xlu0 %1061, %v888
        %v1063 = vpop.permute.xlu0 %1062
        %v1065 = vadd.f32 %v969, %v988
        %v1066 = vadd.f32 %v970, %v993
        %v1067 = vadd.f32 %v971, %v998
        %v1068 = vadd.f32 %v972, %v1003
        %v1069 = vadd.f32 %v973, %v1008
        %v1070 = vadd.f32 %v974, %v1013
        %v1071 = vadd.f32 %v975, %v1018
        %v1072 = vadd.f32 %v976, %v1023
        %v1073 = vadd.f32 %v977, %v1028
        %v1074 = vadd.f32 %v978, %v1033
        %v1075 = vadd.f32 %v979, %v1038
        %v1076 = vadd.f32 %v980, %v1043
        %v1077 = vadd.f32 %v981, %v1048
        %v1078 = vadd.f32 %v982, %v1053
        %v1079 = vadd.f32 %v983, %v1058
        %v1080 = vadd.f32 %v984, %v1063
        %v1081 = vmax.f32 %v1065, 0.0
        %v1082 = vmax.f32 %v1066, 0.0
        %v1083 = vmax.f32 %v1067, 0.0
        %v1084 = vmax.f32 %v1068, 0.0
        %v1085 = vmax.f32 %v1069, 0.0
        %v1086 = vmax.f32 %v1070, 0.0
        %v1087 = vmax.f32 %v1071, 0.0
        %v1088 = vmax.f32 %v1072, 0.0
        %v1089 = vmax.f32 %v1073, 0.0
        %v1090 = vmax.f32 %v1074, 0.0
        %v1091 = vmax.f32 %v1075, 0.0
        %v1092 = vmax.f32 %v1076, 0.0
        %v1093 = vmax.f32 %v1077, 0.0
        %v1094 = vmax.f32 %v1078, 0.0
        %v1095 = vmax.f32 %v1079, 0.0
        %v1096 = vmax.f32 %v1080, 0.0
        %v1097 = vpack.c.bf16 %v1081, %v1081
        %v1098 = vpack.c.bf16 %v1082, %v1082
        %v1099 = vpack.c.bf16 %v1083, %v1083
        %v1100 = vpack.c.bf16 %v1084, %v1084
        %v1101 = vpack.c.bf16 %v1085, %v1085
        %v1102 = vpack.c.bf16 %v1086, %v1086
        %v1103 = vpack.c.bf16 %v1087, %v1087
        %v1104 = vpack.c.bf16 %v1088, %v1088
        %v1105 = vpack.c.bf16 %v1089, %v1089
        %v1106 = vpack.c.bf16 %v1090, %v1090
        %v1107 = vpack.c.bf16 %v1091, %v1091
        %v1108 = vpack.c.bf16 %v1092, %v1092
        %v1109 = vpack.c.bf16 %v1093, %v1093
        %v1110 = vpack.c.bf16 %v1094, %v1094
        %v1111 = vpack.c.bf16 %v1095, %v1095
        %v1112 = vpack.c.bf16 %v1096, %v1096
        %v1113 = vld [vmem:[%s3] sm:$0xf]
        %v1114 = vld [vmem:[%s3 + $0x4] sm:$0xf]
        %v1115 = vld [vmem:[%s3 + $0x8] sm:$0xf]
        %v1116 = vld [vmem:[%s3 + $0xc] sm:$0xf]
        %v1117 = vld [vmem:[%s4] sm:$0xff]
        %v1118 = vld [vmem:[%s4 + $0x8] sm:$0xff]
        %v1119 = vld [vmem:[%s4 + $0x10] sm:$0xff]
        %v1120 = vld [vmem:[%s4 + $0x18] sm:$0xff]
        %1122 = vset.pattern.permute.xlu0 0
        %1123 = vperm.xlu0 %1122, %v1117
        %v1124 = vpop.permute.xlu0 %1123
        %1127 = vset.pattern.permute.xlu0 0
        %1128 = vperm.xlu0 %1127, %v1118
        %v1129 = vpop.permute.xlu0 %1128
        %1132 = vset.pattern.permute.xlu0 0
        %1133 = vperm.xlu0 %1132, %v1119
        %v1134 = vpop.permute.xlu0 %1133
        %1137 = vset.pattern.permute.xlu0 0
        %1138 = vperm.xlu0 %1137, %v1120
        %v1139 = vpop.permute.xlu0 %1138
        %v1145 = vunpack.c.l.b16 %v1113
        %v1146 = vunpack.c.l.b16 %v1114
        %v1147 = vunpack.c.l.b16 %v1115
        %v1148 = vunpack.c.l.b16 %v1116
        %v1149 = vpack.c.b16 %v1146, %v1145
        %v1150 = vpack.c.b16 %v1148, %v1147
        %v1155 = vunpack.c.l.b16 %v1097
        %v1156 = vunpack.c.l.b16 %v1098
        %v1157 = vunpack.c.l.b16 %v1099
        %v1158 = vunpack.c.l.b16 %v1100
        %v1159 = vpack.c.b16 %v1156, %v1155
        %v1160 = vpack.c.b16 %v1158, %v1157
        %vm1163 = vcmask 261120
        %v1165 = vsel %vm1163, %v1149, 0
        %v1168 = vsel %vm1163, %v1150, 0
        %1170 = vmatpush.bf16.msra.mxu0 0
        %1171 = vmatpush.bf16.msra.mxu0 0
        %1172 = vmatpush.bf16.msra.mxu0 0
        %1173 = vmatpush.bf16.msra.mxu0 0
        %1174 = vmatpush.bf16.msra.mxu0 0
        %1175 = vmatpush.bf16.msra.mxu0 0
        %1176 = vmatpush.bf16.msra.mxu0 %v1160
        %1177 = vmatpush.bf16.msra.mxu0 %v1159
        %1178 = vmatmul.bf16.gmra.mxu0 %v1165
        %v1179 = vpop.f32.mrf.mxu0
        %v1180 = vadd.f32 %v1124, %v1179
        %v1181 = vpop.f32.mrf.mxu0
        %v1182 = vadd.f32 %v1129, %v1181
        %1183 = vmatmul.bf16.gmra.mxu0 %v1168
        %v1184 = vpop.f32.mrf.mxu0
        %v1185 = vadd.f32 %v1134, %v1184
        %v1186 = vpop.f32.mrf.mxu0
        %v1187 = vadd.f32 %v1139, %v1186
        %1188 = vdwg.mxu0
        %v1193 = vunpack.c.l.b16 %v1101
        %v1194 = vunpack.c.l.b16 %v1102
        %v1195 = vunpack.c.l.b16 %v1103
        %v1196 = vunpack.c.l.b16 %v1104
        %v1197 = vpack.c.b16 %v1194, %v1193
        %v1198 = vpack.c.b16 %v1196, %v1195
        %1201 = vmatpush.bf16.msra.mxu0 0
        %1202 = vmatpush.bf16.msra.mxu0 0
        %1203 = vmatpush.bf16.msra.mxu0 0
        %1204 = vmatpush.bf16.msra.mxu0 0
        %1205 = vmatpush.bf16.msra.mxu0 0
        %1206 = vmatpush.bf16.msra.mxu0 0
        %1207 = vmatpush.bf16.msra.mxu0 %v1198
        %1208 = vmatpush.bf16.msra.mxu0 %v1197
        %1209 = vmatmul.bf16.gmra.mxu0 %v1165
        %v1210 = vpop.f32.mrf.mxu0
        %v1211 = vadd.f32 %v1124, %v1210
        %v1212 = vpop.f32.mrf.mxu0
        %v1213 = vadd.f32 %v1129, %v1212
        %1214 = vmatmul.bf16.gmra.mxu0 %v1168
        %v1215 = vpop.f32.mrf.mxu0
        %v1216 = vadd.f32 %v1134, %v1215
        %v1217 = vpop.f32.mrf.mxu0
        %v1218 = vadd.f32 %v1139, %v1217
        %1219 = vdwg.mxu0
        %v1224 = vunpack.c.l.b16 %v1105
        %v1225 = vunpack.c.l.b16 %v1106
        %v1226 = vunpack.c.l.b16 %v1107
        %v1227 = vunpack.c.l.b16 %v1108
        %v1228 = vpack.c.b16 %v1225, %v1224
        %v1229 = vpack.c.b16 %v1227, %v1226
        %1232 = vmatpush.bf16.msra.mxu0 0
        %1233 = vmatpush.bf16.msra.mxu0 0
        %1234 = vmatpush.bf16.msra.mxu0 0
        %1235 = vmatpush.bf16.msra.mxu0 0
        %1236 = vmatpush.bf16.msra.mxu0 0
        %1237 = vmatpush.bf16.msra.mxu0 0
        %1238 = vmatpush.bf16.msra.mxu0 %v1229
        %1239 = vmatpush.bf16.msra.mxu0 %v1228
        %1240 = vmatmul.bf16.gmra.mxu0 %v1165
        %v1241 = vpop.f32.mrf.mxu0
        %v1242 = vadd.f32 %v1124, %v1241
        %v1243 = vpop.f32.mrf.mxu0
        %v1244 = vadd.f32 %v1129, %v1243
        %1245 = vmatmul.bf16.gmra.mxu0 %v1168
        %v1246 = vpop.f32.mrf.mxu0
        %v1247 = vadd.f32 %v1134, %v1246
        %v1248 = vpop.f32.mrf.mxu0
        %v1249 = vadd.f32 %v1139, %v1248
        %1250 = vdwg.mxu0
        %v1255 = vunpack.c.l.b16 %v1109
        %v1256 = vunpack.c.l.b16 %v1110
        %v1257 = vunpack.c.l.b16 %v1111
        %v1258 = vunpack.c.l.b16 %v1112
        %v1259 = vpack.c.b16 %v1256, %v1255
        %v1260 = vpack.c.b16 %v1258, %v1257
        %1263 = vmatpush.bf16.msra.mxu0 0
        %1264 = vmatpush.bf16.msra.mxu0 0
        %1265 = vmatpush.bf16.msra.mxu0 0
        %1266 = vmatpush.bf16.msra.mxu0 0
        %1267 = vmatpush.bf16.msra.mxu0 0
        %1268 = vmatpush.bf16.msra.mxu0 0
        %1269 = vmatpush.bf16.msra.mxu0 %v1260
        %1270 = vmatpush.bf16.msra.mxu0 %v1259
        %1271 = vmatmul.bf16.gmra.mxu0 %v1165
        %v1272 = vpop.f32.mrf.mxu0
        %v1273 = vadd.f32 %v1124, %v1272
        %v1274 = vpop.f32.mrf.mxu0
        %v1275 = vadd.f32 %v1129, %v1274
        %1276 = vmatmul.bf16.gmra.mxu0 %v1168
        %v1277 = vpop.f32.mrf.mxu0
        %v1278 = vadd.f32 %v1134, %v1277
        %v1279 = vpop.f32.mrf.mxu0
        %v1280 = vadd.f32 %v1139, %v1279
        %1281 = vdwg.mxu0
        %v1282 = vlaneseq
        %v1283 = vand.u32 %v1282, 127
        %vm1284 = vcmp.lt.s32.totalorder %v1283, 96
        %v1285 = vsel %vm1284, 1, 0
        %vm1286 = vcmp.eq.s32.totalorder %v1285, 1
        %v1287 = vsel %vm1286, %v1180, 0.0
        %v1288 = vsel %vm1286, %v1182, 0.0
        %v1289 = vsel %vm1286, %v1185, 0.0
        %v1290 = vsel %vm1286, %v1187, 0.0
        %v1291 = vsel %vm1286, %v1211, 0.0
        %v1292 = vsel %vm1286, %v1213, 0.0
        %v1293 = vsel %vm1286, %v1216, 0.0
        %v1294 = vsel %vm1286, %v1218, 0.0
        %v1295 = vsel %vm1286, %v1242, 0.0
        %v1296 = vsel %vm1286, %v1244, 0.0
        %v1297 = vsel %vm1286, %v1247, 0.0
        %v1298 = vsel %vm1286, %v1249, 0.0
        %v1299 = vsel %vm1286, %v1273, 0.0
        %v1300 = vsel %vm1286, %v1275, 0.0
        %v1301 = vsel %vm1286, %v1278, 0.0
        %v1302 = vsel %vm1286, %v1280, 0.0
        %v1303 = vld [vmem:[%s5] sm:$0x1]
        %v1305 = vperm.slane %v1303, 0
        %v1307 = vmul.f32 %v1287, %v1305
        %v1308 = vmul.f32 %v1288, %v1305
        %v1309 = vmul.f32 %v1289, %v1305
        %v1310 = vmul.f32 %v1290, %v1305
        %v1311 = vmul.f32 %v1291, %v1305
        %v1312 = vmul.f32 %v1292, %v1305
        %v1313 = vmul.f32 %v1293, %v1305
        %v1314 = vmul.f32 %v1294, %v1305
        %v1315 = vmul.f32 %v1295, %v1305
        %v1316 = vmul.f32 %v1296, %v1305
        %v1317 = vmul.f32 %v1297, %v1305
        %v1318 = vmul.f32 %v1298, %v1305
        %v1319 = vmul.f32 %v1299, %v1305
        %v1320 = vmul.f32 %v1300, %v1305
        %v1321 = vmul.f32 %v1301, %v1305
        %v1322 = vmul.f32 %v1302, %v1305
        %v1323 = vld [vmem:[%s6] sm:$0x1]
        %v1325 = vperm.slane %v1323, 0
        %v1327 = vadd.f32 %v1307, %v1325
        %v1328 = vadd.f32 %v1308, %v1325
        %v1329 = vadd.f32 %v1309, %v1325
        %v1330 = vadd.f32 %v1310, %v1325
        %v1331 = vadd.f32 %v1311, %v1325
        %v1332 = vadd.f32 %v1312, %v1325
        %v1333 = vadd.f32 %v1313, %v1325
        %v1334 = vadd.f32 %v1314, %v1325
        %v1335 = vadd.f32 %v1315, %v1325
        %v1336 = vadd.f32 %v1316, %v1325
        %v1337 = vadd.f32 %v1317, %v1325
        %v1338 = vadd.f32 %v1318, %v1325
        %v1339 = vadd.f32 %v1319, %v1325
        %v1340 = vadd.f32 %v1320, %v1325
        %v1341 = vadd.f32 %v1321, %v1325
        %v1342 = vadd.f32 %v1322, %v1325
        %v1343 = vmax.f32 %v1327, 0.0
        %v1344 = vmax.f32 %v1328, 0.0
        %v1345 = vmax.f32 %v1329, 0.0
        %v1346 = vmax.f32 %v1330, 0.0
        %v1347 = vmax.f32 %v1331, 0.0
        %v1348 = vmax.f32 %v1332, 0.0
        %v1349 = vmax.f32 %v1333, 0.0
        %v1350 = vmax.f32 %v1334, 0.0
        %v1351 = vmax.f32 %v1335, 0.0
        %v1352 = vmax.f32 %v1336, 0.0
        %v1353 = vmax.f32 %v1337, 0.0
        %v1354 = vmax.f32 %v1338, 0.0
        %v1355 = vmax.f32 %v1339, 0.0
        %v1356 = vmax.f32 %v1340, 0.0
        %v1357 = vmax.f32 %v1341, 0.0
        %v1358 = vmax.f32 %v1342, 0.0
        %v1359 = vpack.c.bf16 %v1344, %v1343
        %v1360 = vpack.c.bf16 %v1346, %v1345
        %v1361 = vpack.c.bf16 %v1348, %v1347
        %v1362 = vpack.c.bf16 %v1350, %v1349
        %v1363 = vpack.c.bf16 %v1352, %v1351
        %v1364 = vpack.c.bf16 %v1354, %v1353
        %v1365 = vpack.c.bf16 %v1356, %v1355
        %v1366 = vpack.c.bf16 %v1358, %v1357
        %v1367 = vld [vmem:[%s7] sm:$0xf]
        %v1368 = vld [vmem:[%s7 + $0x4] sm:$0xf]
        %v1369 = vld [vmem:[%s7 + $0x8] sm:$0xf]
        %v1370 = vld [vmem:[%s7 + $0xc] sm:$0xf]
        %v1371 = vld [vmem:[%s7 + $0x10] sm:$0xf]
        %v1372 = vld [vmem:[%s7 + $0x14] sm:$0xf]
        %v1373 = vld [vmem:[%s7 + $0x18] sm:$0xf]
        %v1374 = vld [vmem:[%s7 + $0x1c] sm:$0xf]
        %v1375 = vld [vmem:[%s7 + $0x20] sm:$0xf]
        %v1376 = vld [vmem:[%s7 + $0x24] sm:$0xf]
        %v1377 = vld [vmem:[%s7 + $0x28] sm:$0xf]
        %v1378 = vld [vmem:[%s7 + $0x2c] sm:$0xf]
        %v1379 = vld [vmem:[%s7 + $0x30] sm:$0xf]
        %v1380 = vld [vmem:[%s7 + $0x34] sm:$0xf]
        %v1381 = vld [vmem:[%s7 + $0x38] sm:$0xf]
        %v1382 = vld [vmem:[%s7 + $0x3c] sm:$0xf]
        %v1399 = vunpack.c.l.b16 %v1367
        %v1400 = vunpack.c.l.b16 %v1368
        %v1401 = vunpack.c.l.b16 %v1369
        %v1402 = vunpack.c.l.b16 %v1370
        %v1403 = vunpack.c.l.b16 %v1371
        %v1404 = vunpack.c.l.b16 %v1372
        %v1405 = vunpack.c.l.b16 %v1373
        %v1406 = vunpack.c.l.b16 %v1374
        %v1407 = vunpack.c.l.b16 %v1375
        %v1408 = vunpack.c.l.b16 %v1376
        %v1409 = vunpack.c.l.b16 %v1377
        %v1410 = vunpack.c.l.b16 %v1378
        %v1411 = vunpack.c.l.b16 %v1379
        %v1412 = vunpack.c.l.b16 %v1380
        %v1413 = vunpack.c.l.b16 %v1381
        %v1414 = vunpack.c.l.b16 %v1382
        %v1415 = vpack.c.b16 %v1400, %v1399
        %v1416 = vpack.c.b16 %v1402, %v1401
        %v1417 = vpack.c.b16 %v1404, %v1403
        %v1418 = vpack.c.b16 %v1406, %v1405
        %v1419 = vpack.c.b16 %v1408, %v1407
        %v1420 = vpack.c.b16 %v1410, %v1409
        %v1421 = vpack.c.b16 %v1412, %v1411
        %v1422 = vpack.c.b16 %v1414, %v1413
        %1431 = vmatpush.bf16.msra.mxu0 %v1422
        %1432 = vmatpush.bf16.msra.mxu0 %v1421
        %1433 = vmatpush.bf16.msra.mxu0 %v1420
        %1434 = vmatpush.bf16.msra.mxu0 %v1419
        %1435 = vmatpush.bf16.msra.mxu0 %v1418
        %1436 = vmatpush.bf16.msra.mxu0 %v1417
        %1437 = vmatpush.bf16.msra.mxu0 %v1416
        %1438 = vmatpush.bf16.msra.mxu0 %v1415
        %1439 = vmatmul.bf16.gmra.mxu0 %v1359
        %v1440 = vpop.f32.mrf.mxu0
        %v1441 = vadd.f32 0.0, %v1440
        %v1442 = vpop.f32.mrf.mxu0
        %v1443 = vadd.f32 0.0, %v1442
        %1444 = vmatmul.bf16.gmra.mxu0 %v1360
        %v1445 = vpop.f32.mrf.mxu0
        %v1446 = vadd.f32 0.0, %v1445
        %v1447 = vpop.f32.mrf.mxu0
        %v1448 = vadd.f32 0.0, %v1447
        %1449 = vmatmul.bf16.gmra.mxu0 %v1361
        %v1450 = vpop.f32.mrf.mxu0
        %v1451 = vadd.f32 0.0, %v1450
        %v1452 = vpop.f32.mrf.mxu0
        %v1453 = vadd.f32 0.0, %v1452
        %1454 = vmatmul.bf16.gmra.mxu0 %v1362
        %v1455 = vpop.f32.mrf.mxu0
        %v1456 = vadd.f32 0.0, %v1455
        %v1457 = vpop.f32.mrf.mxu0
        %v1458 = vadd.f32 0.0, %v1457
        %1459 = vmatmul.bf16.gmra.mxu0 %v1363
        %v1460 = vpop.f32.mrf.mxu0
        %v1461 = vadd.f32 0.0, %v1460
        %v1462 = vpop.f32.mrf.mxu0
        %v1463 = vadd.f32 0.0, %v1462
        %1464 = vmatmul.bf16.gmra.mxu0 %v1364
        %v1465 = vpop.f32.mrf.mxu0
        %v1466 = vadd.f32 0.0, %v1465
        %v1467 = vpop.f32.mrf.mxu0
        %v1468 = vadd.f32 0.0, %v1467
        %1469 = vmatmul.bf16.gmra.mxu0 %v1365
        %v1470 = vpop.f32.mrf.mxu0
        %v1471 = vadd.f32 0.0, %v1470
        %v1472 = vpop.f32.mrf.mxu0
        %v1473 = vadd.f32 0.0, %v1472
        %1474 = vmatmul.bf16.gmra.mxu0 %v1366
        %v1475 = vpop.f32.mrf.mxu0
        %v1476 = vadd.f32 0.0, %v1475
        %v1477 = vpop.f32.mrf.mxu0
        %v1478 = vadd.f32 0.0, %v1477
        %1479 = vdwg.mxu0
        %v1480 = vadd.f32 %v1287, %v1441
        %v1481 = vadd.f32 %v1288, %v1443
        %v1482 = vadd.f32 %v1289, %v1446
        %v1483 = vadd.f32 %v1290, %v1448
        %v1484 = vadd.f32 %v1291, %v1451
        %v1485 = vadd.f32 %v1292, %v1453
        %v1486 = vadd.f32 %v1293, %v1456
        %v1487 = vadd.f32 %v1294, %v1458
        %v1488 = vadd.f32 %v1295, %v1461
        %v1489 = vadd.f32 %v1296, %v1463
        %v1490 = vadd.f32 %v1297, %v1466
        %v1491 = vadd.f32 %v1298, %v1468
        %v1492 = vadd.f32 %v1299, %v1471
        %v1493 = vadd.f32 %v1300, %v1473
        %v1494 = vadd.f32 %v1301, %v1476
        %v1495 = vadd.f32 %v1302, %v1478
        %v1496 = vld [vmem:[%s8] sm:$0x1]
        %v1498 = vperm.slane %v1496, 0
        %v1500 = vadd.f32 %v1480, %v1498
        %v1501 = vadd.f32 %v1481, %v1498
        %v1502 = vadd.f32 %v1482, %v1498
        %v1503 = vadd.f32 %v1483, %v1498
        %v1504 = vadd.f32 %v1484, %v1498
        %v1505 = vadd.f32 %v1485, %v1498
        %v1506 = vadd.f32 %v1486, %v1498
        %v1507 = vadd.f32 %v1487, %v1498
        %v1508 = vadd.f32 %v1488, %v1498
        %v1509 = vadd.f32 %v1489, %v1498
        %v1510 = vadd.f32 %v1490, %v1498
        %v1511 = vadd.f32 %v1491, %v1498
        %v1512 = vadd.f32 %v1492, %v1498
        %v1513 = vadd.f32 %v1493, %v1498
        %v1514 = vadd.f32 %v1494, %v1498
        %v1515 = vadd.f32 %v1495, %v1498
        %1516 = vadd.xlane.f32.xlu0 %v1500
        %v1517 = vpop.xlane.xlu0 %1516
        %1518 = vadd.xlane.f32.xlu0 %v1501
        %v1519 = vpop.xlane.xlu0 %1518
        %1520 = vadd.xlane.f32.xlu0 %v1502
        %v1521 = vpop.xlane.xlu0 %1520
        %1522 = vadd.xlane.f32.xlu0 %v1503
        %v1523 = vpop.xlane.xlu0 %1522
        %1524 = vadd.xlane.f32.xlu0 %v1504
        %v1525 = vpop.xlane.xlu0 %1524
        %1526 = vadd.xlane.f32.xlu0 %v1505
        %v1527 = vpop.xlane.xlu0 %1526
        %1528 = vadd.xlane.f32.xlu0 %v1506
        %v1529 = vpop.xlane.xlu0 %1528
        %1530 = vadd.xlane.f32.xlu0 %v1507
        %v1531 = vpop.xlane.xlu0 %1530
        %1532 = vadd.xlane.f32.xlu0 %v1508
        %v1533 = vpop.xlane.xlu0 %1532
        %1534 = vadd.xlane.f32.xlu0 %v1509
        %v1535 = vpop.xlane.xlu0 %1534
        %1536 = vadd.xlane.f32.xlu0 %v1510
        %v1537 = vpop.xlane.xlu0 %1536
        %1538 = vadd.xlane.f32.xlu0 %v1511
        %v1539 = vpop.xlane.xlu0 %1538
        %1540 = vadd.xlane.f32.xlu0 %v1512
        %v1541 = vpop.xlane.xlu0 %1540
        %1542 = vadd.xlane.f32.xlu0 %v1513
        %v1543 = vpop.xlane.xlu0 %1542
        %1544 = vadd.xlane.f32.xlu0 %v1514
        %v1545 = vpop.xlane.xlu0 %1544
        %1546 = vadd.xlane.f32.xlu0 %v1515
        %v1547 = vpop.xlane.xlu0 %1546
        %v1548 = vmul.f32 %v1517, 0.010416667
        %v1549 = vmul.f32 %v1519, 0.010416667
        %v1550 = vmul.f32 %v1521, 0.010416667
        %v1551 = vmul.f32 %v1523, 0.010416667
        %v1552 = vmul.f32 %v1525, 0.010416667
        %v1553 = vmul.f32 %v1527, 0.010416667
        %v1554 = vmul.f32 %v1529, 0.010416667
        %v1555 = vmul.f32 %v1531, 0.010416667
        %v1556 = vmul.f32 %v1533, 0.010416667
        %v1557 = vmul.f32 %v1535, 0.010416667
        %v1558 = vmul.f32 %v1537, 0.010416667
        %v1559 = vmul.f32 %v1539, 0.010416667
        %v1560 = vmul.f32 %v1541, 0.010416667
        %v1561 = vmul.f32 %v1543, 0.010416667
        %v1562 = vmul.f32 %v1545, 0.010416667
        %v1563 = vmul.f32 %v1547, 0.010416667
        %v1564 = vmul.f32 %v1500, %v1500
        %v1565 = vmul.f32 %v1501, %v1501
        %v1566 = vmul.f32 %v1502, %v1502
        %v1567 = vmul.f32 %v1503, %v1503
        %v1568 = vmul.f32 %v1504, %v1504
        %v1569 = vmul.f32 %v1505, %v1505
        %v1570 = vmul.f32 %v1506, %v1506
        %v1571 = vmul.f32 %v1507, %v1507
        %v1572 = vmul.f32 %v1508, %v1508
        %v1573 = vmul.f32 %v1509, %v1509
        %v1574 = vmul.f32 %v1510, %v1510
        %v1575 = vmul.f32 %v1511, %v1511
        %v1576 = vmul.f32 %v1512, %v1512
        %v1577 = vmul.f32 %v1513, %v1513
        %v1578 = vmul.f32 %v1514, %v1514
        %v1579 = vmul.f32 %v1515, %v1515
        %1580 = vadd.xlane.f32.xlu0 %v1564
        %v1581 = vpop.xlane.xlu0 %1580
        %1582 = vadd.xlane.f32.xlu0 %v1565
        %v1583 = vpop.xlane.xlu0 %1582
        %1584 = vadd.xlane.f32.xlu0 %v1566
        %v1585 = vpop.xlane.xlu0 %1584
        %1586 = vadd.xlane.f32.xlu0 %v1567
        %v1587 = vpop.xlane.xlu0 %1586
        %1588 = vadd.xlane.f32.xlu0 %v1568
        %v1589 = vpop.xlane.xlu0 %1588
        %1590 = vadd.xlane.f32.xlu0 %v1569
        %v1591 = vpop.xlane.xlu0 %1590
        %1592 = vadd.xlane.f32.xlu0 %v1570
        %v1593 = vpop.xlane.xlu0 %1592
        %1594 = vadd.xlane.f32.xlu0 %v1571
        %v1595 = vpop.xlane.xlu0 %1594
        %1596 = vadd.xlane.f32.xlu0 %v1572
        %v1597 = vpop.xlane.xlu0 %1596
        %1598 = vadd.xlane.f32.xlu0 %v1573
        %v1599 = vpop.xlane.xlu0 %1598
        %1600 = vadd.xlane.f32.xlu0 %v1574
        %v1601 = vpop.xlane.xlu0 %1600
        %1602 = vadd.xlane.f32.xlu0 %v1575
        %v1603 = vpop.xlane.xlu0 %1602
        %1604 = vadd.xlane.f32.xlu0 %v1576
        %v1605 = vpop.xlane.xlu0 %1604
        %1606 = vadd.xlane.f32.xlu0 %v1577
        %v1607 = vpop.xlane.xlu0 %1606
        %1608 = vadd.xlane.f32.xlu0 %v1578
        %v1609 = vpop.xlane.xlu0 %1608
        %1610 = vadd.xlane.f32.xlu0 %v1579
        %v1611 = vpop.xlane.xlu0 %1610
        %v1612 = vmul.f32 %v1581, 0.010416667
        %v1613 = vmul.f32 %v1583, 0.010416667
        %v1614 = vmul.f32 %v1585, 0.010416667
        %v1615 = vmul.f32 %v1587, 0.010416667
        %v1616 = vmul.f32 %v1589, 0.010416667
        %v1617 = vmul.f32 %v1591, 0.010416667
        %v1618 = vmul.f32 %v1593, 0.010416667
        %v1619 = vmul.f32 %v1595, 0.010416667
        %v1620 = vmul.f32 %v1597, 0.010416667
        %v1621 = vmul.f32 %v1599, 0.010416667
        %v1622 = vmul.f32 %v1601, 0.010416667
        %v1623 = vmul.f32 %v1603, 0.010416667
        %v1624 = vmul.f32 %v1605, 0.010416667
        %v1625 = vmul.f32 %v1607, 0.010416667
        %v1626 = vmul.f32 %v1609, 0.010416667
        %v1627 = vmul.f32 %v1611, 0.010416667
        %v1628 = vmul.f32 %v1548, %v1548
        %v1629 = vmul.f32 %v1549, %v1549
        %v1630 = vmul.f32 %v1550, %v1550
        %v1631 = vmul.f32 %v1551, %v1551
        %v1632 = vmul.f32 %v1552, %v1552
        %v1633 = vmul.f32 %v1553, %v1553
        %v1634 = vmul.f32 %v1554, %v1554
        %v1635 = vmul.f32 %v1555, %v1555
        %v1636 = vmul.f32 %v1556, %v1556
        %v1637 = vmul.f32 %v1557, %v1557
        %v1638 = vmul.f32 %v1558, %v1558
        %v1639 = vmul.f32 %v1559, %v1559
        %v1640 = vmul.f32 %v1560, %v1560
        %v1641 = vmul.f32 %v1561, %v1561
        %v1642 = vmul.f32 %v1562, %v1562
        %v1643 = vmul.f32 %v1563, %v1563
        %v1644 = vsub.f32 %v1612, %v1628
        %v1645 = vsub.f32 %v1613, %v1629
        %v1646 = vsub.f32 %v1614, %v1630
        %v1647 = vsub.f32 %v1615, %v1631
        %v1648 = vsub.f32 %v1616, %v1632
        %v1649 = vsub.f32 %v1617, %v1633
        %v1650 = vsub.f32 %v1618, %v1634
        %v1651 = vsub.f32 %v1619, %v1635
        %v1652 = vsub.f32 %v1620, %v1636
        %v1653 = vsub.f32 %v1621, %v1637
        %v1654 = vsub.f32 %v1622, %v1638
        %v1655 = vsub.f32 %v1623, %v1639
        %v1656 = vsub.f32 %v1624, %v1640
        %v1657 = vsub.f32 %v1625, %v1641
        %v1658 = vsub.f32 %v1626, %v1642
        %v1659 = vsub.f32 %v1627, %v1643
        %v1660 = vmax.f32 %v1644, 0.0
        %v1661 = vmax.f32 %v1645, 0.0
        %v1662 = vmax.f32 %v1646, 0.0
        %v1663 = vmax.f32 %v1647, 0.0
        %v1664 = vmax.f32 %v1648, 0.0
        %v1665 = vmax.f32 %v1649, 0.0
        %v1666 = vmax.f32 %v1650, 0.0
        %v1667 = vmax.f32 %v1651, 0.0
        %v1668 = vmax.f32 %v1652, 0.0
        %v1669 = vmax.f32 %v1653, 0.0
        %v1670 = vmax.f32 %v1654, 0.0
        %v1671 = vmax.f32 %v1655, 0.0
        %v1672 = vmax.f32 %v1656, 0.0
        %v1673 = vmax.f32 %v1657, 0.0
        %v1674 = vmax.f32 %v1658, 0.0
        %v1675 = vmax.f32 %v1659, 0.0
        %v1676 = vadd.f32 %v1660, 0.001
        %v1677 = vadd.f32 %v1661, 0.001
        %v1678 = vadd.f32 %v1662, 0.001
        %v1679 = vadd.f32 %v1663, 0.001
        %v1680 = vadd.f32 %v1664, 0.001
        %v1681 = vadd.f32 %v1665, 0.001
        %v1682 = vadd.f32 %v1666, 0.001
        %v1683 = vadd.f32 %v1667, 0.001
        %v1684 = vadd.f32 %v1668, 0.001
        %v1685 = vadd.f32 %v1669, 0.001
        %v1686 = vadd.f32 %v1670, 0.001
        %v1687 = vadd.f32 %v1671, 0.001
        %v1688 = vadd.f32 %v1672, 0.001
        %v1689 = vadd.f32 %v1673, 0.001
        %v1690 = vadd.f32 %v1674, 0.001
        %v1691 = vadd.f32 %v1675, 0.001
        %v1692 = vrsqrt.pop %v1676
        %v1693 = vmul.f32 %v1692, %v1676
        %v1694 = vmul.f32 %v1693, %v1692
        %v1695 = vmul.f32 0.5, %v1694
        %v1696 = vsub.f32 1.5, %v1695
        %v1697 = vmul.f32 %v1692, %v1696
        %vm1698 = vweird.f32 %v1676
        %vm1699 = vweird.f32 %v1692
        %vm1700 = vmor %vm1698, %vm1699
        %v1701 = vsel %vm1700, %v1692, %v1697
        %v1702 = vrsqrt.pop %v1677
        %v1703 = vmul.f32 %v1702, %v1677
        %v1704 = vmul.f32 %v1703, %v1702
        %v1705 = vmul.f32 0.5, %v1704
        %v1706 = vsub.f32 1.5, %v1705
        %v1707 = vmul.f32 %v1702, %v1706
        %vm1708 = vweird.f32 %v1677
        %vm1709 = vweird.f32 %v1702
        %vm1710 = vmor %vm1708, %vm1709
        %v1711 = vsel %vm1710, %v1702, %v1707
        %v1712 = vrsqrt.pop %v1678
        %v1713 = vmul.f32 %v1712, %v1678
        %v1714 = vmul.f32 %v1713, %v1712
        %v1715 = vmul.f32 0.5, %v1714
        %v1716 = vsub.f32 1.5, %v1715
        %v1717 = vmul.f32 %v1712, %v1716
        %vm1718 = vweird.f32 %v1678
        %vm1719 = vweird.f32 %v1712
        %vm1720 = vmor %vm1718, %vm1719
        %v1721 = vsel %vm1720, %v1712, %v1717
        %v1722 = vrsqrt.pop %v1679
        %v1723 = vmul.f32 %v1722, %v1679
        %v1724 = vmul.f32 %v1723, %v1722
        %v1725 = vmul.f32 0.5, %v1724
        %v1726 = vsub.f32 1.5, %v1725
        %v1727 = vmul.f32 %v1722, %v1726
        %vm1728 = vweird.f32 %v1679
        %vm1729 = vweird.f32 %v1722
        %vm1730 = vmor %vm1728, %vm1729
        %v1731 = vsel %vm1730, %v1722, %v1727
        %v1732 = vrsqrt.pop %v1680
        %v1733 = vmul.f32 %v1732, %v1680
        %v1734 = vmul.f32 %v1733, %v1732
        %v1735 = vmul.f32 0.5, %v1734
        %v1736 = vsub.f32 1.5, %v1735
        %v1737 = vmul.f32 %v1732, %v1736
        %vm1738 = vweird.f32 %v1680
        %vm1739 = vweird.f32 %v1732
        %vm1740 = vmor %vm1738, %vm1739
        %v1741 = vsel %vm1740, %v1732, %v1737
        %v1742 = vrsqrt.pop %v1681
        %v1743 = vmul.f32 %v1742, %v1681
        %v1744 = vmul.f32 %v1743, %v1742
        %v1745 = vmul.f32 0.5, %v1744
        %v1746 = vsub.f32 1.5, %v1745
        %v1747 = vmul.f32 %v1742, %v1746
        %vm1748 = vweird.f32 %v1681
        %vm1749 = vweird.f32 %v1742
        %vm1750 = vmor %vm1748, %vm1749
        %v1751 = vsel %vm1750, %v1742, %v1747
        %v1752 = vrsqrt.pop %v1682
        %v1753 = vmul.f32 %v1752, %v1682
        %v1754 = vmul.f32 %v1753, %v1752
        %v1755 = vmul.f32 0.5, %v1754
        %v1756 = vsub.f32 1.5, %v1755
        %v1757 = vmul.f32 %v1752, %v1756
        %vm1758 = vweird.f32 %v1682
        %vm1759 = vweird.f32 %v1752
        %vm1760 = vmor %vm1758, %vm1759
        %v1761 = vsel %vm1760, %v1752, %v1757
        %v1762 = vrsqrt.pop %v1683
        %v1763 = vmul.f32 %v1762, %v1683
        %v1764 = vmul.f32 %v1763, %v1762
        %v1765 = vmul.f32 0.5, %v1764
        %v1766 = vsub.f32 1.5, %v1765
        %v1767 = vmul.f32 %v1762, %v1766
        %vm1768 = vweird.f32 %v1683
        %vm1769 = vweird.f32 %v1762
        %vm1770 = vmor %vm1768, %vm1769
        %v1771 = vsel %vm1770, %v1762, %v1767
        %v1772 = vrsqrt.pop %v1684
        %v1773 = vmul.f32 %v1772, %v1684
        %v1774 = vmul.f32 %v1773, %v1772
        %v1775 = vmul.f32 0.5, %v1774
        %v1776 = vsub.f32 1.5, %v1775
        %v1777 = vmul.f32 %v1772, %v1776
        %vm1778 = vweird.f32 %v1684
        %vm1779 = vweird.f32 %v1772
        %vm1780 = vmor %vm1778, %vm1779
        %v1781 = vsel %vm1780, %v1772, %v1777
        %v1782 = vrsqrt.pop %v1685
        %v1783 = vmul.f32 %v1782, %v1685
        %v1784 = vmul.f32 %v1783, %v1782
        %v1785 = vmul.f32 0.5, %v1784
        %v1786 = vsub.f32 1.5, %v1785
        %v1787 = vmul.f32 %v1782, %v1786
        %vm1788 = vweird.f32 %v1685
        %vm1789 = vweird.f32 %v1782
        %vm1790 = vmor %vm1788, %vm1789
        %v1791 = vsel %vm1790, %v1782, %v1787
        %v1792 = vrsqrt.pop %v1686
        %v1793 = vmul.f32 %v1792, %v1686
        %v1794 = vmul.f32 %v1793, %v1792
        %v1795 = vmul.f32 0.5, %v1794
        %v1796 = vsub.f32 1.5, %v1795
        %v1797 = vmul.f32 %v1792, %v1796
        %vm1798 = vweird.f32 %v1686
        %vm1799 = vweird.f32 %v1792
        %vm1800 = vmor %vm1798, %vm1799
        %v1801 = vsel %vm1800, %v1792, %v1797
        %v1802 = vrsqrt.pop %v1687
        %v1803 = vmul.f32 %v1802, %v1687
        %v1804 = vmul.f32 %v1803, %v1802
        %v1805 = vmul.f32 0.5, %v1804
        %v1806 = vsub.f32 1.5, %v1805
        %v1807 = vmul.f32 %v1802, %v1806
        %vm1808 = vweird.f32 %v1687
        %vm1809 = vweird.f32 %v1802
        %vm1810 = vmor %vm1808, %vm1809
        %v1811 = vsel %vm1810, %v1802, %v1807
        %v1812 = vrsqrt.pop %v1688
        %v1813 = vmul.f32 %v1812, %v1688
        %v1814 = vmul.f32 %v1813, %v1812
        %v1815 = vmul.f32 0.5, %v1814
        %v1816 = vsub.f32 1.5, %v1815
        %v1817 = vmul.f32 %v1812, %v1816
        %vm1818 = vweird.f32 %v1688
        %vm1819 = vweird.f32 %v1812
        %vm1820 = vmor %vm1818, %vm1819
        %v1821 = vsel %vm1820, %v1812, %v1817
        %v1822 = vrsqrt.pop %v1689
        %v1823 = vmul.f32 %v1822, %v1689
        %v1824 = vmul.f32 %v1823, %v1822
        %v1825 = vmul.f32 0.5, %v1824
        %v1826 = vsub.f32 1.5, %v1825
        %v1827 = vmul.f32 %v1822, %v1826
        %vm1828 = vweird.f32 %v1689
        %vm1829 = vweird.f32 %v1822
        %vm1830 = vmor %vm1828, %vm1829
        %v1831 = vsel %vm1830, %v1822, %v1827
        %v1832 = vrsqrt.pop %v1690
        %v1833 = vmul.f32 %v1832, %v1690
        %v1834 = vmul.f32 %v1833, %v1832
        %v1835 = vmul.f32 0.5, %v1834
        %v1836 = vsub.f32 1.5, %v1835
        %v1837 = vmul.f32 %v1832, %v1836
        %vm1838 = vweird.f32 %v1690
        %vm1839 = vweird.f32 %v1832
        %vm1840 = vmor %vm1838, %vm1839
        %v1841 = vsel %vm1840, %v1832, %v1837
        %v1842 = vrsqrt.pop %v1691
        %v1843 = vmul.f32 %v1842, %v1691
        %v1844 = vmul.f32 %v1843, %v1842
        %v1845 = vmul.f32 0.5, %v1844
        %v1846 = vsub.f32 1.5, %v1845
        %v1847 = vmul.f32 %v1842, %v1846
        %vm1848 = vweird.f32 %v1691
        %vm1849 = vweird.f32 %v1842
        %vm1850 = vmor %vm1848, %vm1849
        %v1851 = vsel %vm1850, %v1842, %v1847
        %v1852 = vld [vmem:[%s9] sm:$0xff]
        %v1853 = vld [vmem:[%s9 + $0x8] sm:$0xff]
        %v1854 = vld [vmem:[%s9 + $0x10] sm:$0xff]
        %v1855 = vld [vmem:[%s9 + $0x18] sm:$0xff]
        %v1856 = vmul.f32 %v1701, %v1852
        %v1857 = vmul.f32 %v1711, %v1853
        %v1858 = vmul.f32 %v1721, %v1854
        %v1859 = vmul.f32 %v1731, %v1855
        %v1860 = vmul.f32 %v1741, %v1852
        %v1861 = vmul.f32 %v1751, %v1853
        %v1862 = vmul.f32 %v1761, %v1854
        %v1863 = vmul.f32 %v1771, %v1855
        %v1864 = vmul.f32 %v1781, %v1852
        %v1865 = vmul.f32 %v1791, %v1853
        %v1866 = vmul.f32 %v1801, %v1854
        %v1867 = vmul.f32 %v1811, %v1855
        %v1868 = vmul.f32 %v1821, %v1852
        %v1869 = vmul.f32 %v1831, %v1853
        %v1870 = vmul.f32 %v1841, %v1854
        %v1871 = vmul.f32 %v1851, %v1855
        %v1872 = vld [vmem:[%s10] sm:$0xff]
        %v1873 = vld [vmem:[%s10 + $0x8] sm:$0xff]
        %v1874 = vld [vmem:[%s10 + $0x10] sm:$0xff]
        %v1875 = vld [vmem:[%s10 + $0x18] sm:$0xff]
        %v1876 = vmul.f32 %v1548, %v1856
        %v1877 = vmul.f32 %v1549, %v1857
        %v1878 = vmul.f32 %v1550, %v1858
        %v1879 = vmul.f32 %v1551, %v1859
        %v1880 = vmul.f32 %v1552, %v1860
        %v1881 = vmul.f32 %v1553, %v1861
        %v1882 = vmul.f32 %v1554, %v1862
        %v1883 = vmul.f32 %v1555, %v1863
        %v1884 = vmul.f32 %v1556, %v1864
        %v1885 = vmul.f32 %v1557, %v1865
        %v1886 = vmul.f32 %v1558, %v1866
        %v1887 = vmul.f32 %v1559, %v1867
        %v1888 = vmul.f32 %v1560, %v1868
        %v1889 = vmul.f32 %v1561, %v1869
        %v1890 = vmul.f32 %v1562, %v1870
        %v1891 = vmul.f32 %v1563, %v1871
        %v1892 = vsub.f32 %v1872, %v1876
        %v1893 = vsub.f32 %v1873, %v1877
        %v1894 = vsub.f32 %v1874, %v1878
        %v1895 = vsub.f32 %v1875, %v1879
        %v1896 = vsub.f32 %v1872, %v1880
        %v1897 = vsub.f32 %v1873, %v1881
        %v1898 = vsub.f32 %v1874, %v1882
        %v1899 = vsub.f32 %v1875, %v1883
        %v1900 = vsub.f32 %v1872, %v1884
        %v1901 = vsub.f32 %v1873, %v1885
        %v1902 = vsub.f32 %v1874, %v1886
        %v1903 = vsub.f32 %v1875, %v1887
        %v1904 = vsub.f32 %v1872, %v1888
        %v1905 = vsub.f32 %v1873, %v1889
        %v1906 = vsub.f32 %v1874, %v1890
        %v1907 = vsub.f32 %v1875, %v1891
        %1909 = vset.pattern.permute.xlu0 0
        %1910 = vperm.xlu0 %1909, %v1856
        %v1911 = vpop.permute.xlu0 %1910
        %1914 = vset.pattern.permute.xlu0 0
        %1915 = vperm.xlu0 %1914, %v1857
        %v1916 = vpop.permute.xlu0 %1915
        %1919 = vset.pattern.permute.xlu0 0
        %1920 = vperm.xlu0 %1919, %v1858
        %v1921 = vpop.permute.xlu0 %1920
        %1924 = vset.pattern.permute.xlu0 0
        %1925 = vperm.xlu0 %1924, %v1859
        %v1926 = vpop.permute.xlu0 %1925
        %1929 = vset.pattern.permute.xlu0 0
        %1930 = vperm.xlu0 %1929, %v1860
        %v1931 = vpop.permute.xlu0 %1930
        %1934 = vset.pattern.permute.xlu0 0
        %1935 = vperm.xlu0 %1934, %v1861
        %v1936 = vpop.permute.xlu0 %1935
        %1939 = vset.pattern.permute.xlu0 0
        %1940 = vperm.xlu0 %1939, %v1862
        %v1941 = vpop.permute.xlu0 %1940
        %1944 = vset.pattern.permute.xlu0 0
        %1945 = vperm.xlu0 %1944, %v1863
        %v1946 = vpop.permute.xlu0 %1945
        %1949 = vset.pattern.permute.xlu0 0
        %1950 = vperm.xlu0 %1949, %v1864
        %v1951 = vpop.permute.xlu0 %1950
        %1954 = vset.pattern.permute.xlu0 0
        %1955 = vperm.xlu0 %1954, %v1865
        %v1956 = vpop.permute.xlu0 %1955
        %1959 = vset.pattern.permute.xlu0 0
        %1960 = vperm.xlu0 %1959, %v1866
        %v1961 = vpop.permute.xlu0 %1960
        %1964 = vset.pattern.permute.xlu0 0
        %1965 = vperm.xlu0 %1964, %v1867
        %v1966 = vpop.permute.xlu0 %1965
        %1969 = vset.pattern.permute.xlu0 0
        %1970 = vperm.xlu0 %1969, %v1868
        %v1971 = vpop.permute.xlu0 %1970
        %1974 = vset.pattern.permute.xlu0 0
        %1975 = vperm.xlu0 %1974, %v1869
        %v1976 = vpop.permute.xlu0 %1975
        %1979 = vset.pattern.permute.xlu0 0
        %1980 = vperm.xlu0 %1979, %v1870
        %v1981 = vpop.permute.xlu0 %1980
        %1984 = vset.pattern.permute.xlu0 0
        %1985 = vperm.xlu0 %1984, %v1871
        %v1986 = vpop.permute.xlu0 %1985
        %v1988 = vmul.f32 %v1500, %v1911
        %v1989 = vmul.f32 %v1501, %v1916
        %v1990 = vmul.f32 %v1502, %v1921
        %v1991 = vmul.f32 %v1503, %v1926
        %v1992 = vmul.f32 %v1504, %v1931
        %v1993 = vmul.f32 %v1505, %v1936
        %v1994 = vmul.f32 %v1506, %v1941
        %v1995 = vmul.f32 %v1507, %v1946
        %v1996 = vmul.f32 %v1508, %v1951
        %v1997 = vmul.f32 %v1509, %v1956
        %v1998 = vmul.f32 %v1510, %v1961
        %v1999 = vmul.f32 %v1511, %v1966
        %v2000 = vmul.f32 %v1512, %v1971
        %v2001 = vmul.f32 %v1513, %v1976
        %v2002 = vmul.f32 %v1514, %v1981
        %v2003 = vmul.f32 %v1515, %v1986
        %2005 = vset.pattern.permute.xlu0 0
        %2006 = vperm.xlu0 %2005, %v1892
        %v2007 = vpop.permute.xlu0 %2006
        %2010 = vset.pattern.permute.xlu0 0
        %2011 = vperm.xlu0 %2010, %v1893
        %v2012 = vpop.permute.xlu0 %2011
        %2015 = vset.pattern.permute.xlu0 0
        %2016 = vperm.xlu0 %2015, %v1894
        %v2017 = vpop.permute.xlu0 %2016
        %2020 = vset.pattern.permute.xlu0 0
        %2021 = vperm.xlu0 %2020, %v1895
        %v2022 = vpop.permute.xlu0 %2021
        %2025 = vset.pattern.permute.xlu0 0
        %2026 = vperm.xlu0 %2025, %v1896
        %v2027 = vpop.permute.xlu0 %2026
        %2030 = vset.pattern.permute.xlu0 0
        %2031 = vperm.xlu0 %2030, %v1897
        %v2032 = vpop.permute.xlu0 %2031
        %2035 = vset.pattern.permute.xlu0 0
        %2036 = vperm.xlu0 %2035, %v1898
        %v2037 = vpop.permute.xlu0 %2036
        %2040 = vset.pattern.permute.xlu0 0
        %2041 = vperm.xlu0 %2040, %v1899
        %v2042 = vpop.permute.xlu0 %2041
        %2045 = vset.pattern.permute.xlu0 0
        %2046 = vperm.xlu0 %2045, %v1900
        %v2047 = vpop.permute.xlu0 %2046
        %2050 = vset.pattern.permute.xlu0 0
        %2051 = vperm.xlu0 %2050, %v1901
        %v2052 = vpop.permute.xlu0 %2051
        %2055 = vset.pattern.permute.xlu0 0
        %2056 = vperm.xlu0 %2055, %v1902
        %v2057 = vpop.permute.xlu0 %2056
        %2060 = vset.pattern.permute.xlu0 0
        %2061 = vperm.xlu0 %2060, %v1903
        %v2062 = vpop.permute.xlu0 %2061
        %2065 = vset.pattern.permute.xlu0 0
        %2066 = vperm.xlu0 %2065, %v1904
        %v2067 = vpop.permute.xlu0 %2066
        %2070 = vset.pattern.permute.xlu0 0
        %2071 = vperm.xlu0 %2070, %v1905
        %v2072 = vpop.permute.xlu0 %2071
        %2075 = vset.pattern.permute.xlu0 0
        %2076 = vperm.xlu0 %2075, %v1906
        %v2077 = vpop.permute.xlu0 %2076
        %2080 = vset.pattern.permute.xlu0 0
        %2081 = vperm.xlu0 %2080, %v1907
        %v2082 = vpop.permute.xlu0 %2081
        %v2084 = vadd.f32 %v1988, %v2007
        %v2085 = vadd.f32 %v1989, %v2012
        %v2086 = vadd.f32 %v1990, %v2017
        %v2087 = vadd.f32 %v1991, %v2022
        %v2088 = vadd.f32 %v1992, %v2027
        %v2089 = vadd.f32 %v1993, %v2032
        %v2090 = vadd.f32 %v1994, %v2037
        %v2091 = vadd.f32 %v1995, %v2042
        %v2092 = vadd.f32 %v1996, %v2047
        %v2093 = vadd.f32 %v1997, %v2052
        %v2094 = vadd.f32 %v1998, %v2057
        %v2095 = vadd.f32 %v1999, %v2062
        %v2096 = vadd.f32 %v2000, %v2067
        %v2097 = vadd.f32 %v2001, %v2072
        %v2098 = vadd.f32 %v2002, %v2077
        %v2099 = vadd.f32 %v2003, %v2082
        %v2100 = vmax.f32 %v2084, 0.0
        %v2101 = vmax.f32 %v2085, 0.0
        %v2102 = vmax.f32 %v2086, 0.0
        %v2103 = vmax.f32 %v2087, 0.0
        %v2104 = vmax.f32 %v2088, 0.0
        %v2105 = vmax.f32 %v2089, 0.0
        %v2106 = vmax.f32 %v2090, 0.0
        %v2107 = vmax.f32 %v2091, 0.0
        %v2108 = vmax.f32 %v2092, 0.0
        %v2109 = vmax.f32 %v2093, 0.0
        %v2110 = vmax.f32 %v2094, 0.0
        %v2111 = vmax.f32 %v2095, 0.0
        %v2112 = vmax.f32 %v2096, 0.0
        %v2113 = vmax.f32 %v2097, 0.0
        %v2114 = vmax.f32 %v2098, 0.0
        %v2115 = vmax.f32 %v2099, 0.0
        %v2116 = vpack.c.bf16 %v2100, %v2100
        %v2117 = vpack.c.bf16 %v2101, %v2101
        %v2118 = vpack.c.bf16 %v2102, %v2102
        %v2119 = vpack.c.bf16 %v2103, %v2103
        %v2120 = vpack.c.bf16 %v2104, %v2104
        %v2121 = vpack.c.bf16 %v2105, %v2105
        %v2122 = vpack.c.bf16 %v2106, %v2106
        %v2123 = vpack.c.bf16 %v2107, %v2107
        %v2124 = vpack.c.bf16 %v2108, %v2108
        %v2125 = vpack.c.bf16 %v2109, %v2109
        %v2126 = vpack.c.bf16 %v2110, %v2110
        %v2127 = vpack.c.bf16 %v2111, %v2111
        %v2128 = vpack.c.bf16 %v2112, %v2112
        %v2129 = vpack.c.bf16 %v2113, %v2113
        %v2130 = vpack.c.bf16 %v2114, %v2114
        %v2131 = vpack.c.bf16 %v2115, %v2115
        %v2132 = vld [vmem:[%s11] sm:$0xf]
        %v2133 = vld [vmem:[%s11 + $0x4] sm:$0xf]
        %v2134 = vld [vmem:[%s11 + $0x8] sm:$0xf]
        %v2135 = vld [vmem:[%s11 + $0xc] sm:$0xf]
        %v2136 = vld [vmem:[%s12] sm:$0xff]
        %v2137 = vld [vmem:[%s12 + $0x8] sm:$0xff]
        %v2138 = vld [vmem:[%s12 + $0x10] sm:$0xff]
        %v2139 = vld [vmem:[%s12 + $0x18] sm:$0xff]
        %2141 = vset.pattern.permute.xlu0 0
        %2142 = vperm.xlu0 %2141, %v2136
        %v2143 = vpop.permute.xlu0 %2142
        %2146 = vset.pattern.permute.xlu0 0
        %2147 = vperm.xlu0 %2146, %v2137
        %v2148 = vpop.permute.xlu0 %2147
        %2151 = vset.pattern.permute.xlu0 0
        %2152 = vperm.xlu0 %2151, %v2138
        %v2153 = vpop.permute.xlu0 %2152
        %2156 = vset.pattern.permute.xlu0 0
        %2157 = vperm.xlu0 %2156, %v2139
        %v2158 = vpop.permute.xlu0 %2157
        %v2164 = vunpack.c.l.b16 %v2132
        %v2165 = vunpack.c.l.b16 %v2133
        %v2166 = vunpack.c.l.b16 %v2134
        %v2167 = vunpack.c.l.b16 %v2135
        %v2168 = vpack.c.b16 %v2165, %v2164
        %v2169 = vpack.c.b16 %v2167, %v2166
        %v2174 = vunpack.c.l.b16 %v2116
        %v2175 = vunpack.c.l.b16 %v2117
        %v2176 = vunpack.c.l.b16 %v2118
        %v2177 = vunpack.c.l.b16 %v2119
        %v2178 = vpack.c.b16 %v2175, %v2174
        %v2179 = vpack.c.b16 %v2177, %v2176
        %v2183 = vsel %vm1163, %v2168, 0
        %v2186 = vsel %vm1163, %v2169, 0
        %2188 = vmatpush.bf16.msra.mxu0 0
        %2189 = vmatpush.bf16.msra.mxu0 0
        %2190 = vmatpush.bf16.msra.mxu0 0
        %2191 = vmatpush.bf16.msra.mxu0 0
        %2192 = vmatpush.bf16.msra.mxu0 0
        %2193 = vmatpush.bf16.msra.mxu0 0
        %2194 = vmatpush.bf16.msra.mxu0 %v2179
        %2195 = vmatpush.bf16.msra.mxu0 %v2178
        %2196 = vmatmul.bf16.gmra.mxu0 %v2183
        %v2197 = vpop.f32.mrf.mxu0
        %v2198 = vadd.f32 %v2143, %v2197
        %v2199 = vpop.f32.mrf.mxu0
        %v2200 = vadd.f32 %v2148, %v2199
        %2201 = vmatmul.bf16.gmra.mxu0 %v2186
        %v2202 = vpop.f32.mrf.mxu0
        %v2203 = vadd.f32 %v2153, %v2202
        %v2204 = vpop.f32.mrf.mxu0
        %v2205 = vadd.f32 %v2158, %v2204
        %2206 = vdwg.mxu0
        %v2211 = vunpack.c.l.b16 %v2120
        %v2212 = vunpack.c.l.b16 %v2121
        %v2213 = vunpack.c.l.b16 %v2122
        %v2214 = vunpack.c.l.b16 %v2123
        %v2215 = vpack.c.b16 %v2212, %v2211
        %v2216 = vpack.c.b16 %v2214, %v2213
        %2219 = vmatpush.bf16.msra.mxu0 0
        %2220 = vmatpush.bf16.msra.mxu0 0
        %2221 = vmatpush.bf16.msra.mxu0 0
        %2222 = vmatpush.bf16.msra.mxu0 0
        %2223 = vmatpush.bf16.msra.mxu0 0
        %2224 = vmatpush.bf16.msra.mxu0 0
        %2225 = vmatpush.bf16.msra.mxu0 %v2216
        %2226 = vmatpush.bf16.msra.mxu0 %v2215
        %2227 = vmatmul.bf16.gmra.mxu0 %v2183
        %v2228 = vpop.f32.mrf.mxu0
        %v2229 = vadd.f32 %v2143, %v2228
        %v2230 = vpop.f32.mrf.mxu0
        %v2231 = vadd.f32 %v2148, %v2230
        %2232 = vmatmul.bf16.gmra.mxu0 %v2186
        %v2233 = vpop.f32.mrf.mxu0
        %v2234 = vadd.f32 %v2153, %v2233
        %v2235 = vpop.f32.mrf.mxu0
        %v2236 = vadd.f32 %v2158, %v2235
        %2237 = vdwg.mxu0
        %v2242 = vunpack.c.l.b16 %v2124
        %v2243 = vunpack.c.l.b16 %v2125
        %v2244 = vunpack.c.l.b16 %v2126
        %v2245 = vunpack.c.l.b16 %v2127
        %v2246 = vpack.c.b16 %v2243, %v2242
        %v2247 = vpack.c.b16 %v2245, %v2244
        %2250 = vmatpush.bf16.msra.mxu0 0
        %2251 = vmatpush.bf16.msra.mxu0 0
        %2252 = vmatpush.bf16.msra.mxu0 0
        %2253 = vmatpush.bf16.msra.mxu0 0
        %2254 = vmatpush.bf16.msra.mxu0 0
        %2255 = vmatpush.bf16.msra.mxu0 0
        %2256 = vmatpush.bf16.msra.mxu0 %v2247
        %2257 = vmatpush.bf16.msra.mxu0 %v2246
        %2258 = vmatmul.bf16.gmra.mxu0 %v2183
        %v2259 = vpop.f32.mrf.mxu0
        %v2260 = vadd.f32 %v2143, %v2259
        %v2261 = vpop.f32.mrf.mxu0
        %v2262 = vadd.f32 %v2148, %v2261
        %2263 = vmatmul.bf16.gmra.mxu0 %v2186
        %v2264 = vpop.f32.mrf.mxu0
        %v2265 = vadd.f32 %v2153, %v2264
        %v2266 = vpop.f32.mrf.mxu0
        %v2267 = vadd.f32 %v2158, %v2266
        %2268 = vdwg.mxu0
        %v2273 = vunpack.c.l.b16 %v2128
        %v2274 = vunpack.c.l.b16 %v2129
        %v2275 = vunpack.c.l.b16 %v2130
        %v2276 = vunpack.c.l.b16 %v2131
        %v2277 = vpack.c.b16 %v2274, %v2273
        %v2278 = vpack.c.b16 %v2276, %v2275
        %2281 = vmatpush.bf16.msra.mxu0 0
        %2282 = vmatpush.bf16.msra.mxu0 0
        %2283 = vmatpush.bf16.msra.mxu0 0
        %2284 = vmatpush.bf16.msra.mxu0 0
        %2285 = vmatpush.bf16.msra.mxu0 0
        %2286 = vmatpush.bf16.msra.mxu0 0
        %2287 = vmatpush.bf16.msra.mxu0 %v2278
        %2288 = vmatpush.bf16.msra.mxu0 %v2277
        %2289 = vmatmul.bf16.gmra.mxu0 %v2183
        %v2290 = vpop.f32.mrf.mxu0
        %v2291 = vadd.f32 %v2143, %v2290
        %v2292 = vpop.f32.mrf.mxu0
        %v2293 = vadd.f32 %v2148, %v2292
        %2294 = vmatmul.bf16.gmra.mxu0 %v2186
        %v2295 = vpop.f32.mrf.mxu0
        %v2296 = vadd.f32 %v2153, %v2295
        %v2297 = vpop.f32.mrf.mxu0
        %v2298 = vadd.f32 %v2158, %v2297
        %2299 = vdwg.mxu0
        %v2300 = vld [vmem:[%s418] sm:$0xf]
        %v2301 = vld [vmem:[%s418 + $0x4] sm:$0xf]
        %v2302 = vld [vmem:[%s418 + $0x8] sm:$0xf]
        %v2303 = vld [vmem:[%s418 + $0xc] sm:$0xf]
        %v2304 = vld [vmem:[%s418 + $0x10] sm:$0xf]
        %v2305 = vld [vmem:[%s418 + $0x14] sm:$0xf]
        %v2306 = vld [vmem:[%s418 + $0x18] sm:$0xf]
        %v2307 = vld [vmem:[%s418 + $0x1c] sm:$0xf]
        %v2308 = vld [vmem:[%s418 + $0x20] sm:$0xf]
        %v2309 = vld [vmem:[%s418 + $0x24] sm:$0xf]
        %v2310 = vld [vmem:[%s418 + $0x28] sm:$0xf]
        %v2311 = vld [vmem:[%s418 + $0x2c] sm:$0xf]
        %v2312 = vld [vmem:[%s418 + $0x30] sm:$0xf]
        %v2313 = vld [vmem:[%s418 + $0x34] sm:$0xf]
        %v2314 = vld [vmem:[%s418 + $0x38] sm:$0xf]
        %v2315 = vld [vmem:[%s418 + $0x3c] sm:$0xf]
        %v2316 = vunpack.c.l.bf16 %v2300
        %v2317 = vunpack.c.l.bf16 %v2301
        %v2318 = vunpack.c.l.bf16 %v2302
        %v2319 = vunpack.c.l.bf16 %v2303
        %v2320 = vunpack.c.l.bf16 %v2304
        %v2321 = vunpack.c.l.bf16 %v2305
        %v2322 = vunpack.c.l.bf16 %v2306
        %v2323 = vunpack.c.l.bf16 %v2307
        %v2324 = vunpack.c.l.bf16 %v2308
        %v2325 = vunpack.c.l.bf16 %v2309
        %v2326 = vunpack.c.l.bf16 %v2310
        %v2327 = vunpack.c.l.bf16 %v2311
        %v2328 = vunpack.c.l.bf16 %v2312
        %v2329 = vunpack.c.l.bf16 %v2313
        %v2330 = vunpack.c.l.bf16 %v2314
        %v2331 = vunpack.c.l.bf16 %v2315
        %v2332 = vadd.f32 %v2198, %v2316
        %v2333 = vadd.f32 %v2200, %v2317
        %v2334 = vadd.f32 %v2203, %v2318
        %v2335 = vadd.f32 %v2205, %v2319
        %v2336 = vadd.f32 %v2229, %v2320
        %v2337 = vadd.f32 %v2231, %v2321
        %v2338 = vadd.f32 %v2234, %v2322
        %v2339 = vadd.f32 %v2236, %v2323
        %v2340 = vadd.f32 %v2260, %v2324
        %v2341 = vadd.f32 %v2262, %v2325
        %v2342 = vadd.f32 %v2265, %v2326
        %v2343 = vadd.f32 %v2267, %v2327
        %v2344 = vadd.f32 %v2291, %v2328
        %v2345 = vadd.f32 %v2293, %v2329
        %v2346 = vadd.f32 %v2296, %v2330
        %v2347 = vadd.f32 %v2298, %v2331
        %2348 = vst [vmem:[%s461] sm:$0xff] %v2332
        %2349 = vst [vmem:[%s461 + $0x8] sm:$0xff] %v2333
        %2350 = vst [vmem:[%s461 + $0x10] sm:$0xff] %v2334
        %2351 = vst [vmem:[%s461 + $0x18] sm:$0xff] %v2335
        %2352 = vst [vmem:[%s461 + $0x20] sm:$0xff] %v2336
        %2353 = vst [vmem:[%s461 + $0x28] sm:$0xff] %v2337
        %2354 = vst [vmem:[%s461 + $0x30] sm:$0xff] %v2338
        %2355 = vst [vmem:[%s461 + $0x38] sm:$0xff] %v2339
        %2356 = vst [vmem:[%s461 + $0x40] sm:$0xff] %v2340
        %2357 = vst [vmem:[%s461 + $0x48] sm:$0xff] %v2341
        %2358 = vst [vmem:[%s461 + $0x50] sm:$0xff] %v2342
        %2359 = vst [vmem:[%s461 + $0x58] sm:$0xff] %v2343
        %2360 = vst [vmem:[%s461 + $0x60] sm:$0xff] %v2344
        %2361 = vst [vmem:[%s461 + $0x68] sm:$0xff] %v2345
        %2362 = vst [vmem:[%s461 + $0x70] sm:$0xff] %v2346
        %2363 = vst [vmem:[%s461 + $0x78] sm:$0xff] %v2347
        %s2364 = sand.u32 %s316, 1
        %s2365 = scalar_lea.sflag [#allocation4], %s2364
        %s2366 = sand.u32 %s316, 1
        %s2367 = smul.addr %s2366, 128
        %s2368 = scalar_lea.vmem [#allocation5], %s2367
        // Predicated region
        $region77: #{tpu_custom_call.1} parent=71 // pred_check
          %p2369 = pneg %p326
        $region78: #{tpu_custom_call.1} parent=71 // pred_check_branch
          %2371 = sbr.rel (%p2369) target = $region80
        $region79: #{tpu_custom_call.1} parent=71 // pred_region
          %s2372 = smul.u32 4, %s30
          %2374 = vsyncadd %s2365, 0
          %s2375 = smul.addr %s2372, 4
          %s2376 = smul.addr %s2375, 8
          %s2377 = scalar_lea.hbm %s13, %s2376
          %s2378 = sshll.u32 %s2368, 4
          %s2379 = int_to_ptr.vmem [resolvable:$true] %s2378
          %s2380 = sshll.u32 %s2377, 4
          %s2381 = int_to_ptr.hbm [resolvable:$true] %s2380
          %2386 = dma.vmem_to_hbm [thread:$0]  %s2379, 2048, %s2381, %s2365, 128, 128, 8
        $region80: #{tpu_custom_call.1} parent=71 // pred_fallthru
          _
      $region72: #{tpu_custom_call.1} parent=5 // pred_fallthru
        _
      %p2387 = scmp.le.s32.totalorder 2, %s25
      // Predicated region
      $region81: #{tpu_custom_call.1} parent=5 // pred_check
        %p2388 = pneg %p2387
      $region82: #{tpu_custom_call.1} parent=5 // pred_check_branch
        %2390 = sbr.rel (%p2388) target = $region84
      $region83: #{tpu_custom_call.1} parent=5 // pred_region
        %s2391 = ssub.s32 %s25, 2
        // Predicated region
        $region85: #{tpu_custom_call.1} parent=83 // pred_check
          %p2392 = pneg %p332
        $region86: #{tpu_custom_call.1} parent=83 // pred_check_branch
          %2394 = sbr.rel (%p2392) target = $region88
        $region87: #{tpu_custom_call.1} parent=83 // pred_region
          %s2395 = sand.u32 %s317, 1
          %s2396 = scalar_lea.sflag [#allocation4], %s2395
          %s2397 = sand.u32 %s317, 1
          %s2398 = smul.addr %s2397, 128
          %s2399 = scalar_lea.vmem [#allocation5], %s2398
          %2401 = dma.done %s2396, 2048
        $region88: #{tpu_custom_call.1} parent=83 // pred_fallthru
          _
      $region84: #{tpu_custom_call.1} parent=5 // pred_fallthru
        _
    $region6: #{tpu_custom_call.1} parent=1 // loop_footer
      %s29 = sadd.s32 1, %s25
    $region7: #{tpu_custom_call.1} parent=1 // loop_footer_branch
      %24 = sbr.rel target = $region3
    $region8: #{tpu_custom_call.1} parent=1 // loop_exit
      _
    %2402 = vsyncpa [#allocation3], 1
    %s2403 = scalar_lea.sflag [#allocation3], 1
    %2404 = vsyncpa %s2403, 1
    %2405 = vsyncpa [#allocation4], 1
    %s2406 = scalar_lea.sflag [#allocation4], 1
    %2407 = vsyncpa %s2406, 1

</llo_original>
